<compile_context>
chip_gen: v6e
topology: v6e:2x2x1
jax: 0.10.0
libtpu: 0.0.40
codegen_flags: <defaults>
</compile_context>

<pallas_src>
import functools

import numpy as np
import jax
import jax.numpy as jnp
from jax.experimental import pallas as pl
from jax.experimental.pallas import tpu as pltpu


# ----------------------------------------------------------------------------
# Configuration (mirrors the dict the PyTorch module expects)
# ----------------------------------------------------------------------------
CONFIG = {
    "word_embedding_model": {"vector_size": 16},
    "text_model": {
        "model": "lstm",
        "hidden_size": 32,
        "sequence_length": 8,
        "number_layers": 1,
        "bidirectional": False,
        "output_size": 16,
        "linear_layers": [24],
    },
    "vision_model": {
        "model": "cnn",
        "linear_layers": [32],
        "conv_layers": [8, 16],      # output channels of each conv layer
        "kernel_size": 3,
        "stride": 2,
        "input_size": (4, 16, 16),   # (C, H, W)
        "output_size": 16,
    },
    "linear_model": {"layers": [24]},
    "target_variable": ["5"],        # number of classes
}


# ----------------------------------------------------------------------------
# Single fused Pallas kernel: whole forward pass
# ----------------------------------------------------------------------------
def _fused_forward_kernel(
    # text branch
    x_ref, wih_ref, whh_ref, blstm_ref,
    wt1_ref, bt1_ref, wt2_ref, bt2_ref,
    # vision branch
    cols1_ref, w1_ref, b1_ref,
    g2_ref, w2p_ref, b2_ref,
    wv1s_ref, bv1_ref, wv2_ref, bv2_ref,
    # fusion head
    wf1_ref, bf1_ref, wf2_ref, bf2_ref,
    # output
    o_ref,
    *, batch, seq_len, hidden, text_dim):
  f32 = jnp.float32
  B, T, H = batch, seq_len, hidden

  # ---------------- text branch: LSTM (hoisted input proj, unrolled) --------
  # xp[t*B + b, :] = x[t, b, :] @ W_ih + b   -- one MXU push for all timesteps
  xp = jnp.dot(x_ref[...], wih_ref[...], preferred_element_type=f32) + blstm_ref[...]
  whh = whh_ref[...]
  h = jnp.zeros((B, H), f32)
  c = jnp.zeros((B, H), f32)
  for t in range(T):  # static trip count -> fully unrolled at trace time
    gates = xp[t * B:(t + 1) * B, :] + jnp.dot(h, whh, preferred_element_type=f32)
    sig = jax.nn.sigmoid(gates)   # full 128-lane EUP op (2 pushes vs 4 sliced)
    th = jnp.tanh(gates)
    i_g = sig[:, 0 * H:1 * H]
    f_g = sig[:, 1 * H:2 * H]
    g_g = th[:, 2 * H:3 * H]
    o_g = sig[:, 3 * H:4 * H]
    c = f_g * c + i_g * g_g
    h = o_g * jnp.tanh(c)

  # text MLP: hidden -> 24 (ReLU) -> 16
  t_feat = jnp.maximum(
      jnp.dot(h, wt1_ref[...], preferred_element_type=f32) + bt1_ref[...], 0.0)
  t_feat = jnp.dot(t_feat, wt2_ref[...], preferred_element_type=f32) + bt2_ref[...]

  # ---------------- vision branch --------------------------------------------
  # conv1 as matmul on the (pre-kernel) im2col of the raw image
  act1 = jnp.maximum(
      jnp.dot(cols1_ref[...], w1_ref[...], preferred_element_type=f32) + b1_ref[...],
      0.0)                                                        # (B*7*7, OC1)

  # conv2: im2col row-gather for ALL k*k kernel positions in ONE 0/1 selection
  # matmul, then per-position weight matmuls on contiguous row slices.
  n_pos = w2p_ref.shape[0]              # k*k
  oc2 = w2p_ref.shape[2]
  n2 = g2_ref.shape[0] // n_pos         # B*3*3 (rows ordered (spatial, batch))
  gathered = jnp.dot(g2_ref[...], act1, preferred_element_type=f32)  # (k*k*n2, IC2)
  acc2 = jnp.broadcast_to(b2_ref[...], (n2, oc2))
  for p in range(n_pos):
    acc2 = acc2 + jnp.dot(gathered[p * n2:(p + 1) * n2, :], w2p_ref[p],
                          preferred_element_type=f32)
  act2 = jnp.maximum(acc2, 0.0)         # (n2, OC2), rows ordered (spatial, batch)

  # flatten (PyTorch NCHW order folded into wv1s layout) + first vision linear.
  # Thanks to the (spatial, batch) row order of act2 this is just contiguous
  # static row slices -- no selection matmuls needed.
  n_sp = wv1s_ref.shape[0]
  v_dim1 = wv1s_ref.shape[2]
  accv = jnp.broadcast_to(bv1_ref[...], (B, v_dim1))
  for sp in range(n_sp):
    accv = accv + jnp.dot(act2[sp * B:(sp + 1) * B, :], wv1s_ref[sp],
                          preferred_element_type=f32)
  v_feat = jnp.maximum(accv, 0.0)
  v_feat = jnp.dot(v_feat, wv2_ref[...], preferred_element_type=f32) + bv2_ref[...]

  # ---------------- fusion head: concat folded into split matmul ------------
  wf1 = wf1_ref[...]
  hid = jnp.maximum(
      jnp.dot(t_feat, wf1[0:text_dim, :], preferred_element_type=f32)
      + jnp.dot(v_feat, wf1[text_dim:, :], preferred_element_type=f32)
      + bf1_ref[...], 0.0)
  logits = jnp.dot(hid, wf2_ref[...], preferred_element_type=f32) + bf2_ref[...]

  # softmax(dim=1)
  m = jnp.max(logits, axis=1, keepdims=True)
  e = jnp.exp(logits - m)
  denom = jnp.sum(e, axis=1, keepdims=True)
  o_ref[...] = e * pl.reciprocal(denom, approx=False)


def _full_block_specs(arrays):
  specs = []
  for a in arrays:
    nd = a.ndim
    specs.append(pl.BlockSpec(a.shape, lambda i, _nd=nd: (0,) * _nd))
  return specs


# ----------------------------------------------------------------------------
# Pre-kernel glue: im2col of the raw image (channel-major (c, kh, kw) columns)
# ----------------------------------------------------------------------------
def im2col_nchw(x, k, s):
  B, C, H, W = x.shape
  OH = (H - k) // s + 1
  OW = (W - k) // s + 1
  cols = []
  for i in range(k):
    for j in range(k):
      cols.append(x[:, :, i:i + s * OH:s, j:j + s * OW:s])  # (B, C, OH, OW)
  patches = jnp.stack(cols, axis=2)            # (B, C, k*k, OH, OW)
  patches = patches.transpose(0, 3, 4, 1, 2)   # (B, OH, OW, C, k*k)
  return patches.reshape(B * OH * OW, C * k * k), OH, OW


# ----------------------------------------------------------------------------
# Constant 0/1 gather matrix for conv2's im2col (depends only on static shapes)
# Output rows are ordered (kernel position, spatial, batch) so the kernel can
# take contiguous slices per position and per spatial index.
# ----------------------------------------------------------------------------
def _build_conv2_gather(batch, oh1, ow1, oh2, ow2, k, s):
  n_in = batch * oh1 * ow1
  n2 = oh2 * ow2 * batch
  g2 = np.zeros((k * k, n2, n_in), np.float32)
  for kh in range(k):
    for kw in range(k):
      p = kh * k + kw
      for oh in range(oh2):
        for ow in range(ow2):
          sp = oh * ow2 + ow
          for b in range(batch):
            n = sp * batch + b                       # (spatial, batch) order
            m = b * oh1 * ow1 + (oh * s + kh) * ow1 + (ow * s + kw)
            g2[p, n, m] = 1.0
  return jnp.asarray(g2.reshape(k * k * n2, n_in))


# ----------------------------------------------------------------------------
# Parameter construction (deterministic, in-script)
# ----------------------------------------------------------------------------
def _uniform(key, shape, scale=0.1):
  return jax.random.uniform(key, shape, jnp.float32, -scale, scale)


def init_params(key, cfg, batch):
  E = cfg["word_embedding_model"]["vector_size"]
  H = cfg["text_model"]["hidden_size"]
  text_out = cfg["text_model"]["output_size"]
  vis_out = cfg["vision_model"]["output_size"]
  k = cfg["vision_model"]["kernel_size"]
  s = cfg["vision_model"]["stride"]
  C, Him, Wim = cfg["vision_model"]["input_size"]
  n_classes = int(cfg["target_variable"][0])

  keys = iter(jax.random.split(key, 64))
  params = {}

  # --- LSTM (1 layer, unidirectional), weights stored transposed for x @ W
  params["lstm"] = {
      "w_ih": _uniform(next(keys), (E, 4 * H)),
      "w_hh": _uniform(next(keys), (H, 4 * H)),
      "b": _uniform(next(keys), (4 * H,)),
  }

  # --- text MLP: hidden -> linear_layers -> output_size
  text_dims = [H] + list(cfg["text_model"]["linear_layers"]) + [text_out]
  assert len(text_dims) == 3, "fused kernel expects exactly 2 text Linear layers"
  params["text_linears"] = [
      (_uniform(next(keys), (text_dims[i], text_dims[i + 1])),
       _uniform(next(keys), (text_dims[i + 1],)))
      for i in range(len(text_dims) - 1)
  ]

  # --- CNN convs (PyTorch layout (OC, IC, k, k))
  conv_channels = [C] + list(cfg["vision_model"]["conv_layers"])
  assert len(conv_channels) == 3, "fused kernel expects exactly 2 conv layers"
  params["convs"] = [
      (_uniform(next(keys), (conv_channels[i + 1], conv_channels[i], k, k)),
       _uniform(next(keys), (conv_channels[i + 1],)))
      for i in range(len(conv_channels) - 1)
  ]
  oh1, ow1 = (Him - k) // s + 1, (Wim - k) // s + 1
  oh2, ow2 = (oh1 - k) // s + 1, (ow1 - k) // s + 1
  flat = conv_channels[-1] * oh2 * ow2

  # --- vision MLP: flatten (NCHW order) -> linear_layers -> output_size
  vis_dims = [flat] + list(cfg["vision_model"]["linear_layers"]) + [vis_out]
  assert len(vis_dims) == 3, "fused kernel expects exactly 2 vision Linear layers"
  params["vision_linears"] = [
      (_uniform(next(keys), (vis_dims[i], vis_dims[i + 1])),
       _uniform(next(keys), (vis_dims[i + 1],)))
      for i in range(len(vis_dims) - 1)
  ]

  # --- fusion head: (text_out + vis_out) -> linear_model layers -> n_classes
  fuse_dims = [text_out + vis_out] + list(cfg["linear_model"]["layers"]) + [n_classes]
  assert len(fuse_dims) == 3, "fused head expects exactly 2 Linear layers"
  params["fusion"] = [
      (_uniform(next(keys), (fuse_dims[0], fuse_dims[1])),
       _uniform(next(keys), (fuse_dims[1],))),
      (_uniform(next(keys), (fuse_dims[1], fuse_dims[2])),
       _uniform(next(keys), (fuse_dims[2],))),
  ]

  # --- derived kernel-layout weights (one-time, outside the hot path) -------
  w1, _ = params["convs"][0]
  w2, _ = params["convs"][1]
  oc1, ic1 = w1.shape[0], w1.shape[1]
  oc2, ic2 = w2.shape[0], w2.shape[1]
  # conv1 as (IC*k*k, OC1) for the im2col matmul (channel-major columns)
  params["w1mat"] = w1.reshape(oc1, ic1 * k * k).T
  # conv2 per kernel position: (k*k, IC2, OC2)
  params["w2p"] = w2.reshape(oc2, ic2, k * k).transpose(2, 1, 0)
  # first vision linear with the PyTorch NCHW flatten order folded in:
  # wv1s[s, c, :] == Wv1[c*(oh2*ow2) + s, :]
  wv1 = params["vision_linears"][0][0]
  params["wv1s"] = wv1.reshape(oc2, oh2 * ow2, wv1.shape[1]).transpose(1, 0, 2)
  # constant 0/1 gather matrix for conv2's im2col (all positions stacked)
  params["g2"] = _build_conv2_gather(batch, oh1, ow1, oh2, ow2, k, s)
  return params


# ----------------------------------------------------------------------------
# Forward pass (mirrors MultimodalModel.forward) -- ONE pallas_call
# ----------------------------------------------------------------------------
def multimodal_forward(params, x1, x2):
  cfg = CONFIG
  B, T, E = x1.shape
  H = cfg["text_model"]["hidden_size"]
  k = cfg["vision_model"]["kernel_size"]
  s = cfg["vision_model"]["stride"]
  text_dim = cfg["text_model"]["output_size"]
  n_classes = int(cfg["target_variable"][0])

  # pre-kernel layout glue on the RAW inputs only
  x_flat = jnp.transpose(x1, (1, 0, 2)).reshape(T * B, E)   # rows ordered (t, b)
  cols1, _, _ = im2col_nchw(x2, k, s)                       # (B*7*7, C*k*k)

  args = [
      # text
      x_flat,
      params["lstm"]["w_ih"], params["lstm"]["w_hh"],
      params["lstm"]["b"].reshape(1, -1),
      params["text_linears"][0][0], params["text_linears"][0][1].reshape(1, -1),
      params["text_linears"][1][0], params["text_linears"][1][1].reshape(1, -1),
      # vision
      cols1, params["w1mat"], params["convs"][0][1].reshape(1, -1),
      params["g2"], params["w2p"], params["convs"][1][1].reshape(1, -1),
      params["wv1s"],
      params["vision_linears"][0][1].reshape(1, -1),
      params["vision_linears"][1][0], params["vision_linears"][1][1].reshape(1, -1),
      # fusion head
      params["fusion"][0][0], params["fusion"][0][1].reshape(1, -1),
      params["fusion"][1][0], params["fusion"][1][1].reshape(1, -1),
  ]

  kernel = functools.partial(_fused_forward_kernel,
                             batch=B, seq_len=T, hidden=H, text_dim=text_dim)
  return pl.pallas_call(
      kernel,
      out_shape=jax.ShapeDtypeStruct((B, n_classes), jnp.float32),
      grid=(1,),
      in_specs=_full_block_specs(args),
      out_specs=pl.BlockSpec((B, n_classes), lambda i: (0, 0)),
      compiler_params=pltpu.CompilerParams(
          dimension_semantics=("arbitrary",)),
  )(*args)


# ----------------------------------------------------------------------------
# Main
# ----------------------------------------------------------------------------
if __name__ == "__main__":
  key = jax.random.PRNGKey(0)
  k_params, k_x1, k_x2 = jax.random.split(key, 3)

  cfg = CONFIG
  B = 2
  T = cfg["text_model"]["sequence_length"]
  E = cfg["word_embedding_model"]["vector_size"]
  C, Him, Wim = cfg["vision_model"]["input_size"]

  params = init_params(k_params, cfg, batch=B)
  x1 = jax.random.normal(k_x1, (B, T, E), jnp.float32)          # text: (2, 8, 16)
  x2 = jax.random.normal(k_x2, (B, C, Him, Wim), jnp.float32)   # image: (2, 4, 16, 16)

  fwd = jax.jit(multimodal_forward)
  out = jax.block_until_ready(fwd(params, x1, x2))

  n_classes = int(cfg["target_variable"][0])
  assert out.shape == (B, n_classes), out.shape
  assert bool(jnp.all(jnp.isfinite(out)))
  assert bool(jnp.allclose(jnp.sum(out, axis=1), 1.0, atol=1e-5))
  print("KERNEL_OK")
</pallas_src>

<mosaic_0001>
module attributes {stable_mosaic.version = 11 : i64} {
  func.func @_fused_forward_kernel(%arg0: i32, %arg1: memref<16x16xf32, #tpu.memory_space<vmem>>, %arg2: memref<16x128xf32, #tpu.memory_space<vmem>>, %arg3: memref<32x128xf32, #tpu.memory_space<vmem>>, %arg4: memref<1x128xf32, #tpu.memory_space<vmem>>, %arg5: memref<32x24xf32, #tpu.memory_space<vmem>>, %arg6: memref<1x24xf32, #tpu.memory_space<vmem>>, %arg7: memref<24x16xf32, #tpu.memory_space<vmem>>, %arg8: memref<1x16xf32, #tpu.memory_space<vmem>>, %arg9: memref<98x36xf32, #tpu.memory_space<vmem>>, %arg10: memref<36x8xf32, #tpu.memory_space<vmem>>, %arg11: memref<1x8xf32, #tpu.memory_space<vmem>>, %arg12: memref<162x98xf32, #tpu.memory_space<vmem>>, %arg13: memref<9x8x16xf32, #tpu.memory_space<vmem>>, %arg14: memref<1x16xf32, #tpu.memory_space<vmem>>, %arg15: memref<9x16x32xf32, #tpu.memory_space<vmem>>, %arg16: memref<1x32xf32, #tpu.memory_space<vmem>>, %arg17: memref<32x16xf32, #tpu.memory_space<vmem>>, %arg18: memref<1x16xf32, #tpu.memory_space<vmem>>, %arg19: memref<32x24xf32, #tpu.memory_space<vmem>>, %arg20: memref<1x24xf32, #tpu.memory_space<vmem>>, %arg21: memref<24x5xf32, #tpu.memory_space<vmem>>, %arg22: memref<1x5xf32, #tpu.memory_space<vmem>>, %arg23: memref<2x5xf32, #tpu.memory_space<vmem>>) attributes {dimension_semantics = [#tpu.dimension_semantics<arbitrary>], iteration_bounds = array<i64: 1>, scalar_prefetch = 0 : i64, scratch_operands = 0 : i64, tpu.core_type = #tpu.core_type<tc>, window_params = [{pipeline_mode = #tpu.pipeline_mode<synchronous>, transform_indices = @transform_0, window_bounds = array<i64: 16, 16>}, {pipeline_mode = #tpu.pipeline_mode<synchronous>, transform_indices = @transform_1, window_bounds = array<i64: 16, 128>}, {pipeline_mode = #tpu.pipeline_mode<synchronous>, transform_indices = @transform_2, window_bounds = array<i64: 32, 128>}, {pipeline_mode = #tpu.pipeline_mode<synchronous>, transform_indices = @transform_3, window_bounds = array<i64: 1, 128>}, {pipeline_mode = #tpu.pipeline_mode<synchronous>, transform_indices = @transform_4, window_bounds = array<i64: 32, 24>}, {pipeline_mode = #tpu.pipeline_mode<synchronous>, transform_indices = @transform_5, window_bounds = array<i64: 1, 24>}, {pipeline_mode = #tpu.pipeline_mode<synchronous>, transform_indices = @transform_6, window_bounds = array<i64: 24, 16>}, {pipeline_mode = #tpu.pipeline_mode<synchronous>, transform_indices = @transform_7, window_bounds = array<i64: 1, 16>}, {pipeline_mode = #tpu.pipeline_mode<synchronous>, transform_indices = @transform_8, window_bounds = array<i64: 98, 36>}, {pipeline_mode = #tpu.pipeline_mode<synchronous>, transform_indices = @transform_9, window_bounds = array<i64: 36, 8>}, {pipeline_mode = #tpu.pipeline_mode<synchronous>, transform_indices = @transform_10, window_bounds = array<i64: 1, 8>}, {pipeline_mode = #tpu.pipeline_mode<synchronous>, transform_indices = @transform_11, window_bounds = array<i64: 162, 98>}, {pipeline_mode = #tpu.pipeline_mode<synchronous>, transform_indices = @transform_12, window_bounds = array<i64: 9, 8, 16>}, {pipeline_mode = #tpu.pipeline_mode<synchronous>, transform_indices = @transform_13, window_bounds = array<i64: 1, 16>}, {pipeline_mode = #tpu.pipeline_mode<synchronous>, transform_indices = @transform_14, window_bounds = array<i64: 9, 16, 32>}, {pipeline_mode = #tpu.pipeline_mode<synchronous>, transform_indices = @transform_15, window_bounds = array<i64: 1, 32>}, {pipeline_mode = #tpu.pipeline_mode<synchronous>, transform_indices = @transform_16, window_bounds = array<i64: 32, 16>}, {pipeline_mode = #tpu.pipeline_mode<synchronous>, transform_indices = @transform_17, window_bounds = array<i64: 1, 16>}, {pipeline_mode = #tpu.pipeline_mode<synchronous>, transform_indices = @transform_18, window_bounds = array<i64: 32, 24>}, {pipeline_mode = #tpu.pipeline_mode<synchronous>, transform_indices = @transform_19, window_bounds = array<i64: 1, 24>}, {pipeline_mode = #tpu.pipeline_mode<synchronous>, transform_indices = @transform_20, window_bounds = array<i64: 24, 5>}, {pipeline_mode = #tpu.pipeline_mode<synchronous>, transform_indices = @transform_21, window_bounds = array<i64: 1, 5>}, {pipeline_mode = #tpu.pipeline_mode<synchronous>, transform_indices = @transform_22, window_bounds = array<i64: 2, 5>}]} {
    %c0 = arith.constant 0 : index
    %c0_0 = arith.constant 0 : index
    %0 = vector.load %arg1[%c0, %c0_0] : memref<16x16xf32, #tpu.memory_space<vmem>>, vector<16x16xf32>
    %c0_1 = arith.constant 0 : index
    %c0_2 = arith.constant 0 : index
    %1 = vector.load %arg2[%c0_1, %c0_2] : memref<16x128xf32, #tpu.memory_space<vmem>>, vector<16x128xf32>
    %cst = arith.constant dense<0.000000e+00> : vector<16x128xf32>
    %2 = tpu.matmul %0, %1, %cst {dimension_numbers = #tpu.dot_dimension_numbers<[1], [0], [0], [1], [0, 0, 1, 1], [], []>} : vector<16x16xf32>, vector<16x128xf32>, vector<16x128xf32> -> vector<16x128xf32>
    %c0_3 = arith.constant 0 : index
    %c0_4 = arith.constant 0 : index
    %3 = vector.load %arg4[%c0_3, %c0_4] : memref<1x128xf32, #tpu.memory_space<vmem>>, vector<1x128xf32>
    %4 = vector.broadcast %3 : vector<1x128xf32> to vector<16x128xf32>
    %5 = arith.addf %2, %4 : vector<16x128xf32>
    %c0_5 = arith.constant 0 : index
    %c0_6 = arith.constant 0 : index
    %6 = vector.load %arg3[%c0_5, %c0_6] : memref<32x128xf32, #tpu.memory_space<vmem>>, vector<32x128xf32>
    %cst_7 = arith.constant 0.000000e+00 : f32
    %7 = vector.broadcast %cst_7 : f32 to vector<2x32xf32>
    %cst_8 = arith.constant 0.000000e+00 : f32
    %8 = vector.broadcast %cst_8 : f32 to vector<2x32xf32>
    %9 = vector.extract_strided_slice %5 {offsets = [0, 0], sizes = [2, 128], strides = [1, 1]} : vector<16x128xf32> to vector<2x128xf32>
    %cst_9 = arith.constant dense<0.000000e+00> : vector<2x128xf32>
    %10 = tpu.matmul %7, %6, %cst_9 {dimension_numbers = #tpu.dot_dimension_numbers<[1], [0], [0], [1], [0, 0, 1, 1], [], []>} : vector<2x32xf32>, vector<32x128xf32>, vector<2x128xf32> -> vector<2x128xf32>
    %11 = arith.addf %9, %10 : vector<2x128xf32>
    %12 = arith.negf %11 : vector<2x128xf32>
    %13 = math.exp %12 : vector<2x128xf32>
    %cst_10 = arith.constant 1.000000e+00 : f32
    %14 = vector.broadcast %cst_10 : f32 to vector<2x128xf32>
    %15 = arith.addf %14, %13 : vector<2x128xf32>
    %16 = arith.divf %14, %15 : vector<2x128xf32>
    %17 = math.tanh %11 : vector<2x128xf32>
    %18 = vector.extract_strided_slice %16 {offsets = [0, 0], sizes = [2, 32], strides = [1, 1]} : vector<2x128xf32> to vector<2x32xf32>
    %19 = vector.extract_strided_slice %16 {offsets = [0, 32], sizes = [2, 32], strides = [1, 1]} : vector<2x128xf32> to vector<2x32xf32>
    %20 = vector.extract_strided_slice %17 {offsets = [0, 64], sizes = [2, 32], strides = [1, 1]} : vector<2x128xf32> to vector<2x32xf32>
    %21 = vector.extract_strided_slice %16 {offsets = [0, 96], sizes = [2, 32], strides = [1, 1]} : vector<2x128xf32> to vector<2x32xf32>
    %22 = arith.mulf %19, %8 : vector<2x32xf32>
    %23 = arith.mulf %18, %20 : vector<2x32xf32>
    %24 = arith.addf %22, %23 : vector<2x32xf32>
    %25 = math.tanh %24 : vector<2x32xf32>
    %26 = arith.mulf %21, %25 : vector<2x32xf32>
    %27 = vector.extract_strided_slice %5 {offsets = [2, 0], sizes = [2, 128], strides = [1, 1]} : vector<16x128xf32> to vector<2x128xf32>
    %cst_11 = arith.constant dense<0.000000e+00> : vector<2x128xf32>
    %28 = tpu.matmul %26, %6, %cst_11 {dimension_numbers = #tpu.dot_dimension_numbers<[1], [0], [0], [1], [0, 0, 1, 1], [], []>} : vector<2x32xf32>, vector<32x128xf32>, vector<2x128xf32> -> vector<2x128xf32>
    %29 = arith.addf %27, %28 : vector<2x128xf32>
    %30 = arith.negf %29 : vector<2x128xf32>
    %31 = math.exp %30 : vector<2x128xf32>
    %cst_12 = arith.constant 1.000000e+00 : f32
    %32 = vector.broadcast %cst_12 : f32 to vector<2x128xf32>
    %33 = arith.addf %32, %31 : vector<2x128xf32>
    %34 = arith.divf %32, %33 : vector<2x128xf32>
    %35 = math.tanh %29 : vector<2x128xf32>
    %36 = vector.extract_strided_slice %34 {offsets = [0, 0], sizes = [2, 32], strides = [1, 1]} : vector<2x128xf32> to vector<2x32xf32>
    %37 = vector.extract_strided_slice %34 {offsets = [0, 32], sizes = [2, 32], strides = [1, 1]} : vector<2x128xf32> to vector<2x32xf32>
    %38 = vector.extract_strided_slice %35 {offsets = [0, 64], sizes = [2, 32], strides = [1, 1]} : vector<2x128xf32> to vector<2x32xf32>
    %39 = vector.extract_strided_slice %34 {offsets = [0, 96], sizes = [2, 32], strides = [1, 1]} : vector<2x128xf32> to vector<2x32xf32>
    %40 = arith.mulf %37, %24 : vector<2x32xf32>
    %41 = arith.mulf %36, %38 : vector<2x32xf32>
    %42 = arith.addf %40, %41 : vector<2x32xf32>
    %43 = math.tanh %42 : vector<2x32xf32>
    %44 = arith.mulf %39, %43 : vector<2x32xf32>
    %45 = vector.extract_strided_slice %5 {offsets = [4, 0], sizes = [2, 128], strides = [1, 1]} : vector<16x128xf32> to vector<2x128xf32>
    %cst_13 = arith.constant dense<0.000000e+00> : vector<2x128xf32>
    %46 = tpu.matmul %44, %6, %cst_13 {dimension_numbers = #tpu.dot_dimension_numbers<[1], [0], [0], [1], [0, 0, 1, 1], [], []>} : vector<2x32xf32>, vector<32x128xf32>, vector<2x128xf32> -> vector<2x128xf32>
    %47 = arith.addf %45, %46 : vector<2x128xf32>
    %48 = arith.negf %47 : vector<2x128xf32>
    %49 = math.exp %48 : vector<2x128xf32>
    %cst_14 = arith.constant 1.000000e+00 : f32
    %50 = vector.broadcast %cst_14 : f32 to vector<2x128xf32>
    %51 = arith.addf %50, %49 : vector<2x128xf32>
    %52 = arith.divf %50, %51 : vector<2x128xf32>
    %53 = math.tanh %47 : vector<2x128xf32>
    %54 = vector.extract_strided_slice %52 {offsets = [0, 0], sizes = [2, 32], strides = [1, 1]} : vector<2x128xf32> to vector<2x32xf32>
    %55 = vector.extract_strided_slice %52 {offsets = [0, 32], sizes = [2, 32], strides = [1, 1]} : vector<2x128xf32> to vector<2x32xf32>
    %56 = vector.extract_strided_slice %53 {offsets = [0, 64], sizes = [2, 32], strides = [1, 1]} : vector<2x128xf32> to vector<2x32xf32>
    %57 = vector.extract_strided_slice %52 {offsets = [0, 96], sizes = [2, 32], strides = [1, 1]} : vector<2x128xf32> to vector<2x32xf32>
    %58 = arith.mulf %55, %42 : vector<2x32xf32>
    %59 = arith.mulf %54, %56 : vector<2x32xf32>
    %60 = arith.addf %58, %59 : vector<2x32xf32>
    %61 = math.tanh %60 : vector<2x32xf32>
    %62 = arith.mulf %57, %61 : vector<2x32xf32>
    %63 = vector.extract_strided_slice %5 {offsets = [6, 0], sizes = [2, 128], strides = [1, 1]} : vector<16x128xf32> to vector<2x128xf32>
    %cst_15 = arith.constant dense<0.000000e+00> : vector<2x128xf32>
    %64 = tpu.matmul %62, %6, %cst_15 {dimension_numbers = #tpu.dot_dimension_numbers<[1], [0], [0], [1], [0, 0, 1, 1], [], []>} : vector<2x32xf32>, vector<32x128xf32>, vector<2x128xf32> -> vector<2x128xf32>
    %65 = arith.addf %63, %64 : vector<2x128xf32>
    %66 = arith.negf %65 : vector<2x128xf32>
    %67 = math.exp %66 : vector<2x128xf32>
    %cst_16 = arith.constant 1.000000e+00 : f32
    %68 = vector.broadcast %cst_16 : f32 to vector<2x128xf32>
    %69 = arith.addf %68, %67 : vector<2x128xf32>
    %70 = arith.divf %68, %69 : vector<2x128xf32>
    %71 = math.tanh %65 : vector<2x128xf32>
    %72 = vector.extract_strided_slice %70 {offsets = [0, 0], sizes = [2, 32], strides = [1, 1]} : vector<2x128xf32> to vector<2x32xf32>
    %73 = vector.extract_strided_slice %70 {offsets = [0, 32], sizes = [2, 32], strides = [1, 1]} : vector<2x128xf32> to vector<2x32xf32>
    %74 = vector.extract_strided_slice %71 {offsets = [0, 64], sizes = [2, 32], strides = [1, 1]} : vector<2x128xf32> to vector<2x32xf32>
    %75 = vector.extract_strided_slice %70 {offsets = [0, 96], sizes = [2, 32], strides = [1, 1]} : vector<2x128xf32> to vector<2x32xf32>
    %76 = arith.mulf %73, %60 : vector<2x32xf32>
    %77 = arith.mulf %72, %74 : vector<2x32xf32>
    %78 = arith.addf %76, %77 : vector<2x32xf32>
    %79 = math.tanh %78 : vector<2x32xf32>
    %80 = arith.mulf %75, %79 : vector<2x32xf32>
    %81 = vector.extract_strided_slice %5 {offsets = [8, 0], sizes = [2, 128], strides = [1, 1]} : vector<16x128xf32> to vector<2x128xf32>
    %cst_17 = arith.constant dense<0.000000e+00> : vector<2x128xf32>
    %82 = tpu.matmul %80, %6, %cst_17 {dimension_numbers = #tpu.dot_dimension_numbers<[1], [0], [0], [1], [0, 0, 1, 1], [], []>} : vector<2x32xf32>, vector<32x128xf32>, vector<2x128xf32> -> vector<2x128xf32>
    %83 = arith.addf %81, %82 : vector<2x128xf32>
    %84 = arith.negf %83 : vector<2x128xf32>
    %85 = math.exp %84 : vector<2x128xf32>
    %cst_18 = arith.constant 1.000000e+00 : f32
    %86 = vector.broadcast %cst_18 : f32 to vector<2x128xf32>
    %87 = arith.addf %86, %85 : vector<2x128xf32>
    %88 = arith.divf %86, %87 : vector<2x128xf32>
    %89 = math.tanh %83 : vector<2x128xf32>
    %90 = vector.extract_strided_slice %88 {offsets = [0, 0], sizes = [2, 32], strides = [1, 1]} : vector<2x128xf32> to vector<2x32xf32>
    %91 = vector.extract_strided_slice %88 {offsets = [0, 32], sizes = [2, 32], strides = [1, 1]} : vector<2x128xf32> to vector<2x32xf32>
    %92 = vector.extract_strided_slice %89 {offsets = [0, 64], sizes = [2, 32], strides = [1, 1]} : vector<2x128xf32> to vector<2x32xf32>
    %93 = vector.extract_strided_slice %88 {offsets = [0, 96], sizes = [2, 32], strides = [1, 1]} : vector<2x128xf32> to vector<2x32xf32>
    %94 = arith.mulf %91, %78 : vector<2x32xf32>
    %95 = arith.mulf %90, %92 : vector<2x32xf32>
    %96 = arith.addf %94, %95 : vector<2x32xf32>
    %97 = math.tanh %96 : vector<2x32xf32>
    %98 = arith.mulf %93, %97 : vector<2x32xf32>
    %99 = vector.extract_strided_slice %5 {offsets = [10, 0], sizes = [2, 128], strides = [1, 1]} : vector<16x128xf32> to vector<2x128xf32>
    %cst_19 = arith.constant dense<0.000000e+00> : vector<2x128xf32>
    %100 = tpu.matmul %98, %6, %cst_19 {dimension_numbers = #tpu.dot_dimension_numbers<[1], [0], [0], [1], [0, 0, 1, 1], [], []>} : vector<2x32xf32>, vector<32x128xf32>, vector<2x128xf32> -> vector<2x128xf32>
    %101 = arith.addf %99, %100 : vector<2x128xf32>
    %102 = arith.negf %101 : vector<2x128xf32>
    %103 = math.exp %102 : vector<2x128xf32>
    %cst_20 = arith.constant 1.000000e+00 : f32
    %104 = vector.broadcast %cst_20 : f32 to vector<2x128xf32>
    %105 = arith.addf %104, %103 : vector<2x128xf32>
    %106 = arith.divf %104, %105 : vector<2x128xf32>
    %107 = math.tanh %101 : vector<2x128xf32>
    %108 = vector.extract_strided_slice %106 {offsets = [0, 0], sizes = [2, 32], strides = [1, 1]} : vector<2x128xf32> to vector<2x32xf32>
    %109 = vector.extract_strided_slice %106 {offsets = [0, 32], sizes = [2, 32], strides = [1, 1]} : vector<2x128xf32> to vector<2x32xf32>
    %110 = vector.extract_strided_slice %107 {offsets = [0, 64], sizes = [2, 32], strides = [1, 1]} : vector<2x128xf32> to vector<2x32xf32>
    %111 = vector.extract_strided_slice %106 {offsets = [0, 96], sizes = [2, 32], strides = [1, 1]} : vector<2x128xf32> to vector<2x32xf32>
    %112 = arith.mulf %109, %96 : vector<2x32xf32>
    %113 = arith.mulf %108, %110 : vector<2x32xf32>
    %114 = arith.addf %112, %113 : vector<2x32xf32>
    %115 = math.tanh %114 : vector<2x32xf32>
    %116 = arith.mulf %111, %115 : vector<2x32xf32>
    %117 = vector.extract_strided_slice %5 {offsets = [12, 0], sizes = [2, 128], strides = [1, 1]} : vector<16x128xf32> to vector<2x128xf32>
    %cst_21 = arith.constant dense<0.000000e+00> : vector<2x128xf32>
    %118 = tpu.matmul %116, %6, %cst_21 {dimension_numbers = #tpu.dot_dimension_numbers<[1], [0], [0], [1], [0, 0, 1, 1], [], []>} : vector<2x32xf32>, vector<32x128xf32>, vector<2x128xf32> -> vector<2x128xf32>
    %119 = arith.addf %117, %118 : vector<2x128xf32>
    %120 = arith.negf %119 : vector<2x128xf32>
    %121 = math.exp %120 : vector<2x128xf32>
    %cst_22 = arith.constant 1.000000e+00 : f32
    %122 = vector.broadcast %cst_22 : f32 to vector<2x128xf32>
    %123 = arith.addf %122, %121 : vector<2x128xf32>
    %124 = arith.divf %122, %123 : vector<2x128xf32>
    %125 = math.tanh %119 : vector<2x128xf32>
    %126 = vector.extract_strided_slice %124 {offsets = [0, 0], sizes = [2, 32], strides = [1, 1]} : vector<2x128xf32> to vector<2x32xf32>
    %127 = vector.extract_strided_slice %124 {offsets = [0, 32], sizes = [2, 32], strides = [1, 1]} : vector<2x128xf32> to vector<2x32xf32>
    %128 = vector.extract_strided_slice %125 {offsets = [0, 64], sizes = [2, 32], strides = [1, 1]} : vector<2x128xf32> to vector<2x32xf32>
    %129 = vector.extract_strided_slice %124 {offsets = [0, 96], sizes = [2, 32], strides = [1, 1]} : vector<2x128xf32> to vector<2x32xf32>
    %130 = arith.mulf %127, %114 : vector<2x32xf32>
    %131 = arith.mulf %126, %128 : vector<2x32xf32>
    %132 = arith.addf %130, %131 : vector<2x32xf32>
    %133 = math.tanh %132 : vector<2x32xf32>
    %134 = arith.mulf %129, %133 : vector<2x32xf32>
    %135 = vector.extract_strided_slice %5 {offsets = [14, 0], sizes = [2, 128], strides = [1, 1]} : vector<16x128xf32> to vector<2x128xf32>
    %cst_23 = arith.constant dense<0.000000e+00> : vector<2x128xf32>
    %136 = tpu.matmul %134, %6, %cst_23 {dimension_numbers = #tpu.dot_dimension_numbers<[1], [0], [0], [1], [0, 0, 1, 1], [], []>} : vector<2x32xf32>, vector<32x128xf32>, vector<2x128xf32> -> vector<2x128xf32>
    %137 = arith.addf %135, %136 : vector<2x128xf32>
    %138 = arith.negf %137 : vector<2x128xf32>
    %139 = math.exp %138 : vector<2x128xf32>
    %cst_24 = arith.constant 1.000000e+00 : f32
    %140 = vector.broadcast %cst_24 : f32 to vector<2x128xf32>
    %141 = arith.addf %140, %139 : vector<2x128xf32>
    %142 = arith.divf %140, %141 : vector<2x128xf32>
    %143 = math.tanh %137 : vector<2x128xf32>
    %144 = vector.extract_strided_slice %142 {offsets = [0, 0], sizes = [2, 32], strides = [1, 1]} : vector<2x128xf32> to vector<2x32xf32>
    %145 = vector.extract_strided_slice %142 {offsets = [0, 32], sizes = [2, 32], strides = [1, 1]} : vector<2x128xf32> to vector<2x32xf32>
    %146 = vector.extract_strided_slice %143 {offsets = [0, 64], sizes = [2, 32], strides = [1, 1]} : vector<2x128xf32> to vector<2x32xf32>
    %147 = vector.extract_strided_slice %142 {offsets = [0, 96], sizes = [2, 32], strides = [1, 1]} : vector<2x128xf32> to vector<2x32xf32>
    %148 = arith.mulf %145, %132 : vector<2x32xf32>
    %149 = arith.mulf %144, %146 : vector<2x32xf32>
    %150 = arith.addf %148, %149 : vector<2x32xf32>
    %151 = math.tanh %150 : vector<2x32xf32>
    %152 = arith.mulf %147, %151 : vector<2x32xf32>
    %c0_25 = arith.constant 0 : index
    %c0_26 = arith.constant 0 : index
    %153 = vector.load %arg5[%c0_25, %c0_26] : memref<32x24xf32, #tpu.memory_space<vmem>>, vector<32x24xf32>
    %cst_27 = arith.constant dense<0.000000e+00> : vector<2x24xf32>
    %154 = tpu.matmul %152, %153, %cst_27 {dimension_numbers = #tpu.dot_dimension_numbers<[1], [0], [0], [1], [0, 0, 1, 1], [], []>} : vector<2x32xf32>, vector<32x24xf32>, vector<2x24xf32> -> vector<2x24xf32>
    %c0_28 = arith.constant 0 : index
    %c0_29 = arith.constant 0 : index
    %155 = vector.load %arg6[%c0_28, %c0_29] : memref<1x24xf32, #tpu.memory_space<vmem>>, vector<1x24xf32>
    %156 = vector.broadcast %155 : vector<1x24xf32> to vector<2x24xf32>
    %157 = arith.addf %154, %156 : vector<2x24xf32>
    %cst_30 = arith.constant 0.000000e+00 : f32
    %158 = vector.broadcast %cst_30 : f32 to vector<2x24xf32>
    %159 = arith.maximumf %157, %158 : vector<2x24xf32>
    %c0_31 = arith.constant 0 : index
    %c0_32 = arith.constant 0 : index
    %160 = vector.load %arg7[%c0_31, %c0_32] : memref<24x16xf32, #tpu.memory_space<vmem>>, vector<24x16xf32>
    %cst_33 = arith.constant dense<0.000000e+00> : vector<2x16xf32>
    %161 = tpu.matmul %159, %160, %cst_33 {dimension_numbers = #tpu.dot_dimension_numbers<[1], [0], [0], [1], [0, 0, 1, 1], [], []>} : vector<2x24xf32>, vector<24x16xf32>, vector<2x16xf32> -> vector<2x16xf32>
    %c0_34 = arith.constant 0 : index
    %c0_35 = arith.constant 0 : index
    %162 = vector.load %arg8[%c0_34, %c0_35] : memref<1x16xf32, #tpu.memory_space<vmem>>, vector<1x16xf32>
    %163 = vector.broadcast %162 : vector<1x16xf32> to vector<2x16xf32>
    %164 = arith.addf %161, %163 : vector<2x16xf32>
    %c0_36 = arith.constant 0 : index
    %c0_37 = arith.constant 0 : index
    %165 = vector.load %arg9[%c0_36, %c0_37] : memref<98x36xf32, #tpu.memory_space<vmem>>, vector<98x36xf32>
    %c0_38 = arith.constant 0 : index
    %c0_39 = arith.constant 0 : index
    %166 = vector.load %arg10[%c0_38, %c0_39] : memref<36x8xf32, #tpu.memory_space<vmem>>, vector<36x8xf32>
    %cst_40 = arith.constant dense<0.000000e+00> : vector<98x8xf32>
    %167 = tpu.matmul %165, %166, %cst_40 {dimension_numbers = #tpu.dot_dimension_numbers<[1], [0], [0], [1], [0, 0, 1, 1], [], []>} : vector<98x36xf32>, vector<36x8xf32>, vector<98x8xf32> -> vector<98x8xf32>
    %c0_41 = arith.constant 0 : index
    %c0_42 = arith.constant 0 : index
    %168 = vector.load %arg11[%c0_41, %c0_42] : memref<1x8xf32, #tpu.memory_space<vmem>>, vector<1x8xf32>
    %169 = vector.broadcast %168 : vector<1x8xf32> to vector<98x8xf32>
    %170 = arith.addf %167, %169 : vector<98x8xf32>
    %cst_43 = arith.constant 0.000000e+00 : f32
    %171 = vector.broadcast %cst_43 : f32 to vector<98x8xf32>
    %172 = arith.maximumf %170, %171 : vector<98x8xf32>
    %c0_44 = arith.constant 0 : index
    %c0_45 = arith.constant 0 : index
    %173 = vector.load %arg12[%c0_44, %c0_45] : memref<162x98xf32, #tpu.memory_space<vmem>>, vector<162x98xf32>
    %cst_46 = arith.constant dense<0.000000e+00> : vector<162x8xf32>
    %174 = tpu.matmul %173, %172, %cst_46 {dimension_numbers = #tpu.dot_dimension_numbers<[1], [0], [0], [1], [0, 0, 1, 1], [], []>} : vector<162x98xf32>, vector<98x8xf32>, vector<162x8xf32> -> vector<162x8xf32>
    %c0_47 = arith.constant 0 : index
    %c0_48 = arith.constant 0 : index
    %175 = vector.load %arg14[%c0_47, %c0_48] : memref<1x16xf32, #tpu.memory_space<vmem>>, vector<1x16xf32>
    %176 = vector.shape_cast %175 : vector<1x16xf32> to vector<1x16xf32>
    %177 = vector.broadcast %176 : vector<1x16xf32> to vector<18x16xf32>
    %178 = vector.extract_strided_slice %174 {offsets = [0, 0], sizes = [18, 8], strides = [1, 1]} : vector<162x8xf32> to vector<18x8xf32>
    %c0_49 = arith.constant 0 : index
    %c0_50 = arith.constant 0 : index
    %c0_51 = arith.constant 0 : index
    %179 = vector.load %arg13[%c0_49, %c0_50, %c0_51] : memref<9x8x16xf32, #tpu.memory_space<vmem>>, vector<1x8x16xf32>
    %180 = vector.shape_cast %179 : vector<1x8x16xf32> to vector<8x16xf32>
    %cst_52 = arith.constant dense<0.000000e+00> : vector<18x16xf32>
    %181 = tpu.matmul %178, %180, %cst_52 {dimension_numbers = #tpu.dot_dimension_numbers<[1], [0], [0], [1], [0, 0, 1, 1], [], []>} : vector<18x8xf32>, vector<8x16xf32>, vector<18x16xf32> -> vector<18x16xf32>
    %182 = arith.addf %177, %181 : vector<18x16xf32>
    %183 = vector.extract_strided_slice %174 {offsets = [18, 0], sizes = [18, 8], strides = [1, 1]} : vector<162x8xf32> to vector<18x8xf32>
    %c1 = arith.constant 1 : index
    %c0_53 = arith.constant 0 : index
    %c0_54 = arith.constant 0 : index
    %184 = vector.load %arg13[%c1, %c0_53, %c0_54] : memref<9x8x16xf32, #tpu.memory_space<vmem>>, vector<1x8x16xf32>
    %185 = vector.shape_cast %184 : vector<1x8x16xf32> to vector<8x16xf32>
    %cst_55 = arith.constant dense<0.000000e+00> : vector<18x16xf32>
    %186 = tpu.matmul %183, %185, %cst_55 {dimension_numbers = #tpu.dot_dimension_numbers<[1], [0], [0], [1], [0, 0, 1, 1], [], []>} : vector<18x8xf32>, vector<8x16xf32>, vector<18x16xf32> -> vector<18x16xf32>
    %187 = arith.addf %182, %186 : vector<18x16xf32>
    %188 = vector.extract_strided_slice %174 {offsets = [36, 0], sizes = [18, 8], strides = [1, 1]} : vector<162x8xf32> to vector<18x8xf32>
    %c2 = arith.constant 2 : index
    %c0_56 = arith.constant 0 : index
    %c0_57 = arith.constant 0 : index
    %189 = vector.load %arg13[%c2, %c0_56, %c0_57] : memref<9x8x16xf32, #tpu.memory_space<vmem>>, vector<1x8x16xf32>
    %190 = vector.shape_cast %189 : vector<1x8x16xf32> to vector<8x16xf32>
    %cst_58 = arith.constant dense<0.000000e+00> : vector<18x16xf32>
    %191 = tpu.matmul %188, %190, %cst_58 {dimension_numbers = #tpu.dot_dimension_numbers<[1], [0], [0], [1], [0, 0, 1, 1], [], []>} : vector<18x8xf32>, vector<8x16xf32>, vector<18x16xf32> -> vector<18x16xf32>
    %192 = arith.addf %187, %191 : vector<18x16xf32>
    %193 = vector.extract_strided_slice %174 {offsets = [54, 0], sizes = [18, 8], strides = [1, 1]} : vector<162x8xf32> to vector<18x8xf32>
    %c3 = arith.constant 3 : index
    %c0_59 = arith.constant 0 : index
    %c0_60 = arith.constant 0 : index
    %194 = vector.load %arg13[%c3, %c0_59, %c0_60] : memref<9x8x16xf32, #tpu.memory_space<vmem>>, vector<1x8x16xf32>
    %195 = vector.shape_cast %194 : vector<1x8x16xf32> to vector<8x16xf32>
    %cst_61 = arith.constant dense<0.000000e+00> : vector<18x16xf32>
    %196 = tpu.matmul %193, %195, %cst_61 {dimension_numbers = #tpu.dot_dimension_numbers<[1], [0], [0], [1], [0, 0, 1, 1], [], []>} : vector<18x8xf32>, vector<8x16xf32>, vector<18x16xf32> -> vector<18x16xf32>
    %197 = arith.addf %192, %196 : vector<18x16xf32>
    %198 = vector.extract_strided_slice %174 {offsets = [72, 0], sizes = [18, 8], strides = [1, 1]} : vector<162x8xf32> to vector<18x8xf32>
    %c4 = arith.constant 4 : index
    %c0_62 = arith.constant 0 : index
    %c0_63 = arith.constant 0 : index
    %199 = vector.load %arg13[%c4, %c0_62, %c0_63] : memref<9x8x16xf32, #tpu.memory_space<vmem>>, vector<1x8x16xf32>
    %200 = vector.shape_cast %199 : vector<1x8x16xf32> to vector<8x16xf32>
    %cst_64 = arith.constant dense<0.000000e+00> : vector<18x16xf32>
    %201 = tpu.matmul %198, %200, %cst_64 {dimension_numbers = #tpu.dot_dimension_numbers<[1], [0], [0], [1], [0, 0, 1, 1], [], []>} : vector<18x8xf32>, vector<8x16xf32>, vector<18x16xf32> -> vector<18x16xf32>
    %202 = arith.addf %197, %201 : vector<18x16xf32>
    %203 = vector.extract_strided_slice %174 {offsets = [90, 0], sizes = [18, 8], strides = [1, 1]} : vector<162x8xf32> to vector<18x8xf32>
    %c5 = arith.constant 5 : index
    %c0_65 = arith.constant 0 : index
    %c0_66 = arith.constant 0 : index
    %204 = vector.load %arg13[%c5, %c0_65, %c0_66] : memref<9x8x16xf32, #tpu.memory_space<vmem>>, vector<1x8x16xf32>
    %205 = vector.shape_cast %204 : vector<1x8x16xf32> to vector<8x16xf32>
    %cst_67 = arith.constant dense<0.000000e+00> : vector<18x16xf32>
    %206 = tpu.matmul %203, %205, %cst_67 {dimension_numbers = #tpu.dot_dimension_numbers<[1], [0], [0], [1], [0, 0, 1, 1], [], []>} : vector<18x8xf32>, vector<8x16xf32>, vector<18x16xf32> -> vector<18x16xf32>
    %207 = arith.addf %202, %206 : vector<18x16xf32>
    %208 = vector.extract_strided_slice %174 {offsets = [108, 0], sizes = [18, 8], strides = [1, 1]} : vector<162x8xf32> to vector<18x8xf32>
    %c6 = arith.constant 6 : index
    %c0_68 = arith.constant 0 : index
    %c0_69 = arith.constant 0 : index
    %209 = vector.load %arg13[%c6, %c0_68, %c0_69] : memref<9x8x16xf32, #tpu.memory_space<vmem>>, vector<1x8x16xf32>
    %210 = vector.shape_cast %209 : vector<1x8x16xf32> to vector<8x16xf32>
    %cst_70 = arith.constant dense<0.000000e+00> : vector<18x16xf32>
    %211 = tpu.matmul %208, %210, %cst_70 {dimension_numbers = #tpu.dot_dimension_numbers<[1], [0], [0], [1], [0, 0, 1, 1], [], []>} : vector<18x8xf32>, vector<8x16xf32>, vector<18x16xf32> -> vector<18x16xf32>
    %212 = arith.addf %207, %211 : vector<18x16xf32>
    %213 = vector.extract_strided_slice %174 {offsets = [126, 0], sizes = [18, 8], strides = [1, 1]} : vector<162x8xf32> to vector<18x8xf32>
    %c7 = arith.constant 7 : index
    %c0_71 = arith.constant 0 : index
    %c0_72 = arith.constant 0 : index
    %214 = vector.load %arg13[%c7, %c0_71, %c0_72] : memref<9x8x16xf32, #tpu.memory_space<vmem>>, vector<1x8x16xf32>
    %215 = vector.shape_cast %214 : vector<1x8x16xf32> to vector<8x16xf32>
    %cst_73 = arith.constant dense<0.000000e+00> : vector<18x16xf32>
    %216 = tpu.matmul %213, %215, %cst_73 {dimension_numbers = #tpu.dot_dimension_numbers<[1], [0], [0], [1], [0, 0, 1, 1], [], []>} : vector<18x8xf32>, vector<8x16xf32>, vector<18x16xf32> -> vector<18x16xf32>
    %217 = arith.addf %212, %216 : vector<18x16xf32>
    %218 = vector.extract_strided_slice %174 {offsets = [144, 0], sizes = [18, 8], strides = [1, 1]} : vector<162x8xf32> to vector<18x8xf32>
    %c8 = arith.constant 8 : index
    %c0_74 = arith.constant 0 : index
    %c0_75 = arith.constant 0 : index
    %219 = vector.load %arg13[%c8, %c0_74, %c0_75] : memref<9x8x16xf32, #tpu.memory_space<vmem>>, vector<1x8x16xf32>
    %220 = vector.shape_cast %219 : vector<1x8x16xf32> to vector<8x16xf32>
    %cst_76 = arith.constant dense<0.000000e+00> : vector<18x16xf32>
    %221 = tpu.matmul %218, %220, %cst_76 {dimension_numbers = #tpu.dot_dimension_numbers<[1], [0], [0], [1], [0, 0, 1, 1], [], []>} : vector<18x8xf32>, vector<8x16xf32>, vector<18x16xf32> -> vector<18x16xf32>
    %222 = arith.addf %217, %221 : vector<18x16xf32>
    %cst_77 = arith.constant 0.000000e+00 : f32
    %223 = vector.broadcast %cst_77 : f32 to vector<18x16xf32>
    %224 = arith.maximumf %222, %223 : vector<18x16xf32>
    %c0_78 = arith.constant 0 : index
    %c0_79 = arith.constant 0 : index
    %225 = vector.load %arg16[%c0_78, %c0_79] : memref<1x32xf32, #tpu.memory_space<vmem>>, vector<1x32xf32>
    %226 = vector.shape_cast %225 : vector<1x32xf32> to vector<1x32xf32>
    %227 = vector.broadcast %226 : vector<1x32xf32> to vector<2x32xf32>
    %228 = vector.extract_strided_slice %224 {offsets = [0, 0], sizes = [2, 16], strides = [1, 1]} : vector<18x16xf32> to vector<2x16xf32>
    %c0_80 = arith.constant 0 : index
    %c0_81 = arith.constant 0 : index
    %c0_82 = arith.constant 0 : index
    %229 = vector.load %arg15[%c0_80, %c0_81, %c0_82] : memref<9x16x32xf32, #tpu.memory_space<vmem>>, vector<1x16x32xf32>
    %230 = vector.shape_cast %229 : vector<1x16x32xf32> to vector<16x32xf32>
    %cst_83 = arith.constant dense<0.000000e+00> : vector<2x32xf32>
    %231 = tpu.matmul %228, %230, %cst_83 {dimension_numbers = #tpu.dot_dimension_numbers<[1], [0], [0], [1], [0, 0, 1, 1], [], []>} : vector<2x16xf32>, vector<16x32xf32>, vector<2x32xf32> -> vector<2x32xf32>
    %232 = arith.addf %227, %231 : vector<2x32xf32>
    %233 = vector.extract_strided_slice %224 {offsets = [2, 0], sizes = [2, 16], strides = [1, 1]} : vector<18x16xf32> to vector<2x16xf32>
    %c1_84 = arith.constant 1 : index
    %c0_85 = arith.constant 0 : index
    %c0_86 = arith.constant 0 : index
    %234 = vector.load %arg15[%c1_84, %c0_85, %c0_86] : memref<9x16x32xf32, #tpu.memory_space<vmem>>, vector<1x16x32xf32>
    %235 = vector.shape_cast %234 : vector<1x16x32xf32> to vector<16x32xf32>
    %cst_87 = arith.constant dense<0.000000e+00> : vector<2x32xf32>
    %236 = tpu.matmul %233, %235, %cst_87 {dimension_numbers = #tpu.dot_dimension_numbers<[1], [0], [0], [1], [0, 0, 1, 1], [], []>} : vector<2x16xf32>, vector<16x32xf32>, vector<2x32xf32> -> vector<2x32xf32>
    %237 = arith.addf %232, %236 : vector<2x32xf32>
    %238 = vector.extract_strided_slice %224 {offsets = [4, 0], sizes = [2, 16], strides = [1, 1]} : vector<18x16xf32> to vector<2x16xf32>
    %c2_88 = arith.constant 2 : index
    %c0_89 = arith.constant 0 : index
    %c0_90 = arith.constant 0 : index
    %239 = vector.load %arg15[%c2_88, %c0_89, %c0_90] : memref<9x16x32xf32, #tpu.memory_space<vmem>>, vector<1x16x32xf32>
    %240 = vector.shape_cast %239 : vector<1x16x32xf32> to vector<16x32xf32>
    %cst_91 = arith.constant dense<0.000000e+00> : vector<2x32xf32>
    %241 = tpu.matmul %238, %240, %cst_91 {dimension_numbers = #tpu.dot_dimension_numbers<[1], [0], [0], [1], [0, 0, 1, 1], [], []>} : vector<2x16xf32>, vector<16x32xf32>, vector<2x32xf32> -> vector<2x32xf32>
    %242 = arith.addf %237, %241 : vector<2x32xf32>
    %243 = vector.extract_strided_slice %224 {offsets = [6, 0], sizes = [2, 16], strides = [1, 1]} : vector<18x16xf32> to vector<2x16xf32>
    %c3_92 = arith.constant 3 : index
    %c0_93 = arith.constant 0 : index
    %c0_94 = arith.constant 0 : index
    %244 = vector.load %arg15[%c3_92, %c0_93, %c0_94] : memref<9x16x32xf32, #tpu.memory_space<vmem>>, vector<1x16x32xf32>
    %245 = vector.shape_cast %244 : vector<1x16x32xf32> to vector<16x32xf32>
    %cst_95 = arith.constant dense<0.000000e+00> : vector<2x32xf32>
    %246 = tpu.matmul %243, %245, %cst_95 {dimension_numbers = #tpu.dot_dimension_numbers<[1], [0], [0], [1], [0, 0, 1, 1], [], []>} : vector<2x16xf32>, vector<16x32xf32>, vector<2x32xf32> -> vector<2x32xf32>
    %247 = arith.addf %242, %246 : vector<2x32xf32>
    %248 = vector.extract_strided_slice %224 {offsets = [8, 0], sizes = [2, 16], strides = [1, 1]} : vector<18x16xf32> to vector<2x16xf32>
    %c4_96 = arith.constant 4 : index
    %c0_97 = arith.constant 0 : index
    %c0_98 = arith.constant 0 : index
    %249 = vector.load %arg15[%c4_96, %c0_97, %c0_98] : memref<9x16x32xf32, #tpu.memory_space<vmem>>, vector<1x16x32xf32>
    %250 = vector.shape_cast %249 : vector<1x16x32xf32> to vector<16x32xf32>
    %cst_99 = arith.constant dense<0.000000e+00> : vector<2x32xf32>
    %251 = tpu.matmul %248, %250, %cst_99 {dimension_numbers = #tpu.dot_dimension_numbers<[1], [0], [0], [1], [0, 0, 1, 1], [], []>} : vector<2x16xf32>, vector<16x32xf32>, vector<2x32xf32> -> vector<2x32xf32>
    %252 = arith.addf %247, %251 : vector<2x32xf32>
    %253 = vector.extract_strided_slice %224 {offsets = [10, 0], sizes = [2, 16], strides = [1, 1]} : vector<18x16xf32> to vector<2x16xf32>
    %c5_100 = arith.constant 5 : index
    %c0_101 = arith.constant 0 : index
    %c0_102 = arith.constant 0 : index
    %254 = vector.load %arg15[%c5_100, %c0_101, %c0_102] : memref<9x16x32xf32, #tpu.memory_space<vmem>>, vector<1x16x32xf32>
    %255 = vector.shape_cast %254 : vector<1x16x32xf32> to vector<16x32xf32>
    %cst_103 = arith.constant dense<0.000000e+00> : vector<2x32xf32>
    %256 = tpu.matmul %253, %255, %cst_103 {dimension_numbers = #tpu.dot_dimension_numbers<[1], [0], [0], [1], [0, 0, 1, 1], [], []>} : vector<2x16xf32>, vector<16x32xf32>, vector<2x32xf32> -> vector<2x32xf32>
    %257 = arith.addf %252, %256 : vector<2x32xf32>
    %258 = vector.extract_strided_slice %224 {offsets = [12, 0], sizes = [2, 16], strides = [1, 1]} : vector<18x16xf32> to vector<2x16xf32>
    %c6_104 = arith.constant 6 : index
    %c0_105 = arith.constant 0 : index
    %c0_106 = arith.constant 0 : index
    %259 = vector.load %arg15[%c6_104, %c0_105, %c0_106] : memref<9x16x32xf32, #tpu.memory_space<vmem>>, vector<1x16x32xf32>
    %260 = vector.shape_cast %259 : vector<1x16x32xf32> to vector<16x32xf32>
    %cst_107 = arith.constant dense<0.000000e+00> : vector<2x32xf32>
    %261 = tpu.matmul %258, %260, %cst_107 {dimension_numbers = #tpu.dot_dimension_numbers<[1], [0], [0], [1], [0, 0, 1, 1], [], []>} : vector<2x16xf32>, vector<16x32xf32>, vector<2x32xf32> -> vector<2x32xf32>
    %262 = arith.addf %257, %261 : vector<2x32xf32>
    %263 = vector.extract_strided_slice %224 {offsets = [14, 0], sizes = [2, 16], strides = [1, 1]} : vector<18x16xf32> to vector<2x16xf32>
    %c7_108 = arith.constant 7 : index
    %c0_109 = arith.constant 0 : index
    %c0_110 = arith.constant 0 : index
    %264 = vector.load %arg15[%c7_108, %c0_109, %c0_110] : memref<9x16x32xf32, #tpu.memory_space<vmem>>, vector<1x16x32xf32>
    %265 = vector.shape_cast %264 : vector<1x16x32xf32> to vector<16x32xf32>
    %cst_111 = arith.constant dense<0.000000e+00> : vector<2x32xf32>
    %266 = tpu.matmul %263, %265, %cst_111 {dimension_numbers = #tpu.dot_dimension_numbers<[1], [0], [0], [1], [0, 0, 1, 1], [], []>} : vector<2x16xf32>, vector<16x32xf32>, vector<2x32xf32> -> vector<2x32xf32>
    %267 = arith.addf %262, %266 : vector<2x32xf32>
    %268 = vector.extract_strided_slice %224 {offsets = [16, 0], sizes = [2, 16], strides = [1, 1]} : vector<18x16xf32> to vector<2x16xf32>
    %c8_112 = arith.constant 8 : index
    %c0_113 = arith.constant 0 : index
    %c0_114 = arith.constant 0 : index
    %269 = vector.load %arg15[%c8_112, %c0_113, %c0_114] : memref<9x16x32xf32, #tpu.memory_space<vmem>>, vector<1x16x32xf32>
    %270 = vector.shape_cast %269 : vector<1x16x32xf32> to vector<16x32xf32>
    %cst_115 = arith.constant dense<0.000000e+00> : vector<2x32xf32>
    %271 = tpu.matmul %268, %270, %cst_115 {dimension_numbers = #tpu.dot_dimension_numbers<[1], [0], [0], [1], [0, 0, 1, 1], [], []>} : vector<2x16xf32>, vector<16x32xf32>, vector<2x32xf32> -> vector<2x32xf32>
    %272 = arith.addf %267, %271 : vector<2x32xf32>
    %cst_116 = arith.constant 0.000000e+00 : f32
    %273 = vector.broadcast %cst_116 : f32 to vector<2x32xf32>
    %274 = arith.maximumf %272, %273 : vector<2x32xf32>
    %c0_117 = arith.constant 0 : index
    %c0_118 = arith.constant 0 : index
    %275 = vector.load %arg17[%c0_117, %c0_118] : memref<32x16xf32, #tpu.memory_space<vmem>>, vector<32x16xf32>
    %cst_119 = arith.constant dense<0.000000e+00> : vector<2x16xf32>
    %276 = tpu.matmul %274, %275, %cst_119 {dimension_numbers = #tpu.dot_dimension_numbers<[1], [0], [0], [1], [0, 0, 1, 1], [], []>} : vector<2x32xf32>, vector<32x16xf32>, vector<2x16xf32> -> vector<2x16xf32>
    %c0_120 = arith.constant 0 : index
    %c0_121 = arith.constant 0 : index
    %277 = vector.load %arg18[%c0_120, %c0_121] : memref<1x16xf32, #tpu.memory_space<vmem>>, vector<1x16xf32>
    %278 = vector.broadcast %277 : vector<1x16xf32> to vector<2x16xf32>
    %279 = arith.addf %276, %278 : vector<2x16xf32>
    %c0_122 = arith.constant 0 : index
    %c0_123 = arith.constant 0 : index
    %280 = vector.load %arg19[%c0_122, %c0_123] : memref<32x24xf32, #tpu.memory_space<vmem>>, vector<32x24xf32>
    %281 = vector.extract_strided_slice %280 {offsets = [0, 0], sizes = [16, 24], strides = [1, 1]} : vector<32x24xf32> to vector<16x24xf32>
    %cst_124 = arith.constant dense<0.000000e+00> : vector<2x24xf32>
    %282 = tpu.matmul %164, %281, %cst_124 {dimension_numbers = #tpu.dot_dimension_numbers<[1], [0], [0], [1], [0, 0, 1, 1], [], []>} : vector<2x16xf32>, vector<16x24xf32>, vector<2x24xf32> -> vector<2x24xf32>
    %283 = vector.extract_strided_slice %280 {offsets = [16, 0], sizes = [16, 24], strides = [1, 1]} : vector<32x24xf32> to vector<16x24xf32>
    %cst_125 = arith.constant dense<0.000000e+00> : vector<2x24xf32>
    %284 = tpu.matmul %279, %283, %cst_125 {dimension_numbers = #tpu.dot_dimension_numbers<[1], [0], [0], [1], [0, 0, 1, 1], [], []>} : vector<2x16xf32>, vector<16x24xf32>, vector<2x24xf32> -> vector<2x24xf32>
    %285 = arith.addf %282, %284 : vector<2x24xf32>
    %c0_126 = arith.constant 0 : index
    %c0_127 = arith.constant 0 : index
    %286 = vector.load %arg20[%c0_126, %c0_127] : memref<1x24xf32, #tpu.memory_space<vmem>>, vector<1x24xf32>
    %287 = vector.broadcast %286 : vector<1x24xf32> to vector<2x24xf32>
    %288 = arith.addf %285, %287 : vector<2x24xf32>
    %cst_128 = arith.constant 0.000000e+00 : f32
    %289 = vector.broadcast %cst_128 : f32 to vector<2x24xf32>
    %290 = arith.maximumf %288, %289 : vector<2x24xf32>
    %c0_129 = arith.constant 0 : index
    %c0_130 = arith.constant 0 : index
    %291 = vector.load %arg21[%c0_129, %c0_130] : memref<24x5xf32, #tpu.memory_space<vmem>>, vector<24x5xf32>
    %cst_131 = arith.constant dense<0.000000e+00> : vector<2x5xf32>
    %292 = tpu.matmul %290, %291, %cst_131 {dimension_numbers = #tpu.dot_dimension_numbers<[1], [0], [0], [1], [0, 0, 1, 1], [], []>} : vector<2x24xf32>, vector<24x5xf32>, vector<2x5xf32> -> vector<2x5xf32>
    %c0_132 = arith.constant 0 : index
    %c0_133 = arith.constant 0 : index
    %293 = vector.load %arg22[%c0_132, %c0_133] : memref<1x5xf32, #tpu.memory_space<vmem>>, vector<1x5xf32>
    %294 = vector.broadcast %293 : vector<1x5xf32> to vector<2x5xf32>
    %295 = arith.addf %292, %294 : vector<2x5xf32>
    %cst_134 = arith.constant dense<0xFF800000> : vector<2xf32>
    %296 = vector.multi_reduction <maximumf>, %295, %cst_134 [1] : vector<2x5xf32> to vector<2xf32>
    %297 = vector.shape_cast %296 : vector<2xf32> to vector<2x1xf32>
    %298 = vector.broadcast %297 : vector<2x1xf32> to vector<2x5xf32>
    %299 = arith.subf %295, %298 : vector<2x5xf32>
    %300 = math.exp %299 : vector<2x5xf32>
    %cst_135 = arith.constant dense<0.000000e+00> : vector<2xf32>
    %301 = vector.multi_reduction <add>, %300, %cst_135 [1] : vector<2x5xf32> to vector<2xf32>
    %302 = vector.shape_cast %301 : vector<2xf32> to vector<2x1xf32>
    %303 = tpu.reciprocal %302 : vector<2x1xf32> -> vector<2x1xf32>
    %304 = vector.broadcast %303 : vector<2x1xf32> to vector<2x5xf32>
    %305 = arith.mulf %300, %304 : vector<2x5xf32>
    %c0_136 = arith.constant 0 : index
    %c0_137 = arith.constant 0 : index
    %306 = vector.load %arg23[%c0_136, %c0_137] : memref<2x5xf32, #tpu.memory_space<vmem>>, vector<2x5xf32>
    tpu.vector_store %arg23[%c0_136, %c0_137], %305 {strides = array<i32>} : memref<2x5xf32, #tpu.memory_space<vmem>>, vector<2x5xf32>,
    return
  }
  func.func @transform_0(%arg0: i32) -> (i32, i32) {
    %c0_i32 = arith.constant 0 : i32
    %c0_i32_0 = arith.constant 0 : i32
    %c0_i32_1 = arith.constant 0 : i32
    return %c0_i32, %c0_i32_0 : i32, i32
  }
  func.func @transform_1(%arg0: i32) -> (i32, i32) {
    %c0_i32 = arith.constant 0 : i32
    %c0_i32_0 = arith.constant 0 : i32
    %c0_i32_1 = arith.constant 0 : i32
    return %c0_i32, %c0_i32_0 : i32, i32
  }
  func.func @transform_2(%arg0: i32) -> (i32, i32) {
    %c0_i32 = arith.constant 0 : i32
    %c0_i32_0 = arith.constant 0 : i32
    %c0_i32_1 = arith.constant 0 : i32
    return %c0_i32, %c0_i32_0 : i32, i32
  }
  func.func @transform_3(%arg0: i32) -> (i32, i32) {
    %c0_i32 = arith.constant 0 : i32
    %c0_i32_0 = arith.constant 0 : i32
    %c0_i32_1 = arith.constant 0 : i32
    return %c0_i32, %c0_i32_0 : i32, i32
  }
  func.func @transform_4(%arg0: i32) -> (i32, i32) {
    %c0_i32 = arith.constant 0 : i32
    %c0_i32_0 = arith.constant 0 : i32
    %c0_i32_1 = arith.constant 0 : i32
    return %c0_i32, %c0_i32_0 : i32, i32
  }
  func.func @transform_5(%arg0: i32) -> (i32, i32) {
    %c0_i32 = arith.constant 0 : i32
    %c0_i32_0 = arith.constant 0 : i32
    %c0_i32_1 = arith.constant 0 : i32
    return %c0_i32, %c0_i32_0 : i32, i32
  }
  func.func @transform_6(%arg0: i32) -> (i32, i32) {
    %c0_i32 = arith.constant 0 : i32
    %c0_i32_0 = arith.constant 0 : i32
    %c0_i32_1 = arith.constant 0 : i32
    return %c0_i32, %c0_i32_0 : i32, i32
  }
  func.func @transform_7(%arg0: i32) -> (i32, i32) {
    %c0_i32 = arith.constant 0 : i32
    %c0_i32_0 = arith.constant 0 : i32
    %c0_i32_1 = arith.constant 0 : i32
    return %c0_i32, %c0_i32_0 : i32, i32
  }
  func.func @transform_8(%arg0: i32) -> (i32, i32) {
    %c0_i32 = arith.constant 0 : i32
    %c0_i32_0 = arith.constant 0 : i32
    %c0_i32_1 = arith.constant 0 : i32
    return %c0_i32, %c0_i32_0 : i32, i32
  }
  func.func @transform_9(%arg0: i32) -> (i32, i32) {
    %c0_i32 = arith.constant 0 : i32
    %c0_i32_0 = arith.constant 0 : i32
    %c0_i32_1 = arith.constant 0 : i32
    return %c0_i32, %c0_i32_0 : i32, i32
  }
  func.func @transform_10(%arg0: i32) -> (i32, i32) {
    %c0_i32 = arith.constant 0 : i32
    %c0_i32_0 = arith.constant 0 : i32
    %c0_i32_1 = arith.constant 0 : i32
    return %c0_i32, %c0_i32_0 : i32, i32
  }
  func.func @transform_11(%arg0: i32) -> (i32, i32) {
    %c0_i32 = arith.constant 0 : i32
    %c0_i32_0 = arith.constant 0 : i32
    %c0_i32_1 = arith.constant 0 : i32
    return %c0_i32, %c0_i32_0 : i32, i32
  }
  func.func @transform_12(%arg0: i32) -> (i32, i32, i32) {
    %c0_i32 = arith.constant 0 : i32
    %c0_i32_0 = arith.constant 0 : i32
    %c0_i32_1 = arith.constant 0 : i32
    %c0_i32_2 = arith.constant 0 : i32
    return %c0_i32, %c0_i32_0, %c0_i32_1 : i32, i32, i32
  }
  func.func @transform_13(%arg0: i32) -> (i32, i32) {
    %c0_i32 = arith.constant 0 : i32
    %c0_i32_0 = arith.constant 0 : i32
    %c0_i32_1 = arith.constant 0 : i32
    return %c0_i32, %c0_i32_0 : i32, i32
  }
  func.func @transform_14(%arg0: i32) -> (i32, i32, i32) {
    %c0_i32 = arith.constant 0 : i32
    %c0_i32_0 = arith.constant 0 : i32
    %c0_i32_1 = arith.constant 0 : i32
    %c0_i32_2 = arith.constant 0 : i32
    return %c0_i32, %c0_i32_0, %c0_i32_1 : i32, i32, i32
  }
  func.func @transform_15(%arg0: i32) -> (i32, i32) {
    %c0_i32 = arith.constant 0 : i32
    %c0_i32_0 = arith.constant 0 : i32
    %c0_i32_1 = arith.constant 0 : i32
    return %c0_i32, %c0_i32_0 : i32, i32
  }
  func.func @transform_16(%arg0: i32) -> (i32, i32) {
    %c0_i32 = arith.constant 0 : i32
    %c0_i32_0 = arith.constant 0 : i32
    %c0_i32_1 = arith.constant 0 : i32
    return %c0_i32, %c0_i32_0 : i32, i32
  }
  func.func @transform_17(%arg0: i32) -> (i32, i32) {
    %c0_i32 = arith.constant 0 : i32
    %c0_i32_0 = arith.constant 0 : i32
    %c0_i32_1 = arith.constant 0 : i32
    return %c0_i32, %c0_i32_0 : i32, i32
  }
  func.func @transform_18(%arg0: i32) -> (i32, i32) {
    %c0_i32 = arith.constant 0 : i32
    %c0_i32_0 = arith.constant 0 : i32
    %c0_i32_1 = arith.constant 0 : i32
    return %c0_i32, %c0_i32_0 : i32, i32
  }
  func.func @transform_19(%arg0: i32) -> (i32, i32) {
    %c0_i32 = arith.constant 0 : i32
    %c0_i32_0 = arith.constant 0 : i32
    %c0_i32_1 = arith.constant 0 : i32
    return %c0_i32, %c0_i32_0 : i32, i32
  }
  func.func @transform_20(%arg0: i32) -> (i32, i32) {
    %c0_i32 = arith.constant 0 : i32
    %c0_i32_0 = arith.constant 0 : i32
    %c0_i32_1 = arith.constant 0 : i32
    return %c0_i32, %c0_i32_0 : i32, i32
  }
  func.func @transform_21(%arg0: i32) -> (i32, i32) {
    %c0_i32 = arith.constant 0 : i32
    %c0_i32_0 = arith.constant 0 : i32
    %c0_i32_1 = arith.constant 0 : i32
    return %c0_i32, %c0_i32_0 : i32, i32
  }
  func.func @transform_22(%arg0: i32) -> (i32, i32) {
    %c0_i32 = arith.constant 0 : i32
    %c0_i32_0 = arith.constant 0 : i32
    %c0_i32_1 = arith.constant 0 : i32
    return %c0_i32, %c0_i32_0 : i32, i32
  }
}

</mosaic_0001>

<llo_original>
// kernel: multimodal_forward.1
$region0: #{multimodal_forward.1}
  #allocation0 [shape = 'u32[]', space=smem, size = 0x4, offset = 0x4, fixed_abs, tag = 'smem constant byte address 0x4 - core index']
  #allocation1 [shape = 'u32[144,128]{1,0:T(1,128)}', space=vmem, size = 0x12000, scoped, tag = 'internal scratch']
  %s0 = inlined_call_operand.vmem [shape: f32[16,16], index: 0, kind: input, shape index: {}]
  %s1 = inlined_call_operand.vmem [shape: f32[16,128], index: 1, kind: input, shape index: {}]
  %s2 = inlined_call_operand.vmem [shape: f32[32,128], index: 2, kind: input, shape index: {}]
  %s3 = inlined_call_operand.vmem [shape: f32[1,128], index: 3, kind: input, shape index: {}]
  %s4 = inlined_call_operand.vmem [shape: f32[32,24], index: 4, kind: input, shape index: {}]
  %s5 = inlined_call_operand.vmem [shape: f32[1,24], index: 5, kind: input, shape index: {}]
  %s6 = inlined_call_operand.vmem [shape: f32[24,16], index: 6, kind: input, shape index: {}]
  %s7 = inlined_call_operand.vmem [shape: f32[1,16], index: 7, kind: input, shape index: {}]
  %s8 = inlined_call_operand.vmem [shape: f32[98,36], index: 8, kind: input, shape index: {}]
  %s9 = inlined_call_operand.vmem [shape: f32[36,8], index: 9, kind: input, shape index: {}]
  %s10 = inlined_call_operand.vmem [shape: f32[1,8], index: 10, kind: input, shape index: {}]
  %s11 = inlined_call_operand.vmem [shape: f32[162,98], index: 11, kind: input, shape index: {}]
  %s12 = inlined_call_operand.vmem [shape: f32[9,8,16], index: 12, kind: input, shape index: {}]
  %s13 = inlined_call_operand.vmem [shape: f32[1,16], index: 13, kind: input, shape index: {}]
  %s14 = inlined_call_operand.vmem [shape: f32[9,16,32], index: 14, kind: input, shape index: {}]
  %s15 = inlined_call_operand.vmem [shape: f32[1,32], index: 15, kind: input, shape index: {}]
  %s16 = inlined_call_operand.vmem [shape: f32[32,16], index: 16, kind: input, shape index: {}]
  %s17 = inlined_call_operand.vmem [shape: f32[1,16], index: 17, kind: input, shape index: {}]
  %s18 = inlined_call_operand.vmem [shape: f32[32,24], index: 18, kind: input, shape index: {}]
  %s19 = inlined_call_operand.vmem [shape: f32[1,24], index: 19, kind: input, shape index: {}]
  %s20 = inlined_call_operand.vmem [shape: f32[24,5], index: 20, kind: input, shape index: {}]
  %s21 = inlined_call_operand.vmem [shape: f32[1,5], index: 21, kind: input, shape index: {}]
  %s22 = inlined_call_operand.hbm [shape: f32[2,5], index: 22, kind: output, shape index: {}]
  %s23 = sld [smem:[#allocation0]]
  $region98: #{multimodal_forward.1} parent=0
    _
  %s25 = ssub.s32 1, %s23
  %s26 = scalar_select 0, %s25, %s23
  $region1: #{multimodal_forward.1} parent=0
    #allocation2 [shape = 'u8[1024]{0}', space=vmem, size = 0x400, scoped, tag = 'output window, operand 0, single buffered']
    #allocation3 [shape = 's32[1]{0}', space=sflag, size = 0x4, scoped, tag = 'scoped memory for multimodal_forward.1']
    %27 = vsyncpa [#allocation3], 0
    // Predicated region
    $region2: #{multimodal_forward.1} parent=1 // pred_check
      _
    $region3: #{multimodal_forward.1} parent=1 // pred_check_branch
      %29 = sbr.rel (0) target = $region5
    $region4: #{multimodal_forward.1} parent=1 // pred_region
      _
    $region5: #{multimodal_forward.1} parent=1 // pred_fallthru
      _
    // Predicated region
    $region6: #{multimodal_forward.1} parent=1 // pred_check
      _
    $region7: #{multimodal_forward.1} parent=1 // pred_check_branch
      %31 = sbr.rel (0) target = $region9
    $region8: #{multimodal_forward.1} parent=1 // pred_region
      _
    $region9: #{multimodal_forward.1} parent=1 // pred_fallthru
      _
    // Predicated region
    $region10: #{multimodal_forward.1} parent=1 // pred_check
      _
    $region11: #{multimodal_forward.1} parent=1 // pred_check_branch
      %33 = sbr.rel (0) target = $region13
    $region12: #{multimodal_forward.1} parent=1 // pred_region
      _
    $region13: #{multimodal_forward.1} parent=1 // pred_fallthru
      _
    // Predicated region
    $region14: #{multimodal_forward.1} parent=1 // pred_check
      _
    $region15: #{multimodal_forward.1} parent=1 // pred_check_branch
      %35 = sbr.rel (0) target = $region17
    $region16: #{multimodal_forward.1} parent=1 // pred_region
      _
    $region17: #{multimodal_forward.1} parent=1 // pred_fallthru
      _
    // Predicated region
    $region18: #{multimodal_forward.1} parent=1 // pred_check
      _
    $region19: #{multimodal_forward.1} parent=1 // pred_check_branch
      %37 = sbr.rel (0) target = $region21
    $region20: #{multimodal_forward.1} parent=1 // pred_region
      _
    $region21: #{multimodal_forward.1} parent=1 // pred_fallthru
      _
    // Predicated region
    $region22: #{multimodal_forward.1} parent=1 // pred_check
      _
    $region23: #{multimodal_forward.1} parent=1 // pred_check_branch
      %39 = sbr.rel (0) target = $region25
    $region24: #{multimodal_forward.1} parent=1 // pred_region
      _
    $region25: #{multimodal_forward.1} parent=1 // pred_fallthru
      _
    // Predicated region
    $region26: #{multimodal_forward.1} parent=1 // pred_check
      _
    $region27: #{multimodal_forward.1} parent=1 // pred_check_branch
      %41 = sbr.rel (0) target = $region29
    $region28: #{multimodal_forward.1} parent=1 // pred_region
      _
    $region29: #{multimodal_forward.1} parent=1 // pred_fallthru
      _
    // Predicated region
    $region30: #{multimodal_forward.1} parent=1 // pred_check
      _
    $region31: #{multimodal_forward.1} parent=1 // pred_check_branch
      %43 = sbr.rel (0) target = $region33
    $region32: #{multimodal_forward.1} parent=1 // pred_region
      _
    $region33: #{multimodal_forward.1} parent=1 // pred_fallthru
      _
    // Predicated region
    $region34: #{multimodal_forward.1} parent=1 // pred_check
      _
    $region35: #{multimodal_forward.1} parent=1 // pred_check_branch
      %45 = sbr.rel (0) target = $region37
    $region36: #{multimodal_forward.1} parent=1 // pred_region
      _
    $region37: #{multimodal_forward.1} parent=1 // pred_fallthru
      _
    // Predicated region
    $region38: #{multimodal_forward.1} parent=1 // pred_check
      _
    $region39: #{multimodal_forward.1} parent=1 // pred_check_branch
      %47 = sbr.rel (0) target = $region41
    $region40: #{multimodal_forward.1} parent=1 // pred_region
      _
    $region41: #{multimodal_forward.1} parent=1 // pred_fallthru
      _
    // Predicated region
    $region42: #{multimodal_forward.1} parent=1 // pred_check
      _
    $region43: #{multimodal_forward.1} parent=1 // pred_check_branch
      %49 = sbr.rel (0) target = $region45
    $region44: #{multimodal_forward.1} parent=1 // pred_region
      _
    $region45: #{multimodal_forward.1} parent=1 // pred_fallthru
      _
    // Predicated region
    $region46: #{multimodal_forward.1} parent=1 // pred_check
      _
    $region47: #{multimodal_forward.1} parent=1 // pred_check_branch
      %51 = sbr.rel (0) target = $region49
    $region48: #{multimodal_forward.1} parent=1 // pred_region
      _
    $region49: #{multimodal_forward.1} parent=1 // pred_fallthru
      _
    // Predicated region
    $region50: #{multimodal_forward.1} parent=1 // pred_check
      _
    $region51: #{multimodal_forward.1} parent=1 // pred_check_branch
      %53 = sbr.rel (0) target = $region53
    $region52: #{multimodal_forward.1} parent=1 // pred_region
      _
    $region53: #{multimodal_forward.1} parent=1 // pred_fallthru
      _
    // Predicated region
    $region54: #{multimodal_forward.1} parent=1 // pred_check
      _
    $region55: #{multimodal_forward.1} parent=1 // pred_check_branch
      %55 = sbr.rel (0) target = $region57
    $region56: #{multimodal_forward.1} parent=1 // pred_region
      _
    $region57: #{multimodal_forward.1} parent=1 // pred_fallthru
      _
    // Predicated region
    $region58: #{multimodal_forward.1} parent=1 // pred_check
      _
    $region59: #{multimodal_forward.1} parent=1 // pred_check_branch
      %57 = sbr.rel (0) target = $region61
    $region60: #{multimodal_forward.1} parent=1 // pred_region
      _
    $region61: #{multimodal_forward.1} parent=1 // pred_fallthru
      _
    // Predicated region
    $region62: #{multimodal_forward.1} parent=1 // pred_check
      _
    $region63: #{multimodal_forward.1} parent=1 // pred_check_branch
      %59 = sbr.rel (0) target = $region65
    $region64: #{multimodal_forward.1} parent=1 // pred_region
      _
    $region65: #{multimodal_forward.1} parent=1 // pred_fallthru
      _
    // Predicated region
    $region66: #{multimodal_forward.1} parent=1 // pred_check
      _
    $region67: #{multimodal_forward.1} parent=1 // pred_check_branch
      %61 = sbr.rel (0) target = $region69
    $region68: #{multimodal_forward.1} parent=1 // pred_region
      _
    $region69: #{multimodal_forward.1} parent=1 // pred_fallthru
      _
    // Predicated region
    $region70: #{multimodal_forward.1} parent=1 // pred_check
      _
    $region71: #{multimodal_forward.1} parent=1 // pred_check_branch
      %63 = sbr.rel (0) target = $region73
    $region72: #{multimodal_forward.1} parent=1 // pred_region
      _
    $region73: #{multimodal_forward.1} parent=1 // pred_fallthru
      _
    // Predicated region
    $region74: #{multimodal_forward.1} parent=1 // pred_check
      _
    $region75: #{multimodal_forward.1} parent=1 // pred_check_branch
      %65 = sbr.rel (0) target = $region77
    $region76: #{multimodal_forward.1} parent=1 // pred_region
      _
    $region77: #{multimodal_forward.1} parent=1 // pred_fallthru
      _
    // Predicated region
    $region78: #{multimodal_forward.1} parent=1 // pred_check
      _
    $region79: #{multimodal_forward.1} parent=1 // pred_check_branch
      %67 = sbr.rel (0) target = $region81
    $region80: #{multimodal_forward.1} parent=1 // pred_region
      _
    $region81: #{multimodal_forward.1} parent=1 // pred_fallthru
      _
    // Predicated region
    $region82: #{multimodal_forward.1} parent=1 // pred_check
      _
    $region83: #{multimodal_forward.1} parent=1 // pred_check_branch
      %69 = sbr.rel (0) target = $region85
    $region84: #{multimodal_forward.1} parent=1 // pred_region
      _
    $region85: #{multimodal_forward.1} parent=1 // pred_fallthru
      _
    // Predicated region
    $region86: #{multimodal_forward.1} parent=1 // pred_check
      _
    $region87: #{multimodal_forward.1} parent=1 // pred_check_branch
      %71 = sbr.rel (0) target = $region89
    $region88: #{multimodal_forward.1} parent=1 // pred_region
      _
    $region89: #{multimodal_forward.1} parent=1 // pred_fallthru
      _
    %v72 = vld [vmem:[%s0] sm:$0xff]
    %v73 = vld [vmem:[%s0 + $0x8] sm:$0xff]
    %v74 = vld [vmem:[%s1] sm:$0xff]
    %v75 = vld [vmem:[%s1 + $0x8] sm:$0xff]
    %v76 = vld [vmem:[%s3] sm:$0x1]
    %v78 = vlaneseq
    %v79 = vshrl.u32 %v78, 7
    %v80 = vsub.s32 0, %v79
    %v81 = vrot.slane %v76, %v80
    %vm83 = vcmask 130048
    %v85 = vsel %vm83, %v72, 0
    %v88 = vsel %vm83, %v73, 0
    %90 = vmatprep.subr.mxu0 0.0
    %91 = vmatpush1.msra.mxu0 0.0
    %92 = vmatprep.subr.mxu0 0.0
    %93 = vmatpush1.msra.mxu0 0.0
    %94 = vmatprep.subr.mxu0 0.0
    %95 = vmatpush1.msra.mxu0 0.0
    %96 = vmatprep.subr.mxu0 0.0
    %97 = vmatpush1.msra.mxu0 0.0
    %98 = vmatprep.subr.mxu0 0.0
    %99 = vmatpush1.msra.mxu0 0.0
    %100 = vmatprep.subr.mxu0 0.0
    %101 = vmatpush1.msra.mxu0 0.0
    %102 = vmatprep.subr.mxu0 0.0
    %103 = vmatpush1.msra.mxu0 0.0
    %104 = vmatprep.subr.mxu0 0.0
    %105 = vmatpush1.msra.mxu0 0.0
    %106 = vmatprep.subr.mxu0 0.0
    %107 = vmatpush1.msra.mxu0 0.0
    %108 = vmatprep.subr.mxu0 0.0
    %109 = vmatpush1.msra.mxu0 0.0
    %110 = vmatprep.subr.mxu0 0.0
    %111 = vmatpush1.msra.mxu0 0.0
    %112 = vmatprep.subr.mxu0 0.0
    %113 = vmatpush1.msra.mxu0 0.0
    %114 = vmatprep.subr.mxu0 0.0
    %115 = vmatpush1.msra.mxu0 0.0
    %116 = vmatprep.subr.mxu0 0.0
    %117 = vmatpush1.msra.mxu0 0.0
    %118 = vmatprep.subr.mxu0 0.0
    %119 = vmatpush1.msra.mxu0 %v75
    %120 = vmatprep.subr.mxu0 0.0
    %121 = vmatpush1.msra.mxu0 %v74
    %122 = vmatprep.subr.mxu0 0.0
    %123 = vmatpush2.msra.mxu0 0.0
    %124 = vmatprep.subr.mxu0 0.0
    %125 = vmatpush2.msra.mxu0 0.0
    %126 = vmatprep.subr.mxu0 0.0
    %127 = vmatpush2.msra.mxu0 0.0
    %128 = vmatprep.subr.mxu0 0.0
    %129 = vmatpush2.msra.mxu0 0.0
    %130 = vmatprep.subr.mxu0 0.0
    %131 = vmatpush2.msra.mxu0 0.0
    %132 = vmatprep.subr.mxu0 0.0
    %133 = vmatpush2.msra.mxu0 0.0
    %134 = vmatprep.subr.mxu0 0.0
    %135 = vmatpush2.msra.mxu0 0.0
    %136 = vmatprep.subr.mxu0 0.0
    %137 = vmatpush2.msra.mxu0 0.0
    %138 = vmatprep.subr.mxu0 0.0
    %139 = vmatpush2.msra.mxu0 0.0
    %140 = vmatprep.subr.mxu0 0.0
    %141 = vmatpush2.msra.mxu0 0.0
    %142 = vmatprep.subr.mxu0 0.0
    %143 = vmatpush2.msra.mxu0 0.0
    %144 = vmatprep.subr.mxu0 0.0
    %145 = vmatpush2.msra.mxu0 0.0
    %146 = vmatprep.subr.mxu0 0.0
    %147 = vmatpush2.msra.mxu0 0.0
    %148 = vmatprep.subr.mxu0 0.0
    %149 = vmatpush2.msra.mxu0 0.0
    %150 = vmatprep.subr.mxu0 0.0
    %151 = vmatpush2.msra.mxu0 0.0
    %152 = vmatprep.subr.mxu0 0.0
    %153 = vmatpush2.msra.mxu0 0.0
    %154 = vmatprep.mubr.f32.mxu0 0.0
    %155 = vmatmul.mubr.f32.gmra.mxu0 %v85
    %v156 = vpop.f32.mrf.mxu0
    %v157 = vadd.f32 %v81, %v156
    %v158 = vpop.f32.mrf.mxu0
    %159 = vmatprep.mubr.f32.mxu0 0.0
    %160 = vmatmul.mubr.f32.gmra.mxu0 %v88
    %v161 = vpop.f32.mrf.mxu0
    %v162 = vadd.f32 %v81, %v161
    %v163 = vpop.f32.mrf.mxu0
    %164 = vdwg.mxu0
    %v165 = vld [vmem:[%s2] sm:$0xff]
    %v166 = vld [vmem:[%s2 + $0x8] sm:$0xff]
    %v167 = vld [vmem:[%s2 + $0x10] sm:$0xff]
    %v168 = vld [vmem:[%s2 + $0x18] sm:$0xff]
    %vm169 = vcmask 261120
    %v171 = vsel %vm169, 0.0, 0
    %173 = vmatprep.subr.mxu0 0.0
    %174 = vmatpush1.msra.mxu0 0.0
    %175 = vmatprep.subr.mxu0 0.0
    %176 = vmatpush1.msra.mxu0 0.0
    %177 = vmatprep.subr.mxu0 0.0
    %178 = vmatpush1.msra.mxu0 0.0
    %179 = vmatprep.subr.mxu0 0.0
    %180 = vmatpush1.msra.mxu0 0.0
    %181 = vmatprep.subr.mxu0 0.0
    %182 = vmatpush1.msra.mxu0 0.0
    %183 = vmatprep.subr.mxu0 0.0
    %184 = vmatpush1.msra.mxu0 0.0
    %185 = vmatprep.subr.mxu0 0.0
    %186 = vmatpush1.msra.mxu0 0.0
    %187 = vmatprep.subr.mxu0 0.0
    %188 = vmatpush1.msra.mxu0 0.0
    %189 = vmatprep.subr.mxu0 0.0
    %190 = vmatpush1.msra.mxu0 0.0
    %191 = vmatprep.subr.mxu0 0.0
    %192 = vmatpush1.msra.mxu0 0.0
    %193 = vmatprep.subr.mxu0 0.0
    %194 = vmatpush1.msra.mxu0 0.0
    %195 = vmatprep.subr.mxu0 0.0
    %196 = vmatpush1.msra.mxu0 0.0
    %197 = vmatprep.subr.mxu0 0.0
    %198 = vmatpush1.msra.mxu0 %v168
    %199 = vmatprep.subr.mxu0 0.0
    %200 = vmatpush1.msra.mxu0 %v167
    %201 = vmatprep.subr.mxu0 0.0
    %202 = vmatpush1.msra.mxu0 %v166
    %203 = vmatprep.subr.mxu0 0.0
    %204 = vmatpush1.msra.mxu0 %v165
    %205 = vmatprep.subr.mxu0 0.0
    %206 = vmatpush2.msra.mxu0 0.0
    %207 = vmatprep.subr.mxu0 0.0
    %208 = vmatpush2.msra.mxu0 0.0
    %209 = vmatprep.subr.mxu0 0.0
    %210 = vmatpush2.msra.mxu0 0.0
    %211 = vmatprep.subr.mxu0 0.0
    %212 = vmatpush2.msra.mxu0 0.0
    %213 = vmatprep.subr.mxu0 0.0
    %214 = vmatpush2.msra.mxu0 0.0
    %215 = vmatprep.subr.mxu0 0.0
    %216 = vmatpush2.msra.mxu0 0.0
    %217 = vmatprep.subr.mxu0 0.0
    %218 = vmatpush2.msra.mxu0 0.0
    %219 = vmatprep.subr.mxu0 0.0
    %220 = vmatpush2.msra.mxu0 0.0
    %221 = vmatprep.subr.mxu0 0.0
    %222 = vmatpush2.msra.mxu0 0.0
    %223 = vmatprep.subr.mxu0 0.0
    %224 = vmatpush2.msra.mxu0 0.0
    %225 = vmatprep.subr.mxu0 0.0
    %226 = vmatpush2.msra.mxu0 0.0
    %227 = vmatprep.subr.mxu0 0.0
    %228 = vmatpush2.msra.mxu0 0.0
    %229 = vmatprep.subr.mxu0 0.0
    %230 = vmatpush2.msra.mxu0 0.0
    %231 = vmatprep.subr.mxu0 0.0
    %232 = vmatpush2.msra.mxu0 0.0
    %233 = vmatprep.subr.mxu0 0.0
    %234 = vmatpush2.msra.mxu0 0.0
    %235 = vmatprep.subr.mxu0 0.0
    %236 = vmatpush2.msra.mxu0 0.0
    %237 = vmatprep.mubr.f32.mxu0 0.0
    %238 = vmatmul.mubr.f32.gmra.mxu0 %v171
    %v239 = vpop.f32.mrf.mxu0
    %v240 = vadd.f32 0.0, %v239
    %v241 = vpop.f32.mrf.mxu0
    %242 = vdwg.mxu0
    %v243 = vadd.f32 %v157, %v240
    %v244 = vxor.u32 %v243, 2147483648
    %v245 = vmul.f32 %v244, 1.442695
    %v246 = vpow.pop %v245
    %v247 = vadd.f32 %v246, 1.0
    %v248 = vrcp.pop %v247
    %v249 = vmul.f32 1.0, %v248
    %v250 = vtanh.pop %v243
    %v251 = vmul.f32 %v249, 0.0
    %253 = vrot.lane.b32.xlu0 %v250, 64
    %v254 = vpop.permute.xlu0 %253
    %v256 = vmul.f32 %v249, %v254
    %258 = vrot.lane.b32.xlu0 %v256, 32
    %v259 = vpop.permute.xlu0 %258
    %v261 = vadd.f32 %v251, %v259
    %v262 = vtanh.pop %v261
    %264 = vrot.lane.b32.xlu0 %v262, 64
    %v265 = vpop.permute.xlu0 %264
    %v267 = vmul.f32 %v249, %v265
    %269 = vrot.lane.b32.xlu0 %v267, 32
    %v270 = vpop.permute.xlu0 %269
    %v271 = vsel %vm169, %v270, 0
    %273 = vmatprep.subr.mxu0 0.0
    %274 = vmatpush1.msra.mxu0 0.0
    %275 = vmatprep.subr.mxu0 0.0
    %276 = vmatpush1.msra.mxu0 0.0
    %277 = vmatprep.subr.mxu0 0.0
    %278 = vmatpush1.msra.mxu0 0.0
    %279 = vmatprep.subr.mxu0 0.0
    %280 = vmatpush1.msra.mxu0 0.0
    %281 = vmatprep.subr.mxu0 0.0
    %282 = vmatpush1.msra.mxu0 0.0
    %283 = vmatprep.subr.mxu0 0.0
    %284 = vmatpush1.msra.mxu0 0.0
    %285 = vmatprep.subr.mxu0 0.0
    %286 = vmatpush1.msra.mxu0 0.0
    %287 = vmatprep.subr.mxu0 0.0
    %288 = vmatpush1.msra.mxu0 0.0
    %289 = vmatprep.subr.mxu0 0.0
    %290 = vmatpush1.msra.mxu0 0.0
    %291 = vmatprep.subr.mxu0 0.0
    %292 = vmatpush1.msra.mxu0 0.0
    %293 = vmatprep.subr.mxu0 0.0
    %294 = vmatpush1.msra.mxu0 0.0
    %295 = vmatprep.subr.mxu0 0.0
    %296 = vmatpush1.msra.mxu0 0.0
    %297 = vmatprep.subr.mxu0 0.0
    %298 = vmatpush1.msra.mxu0 %v168
    %299 = vmatprep.subr.mxu0 0.0
    %300 = vmatpush1.msra.mxu0 %v167
    %301 = vmatprep.subr.mxu0 0.0
    %302 = vmatpush1.msra.mxu0 %v166
    %303 = vmatprep.subr.mxu0 0.0
    %304 = vmatpush1.msra.mxu0 %v165
    %305 = vmatprep.subr.mxu0 0.0
    %306 = vmatpush2.msra.mxu0 0.0
    %307 = vmatprep.subr.mxu0 0.0
    %308 = vmatpush2.msra.mxu0 0.0
    %309 = vmatprep.subr.mxu0 0.0
    %310 = vmatpush2.msra.mxu0 0.0
    %311 = vmatprep.subr.mxu0 0.0
    %312 = vmatpush2.msra.mxu0 0.0
    %313 = vmatprep.subr.mxu0 0.0
    %314 = vmatpush2.msra.mxu0 0.0
    %315 = vmatprep.subr.mxu0 0.0
    %316 = vmatpush2.msra.mxu0 0.0
    %317 = vmatprep.subr.mxu0 0.0
    %318 = vmatpush2.msra.mxu0 0.0
    %319 = vmatprep.subr.mxu0 0.0
    %320 = vmatpush2.msra.mxu0 0.0
    %321 = vmatprep.subr.mxu0 0.0
    %322 = vmatpush2.msra.mxu0 0.0
    %323 = vmatprep.subr.mxu0 0.0
    %324 = vmatpush2.msra.mxu0 0.0
    %325 = vmatprep.subr.mxu0 0.0
    %326 = vmatpush2.msra.mxu0 0.0
    %327 = vmatprep.subr.mxu0 0.0
    %328 = vmatpush2.msra.mxu0 0.0
    %329 = vmatprep.subr.mxu0 0.0
    %330 = vmatpush2.msra.mxu0 0.0
    %331 = vmatprep.subr.mxu0 0.0
    %332 = vmatpush2.msra.mxu0 0.0
    %333 = vmatprep.subr.mxu0 0.0
    %334 = vmatpush2.msra.mxu0 0.0
    %335 = vmatprep.subr.mxu0 0.0
    %336 = vmatpush2.msra.mxu0 0.0
    %337 = vmatprep.mubr.f32.mxu0 0.0
    %338 = vmatmul.mubr.f32.gmra.mxu0 %v271
    %v339 = vpop.f32.mrf.mxu0
    %v340 = vadd.f32 0.0, %v339
    %v341 = vpop.f32.mrf.mxu0
    %342 = vdwg.mxu0
    %v344 = vrot.slane %v340, 6
    %v346 = vadd.f32 %v157, %v344
    %v347 = vxor.u32 %v346, 2147483648
    %v348 = vmul.f32 %v347, 1.442695
    %v349 = vpow.pop %v348
    %v350 = vadd.f32 %v349, 1.0
    %v351 = vrcp.pop %v350
    %v352 = vmul.f32 1.0, %v351
    %v353 = vtanh.pop %v346
    %v355 = vrot.slane %v261, 6
    %v357 = vmul.f32 %v352, %v355
    %359 = vrot.lane.b32.xlu0 %v353, 64
    %v360 = vpop.permute.xlu0 %359
    %v362 = vmul.f32 %v352, %v360
    %364 = vrot.lane.b32.xlu0 %v362, 32
    %v365 = vpop.permute.xlu0 %364
    %v367 = vadd.f32 %v357, %v365
    %v368 = vtanh.pop %v367
    %370 = vrot.lane.b32.xlu0 %v368, 64
    %v371 = vpop.permute.xlu0 %370
    %v373 = vmul.f32 %v352, %v371
    %v375 = vrot.slane %v373, 2
    %376 = vrot.lane.b32.xlu0 %v375, 32
    %v377 = vpop.permute.xlu0 %376
    %v378 = vsel %vm169, %v377, 0
    %380 = vmatprep.subr.mxu0 0.0
    %381 = vmatpush1.msra.mxu0 0.0
    %382 = vmatprep.subr.mxu0 0.0
    %383 = vmatpush1.msra.mxu0 0.0
    %384 = vmatprep.subr.mxu0 0.0
    %385 = vmatpush1.msra.mxu0 0.0
    %386 = vmatprep.subr.mxu0 0.0
    %387 = vmatpush1.msra.mxu0 0.0
    %388 = vmatprep.subr.mxu0 0.0
    %389 = vmatpush1.msra.mxu0 0.0
    %390 = vmatprep.subr.mxu0 0.0
    %391 = vmatpush1.msra.mxu0 0.0
    %392 = vmatprep.subr.mxu0 0.0
    %393 = vmatpush1.msra.mxu0 0.0
    %394 = vmatprep.subr.mxu0 0.0
    %395 = vmatpush1.msra.mxu0 0.0
    %396 = vmatprep.subr.mxu0 0.0
    %397 = vmatpush1.msra.mxu0 0.0
    %398 = vmatprep.subr.mxu0 0.0
    %399 = vmatpush1.msra.mxu0 0.0
    %400 = vmatprep.subr.mxu0 0.0
    %401 = vmatpush1.msra.mxu0 0.0
    %402 = vmatprep.subr.mxu0 0.0
    %403 = vmatpush1.msra.mxu0 0.0
    %404 = vmatprep.subr.mxu0 0.0
    %405 = vmatpush1.msra.mxu0 %v168
    %406 = vmatprep.subr.mxu0 0.0
    %407 = vmatpush1.msra.mxu0 %v167
    %408 = vmatprep.subr.mxu0 0.0
    %409 = vmatpush1.msra.mxu0 %v166
    %410 = vmatprep.subr.mxu0 0.0
    %411 = vmatpush1.msra.mxu0 %v165
    %412 = vmatprep.subr.mxu0 0.0
    %413 = vmatpush2.msra.mxu0 0.0
    %414 = vmatprep.subr.mxu0 0.0
    %415 = vmatpush2.msra.mxu0 0.0
    %416 = vmatprep.subr.mxu0 0.0
    %417 = vmatpush2.msra.mxu0 0.0
    %418 = vmatprep.subr.mxu0 0.0
    %419 = vmatpush2.msra.mxu0 0.0
    %420 = vmatprep.subr.mxu0 0.0
    %421 = vmatpush2.msra.mxu0 0.0
    %422 = vmatprep.subr.mxu0 0.0
    %423 = vmatpush2.msra.mxu0 0.0
    %424 = vmatprep.subr.mxu0 0.0
    %425 = vmatpush2.msra.mxu0 0.0
    %426 = vmatprep.subr.mxu0 0.0
    %427 = vmatpush2.msra.mxu0 0.0
    %428 = vmatprep.subr.mxu0 0.0
    %429 = vmatpush2.msra.mxu0 0.0
    %430 = vmatprep.subr.mxu0 0.0
    %431 = vmatpush2.msra.mxu0 0.0
    %432 = vmatprep.subr.mxu0 0.0
    %433 = vmatpush2.msra.mxu0 0.0
    %434 = vmatprep.subr.mxu0 0.0
    %435 = vmatpush2.msra.mxu0 0.0
    %436 = vmatprep.subr.mxu0 0.0
    %437 = vmatpush2.msra.mxu0 0.0
    %438 = vmatprep.subr.mxu0 0.0
    %439 = vmatpush2.msra.mxu0 0.0
    %440 = vmatprep.subr.mxu0 0.0
    %441 = vmatpush2.msra.mxu0 0.0
    %442 = vmatprep.subr.mxu0 0.0
    %443 = vmatpush2.msra.mxu0 0.0
    %444 = vmatprep.mubr.f32.mxu0 0.0
    %445 = vmatmul.mubr.f32.gmra.mxu0 %v378
    %v446 = vpop.f32.mrf.mxu0
    %v447 = vadd.f32 0.0, %v446
    %v448 = vpop.f32.mrf.mxu0
    %449 = vdwg.mxu0
    %v451 = vrot.slane %v447, 4
    %v453 = vadd.f32 %v157, %v451
    %v454 = vxor.u32 %v453, 2147483648
    %v455 = vmul.f32 %v454, 1.442695
    %v456 = vpow.pop %v455
    %v457 = vadd.f32 %v456, 1.0
    %v458 = vrcp.pop %v457
    %v459 = vmul.f32 1.0, %v458
    %v460 = vtanh.pop %v453
    %v462 = vrot.slane %v367, 6
    %v464 = vmul.f32 %v459, %v462
    %466 = vrot.lane.b32.xlu0 %v460, 64
    %v467 = vpop.permute.xlu0 %466
    %v469 = vmul.f32 %v459, %v467
    %471 = vrot.lane.b32.xlu0 %v469, 32
    %v472 = vpop.permute.xlu0 %471
    %v474 = vadd.f32 %v464, %v472
    %v475 = vtanh.pop %v474
    %477 = vrot.lane.b32.xlu0 %v475, 64
    %v478 = vpop.permute.xlu0 %477
    %v480 = vmul.f32 %v459, %v478
    %v482 = vrot.slane %v480, 4
    %483 = vrot.lane.b32.xlu0 %v482, 32
    %v484 = vpop.permute.xlu0 %483
    %v485 = vsel %vm169, %v484, 0
    %487 = vmatprep.subr.mxu0 0.0
    %488 = vmatpush1.msra.mxu0 0.0
    %489 = vmatprep.subr.mxu0 0.0
    %490 = vmatpush1.msra.mxu0 0.0
    %491 = vmatprep.subr.mxu0 0.0
    %492 = vmatpush1.msra.mxu0 0.0
    %493 = vmatprep.subr.mxu0 0.0
    %494 = vmatpush1.msra.mxu0 0.0
    %495 = vmatprep.subr.mxu0 0.0
    %496 = vmatpush1.msra.mxu0 0.0
    %497 = vmatprep.subr.mxu0 0.0
    %498 = vmatpush1.msra.mxu0 0.0
    %499 = vmatprep.subr.mxu0 0.0
    %500 = vmatpush1.msra.mxu0 0.0
    %501 = vmatprep.subr.mxu0 0.0
    %502 = vmatpush1.msra.mxu0 0.0
    %503 = vmatprep.subr.mxu0 0.0
    %504 = vmatpush1.msra.mxu0 0.0
    %505 = vmatprep.subr.mxu0 0.0
    %506 = vmatpush1.msra.mxu0 0.0
    %507 = vmatprep.subr.mxu0 0.0
    %508 = vmatpush1.msra.mxu0 0.0
    %509 = vmatprep.subr.mxu0 0.0
    %510 = vmatpush1.msra.mxu0 0.0
    %511 = vmatprep.subr.mxu0 0.0
    %512 = vmatpush1.msra.mxu0 %v168
    %513 = vmatprep.subr.mxu0 0.0
    %514 = vmatpush1.msra.mxu0 %v167
    %515 = vmatprep.subr.mxu0 0.0
    %516 = vmatpush1.msra.mxu0 %v166
    %517 = vmatprep.subr.mxu0 0.0
    %518 = vmatpush1.msra.mxu0 %v165
    %519 = vmatprep.subr.mxu0 0.0
    %520 = vmatpush2.msra.mxu0 0.0
    %521 = vmatprep.subr.mxu0 0.0
    %522 = vmatpush2.msra.mxu0 0.0
    %523 = vmatprep.subr.mxu0 0.0
    %524 = vmatpush2.msra.mxu0 0.0
    %525 = vmatprep.subr.mxu0 0.0
    %526 = vmatpush2.msra.mxu0 0.0
    %527 = vmatprep.subr.mxu0 0.0
    %528 = vmatpush2.msra.mxu0 0.0
    %529 = vmatprep.subr.mxu0 0.0
    %530 = vmatpush2.msra.mxu0 0.0
    %531 = vmatprep.subr.mxu0 0.0
    %532 = vmatpush2.msra.mxu0 0.0
    %533 = vmatprep.subr.mxu0 0.0
    %534 = vmatpush2.msra.mxu0 0.0
    %535 = vmatprep.subr.mxu0 0.0
    %536 = vmatpush2.msra.mxu0 0.0
    %537 = vmatprep.subr.mxu0 0.0
    %538 = vmatpush2.msra.mxu0 0.0
    %539 = vmatprep.subr.mxu0 0.0
    %540 = vmatpush2.msra.mxu0 0.0
    %541 = vmatprep.subr.mxu0 0.0
    %542 = vmatpush2.msra.mxu0 0.0
    %543 = vmatprep.subr.mxu0 0.0
    %544 = vmatpush2.msra.mxu0 0.0
    %545 = vmatprep.subr.mxu0 0.0
    %546 = vmatpush2.msra.mxu0 0.0
    %547 = vmatprep.subr.mxu0 0.0
    %548 = vmatpush2.msra.mxu0 0.0
    %549 = vmatprep.subr.mxu0 0.0
    %550 = vmatpush2.msra.mxu0 0.0
    %551 = vmatprep.mubr.f32.mxu0 0.0
    %552 = vmatmul.mubr.f32.gmra.mxu0 %v485
    %v553 = vpop.f32.mrf.mxu0
    %v554 = vadd.f32 0.0, %v553
    %v555 = vpop.f32.mrf.mxu0
    %556 = vdwg.mxu0
    %v558 = vrot.slane %v554, 2
    %v560 = vadd.f32 %v157, %v558
    %v561 = vxor.u32 %v560, 2147483648
    %v562 = vmul.f32 %v561, 1.442695
    %v563 = vpow.pop %v562
    %v564 = vadd.f32 %v563, 1.0
    %v565 = vrcp.pop %v564
    %v566 = vmul.f32 1.0, %v565
    %v567 = vtanh.pop %v560
    %v569 = vrot.slane %v474, 6
    %v571 = vmul.f32 %v566, %v569
    %573 = vrot.lane.b32.xlu0 %v567, 64
    %v574 = vpop.permute.xlu0 %573
    %v576 = vmul.f32 %v566, %v574
    %578 = vrot.lane.b32.xlu0 %v576, 32
    %v579 = vpop.permute.xlu0 %578
    %v581 = vadd.f32 %v571, %v579
    %v582 = vtanh.pop %v581
    %584 = vrot.lane.b32.xlu0 %v582, 64
    %v585 = vpop.permute.xlu0 %584
    %v587 = vmul.f32 %v566, %v585
    %v589 = vrot.slane %v587, 6
    %590 = vrot.lane.b32.xlu0 %v589, 32
    %v591 = vpop.permute.xlu0 %590
    %v592 = vsel %vm169, %v591, 0
    %594 = vmatprep.subr.mxu0 0.0
    %595 = vmatpush1.msra.mxu0 0.0
    %596 = vmatprep.subr.mxu0 0.0
    %597 = vmatpush1.msra.mxu0 0.0
    %598 = vmatprep.subr.mxu0 0.0
    %599 = vmatpush1.msra.mxu0 0.0
    %600 = vmatprep.subr.mxu0 0.0
    %601 = vmatpush1.msra.mxu0 0.0
    %602 = vmatprep.subr.mxu0 0.0
    %603 = vmatpush1.msra.mxu0 0.0
    %604 = vmatprep.subr.mxu0 0.0
    %605 = vmatpush1.msra.mxu0 0.0
    %606 = vmatprep.subr.mxu0 0.0
    %607 = vmatpush1.msra.mxu0 0.0
    %608 = vmatprep.subr.mxu0 0.0
    %609 = vmatpush1.msra.mxu0 0.0
    %610 = vmatprep.subr.mxu0 0.0
    %611 = vmatpush1.msra.mxu0 0.0
    %612 = vmatprep.subr.mxu0 0.0
    %613 = vmatpush1.msra.mxu0 0.0
    %614 = vmatprep.subr.mxu0 0.0
    %615 = vmatpush1.msra.mxu0 0.0
    %616 = vmatprep.subr.mxu0 0.0
    %617 = vmatpush1.msra.mxu0 0.0
    %618 = vmatprep.subr.mxu0 0.0
    %619 = vmatpush1.msra.mxu0 %v168
    %620 = vmatprep.subr.mxu0 0.0
    %621 = vmatpush1.msra.mxu0 %v167
    %622 = vmatprep.subr.mxu0 0.0
    %623 = vmatpush1.msra.mxu0 %v166
    %624 = vmatprep.subr.mxu0 0.0
    %625 = vmatpush1.msra.mxu0 %v165
    %626 = vmatprep.subr.mxu0 0.0
    %627 = vmatpush2.msra.mxu0 0.0
    %628 = vmatprep.subr.mxu0 0.0
    %629 = vmatpush2.msra.mxu0 0.0
    %630 = vmatprep.subr.mxu0 0.0
    %631 = vmatpush2.msra.mxu0 0.0
    %632 = vmatprep.subr.mxu0 0.0
    %633 = vmatpush2.msra.mxu0 0.0
    %634 = vmatprep.subr.mxu0 0.0
    %635 = vmatpush2.msra.mxu0 0.0
    %636 = vmatprep.subr.mxu0 0.0
    %637 = vmatpush2.msra.mxu0 0.0
    %638 = vmatprep.subr.mxu0 0.0
    %639 = vmatpush2.msra.mxu0 0.0
    %640 = vmatprep.subr.mxu0 0.0
    %641 = vmatpush2.msra.mxu0 0.0
    %642 = vmatprep.subr.mxu0 0.0
    %643 = vmatpush2.msra.mxu0 0.0
    %644 = vmatprep.subr.mxu0 0.0
    %645 = vmatpush2.msra.mxu0 0.0
    %646 = vmatprep.subr.mxu0 0.0
    %647 = vmatpush2.msra.mxu0 0.0
    %648 = vmatprep.subr.mxu0 0.0
    %649 = vmatpush2.msra.mxu0 0.0
    %650 = vmatprep.subr.mxu0 0.0
    %651 = vmatpush2.msra.mxu0 0.0
    %652 = vmatprep.subr.mxu0 0.0
    %653 = vmatpush2.msra.mxu0 0.0
    %654 = vmatprep.subr.mxu0 0.0
    %655 = vmatpush2.msra.mxu0 0.0
    %656 = vmatprep.subr.mxu0 0.0
    %657 = vmatpush2.msra.mxu0 0.0
    %658 = vmatprep.mubr.f32.mxu0 0.0
    %659 = vmatmul.mubr.f32.gmra.mxu0 %v592
    %v660 = vpop.f32.mrf.mxu0
    %v661 = vadd.f32 0.0, %v660
    %v662 = vpop.f32.mrf.mxu0
    %663 = vdwg.mxu0
    %v664 = vadd.f32 %v162, %v661
    %v665 = vxor.u32 %v664, 2147483648
    %v666 = vmul.f32 %v665, 1.442695
    %v667 = vpow.pop %v666
    %v668 = vadd.f32 %v667, 1.0
    %v669 = vrcp.pop %v668
    %v670 = vmul.f32 1.0, %v669
    %v671 = vtanh.pop %v664
    %v673 = vrot.slane %v581, 6
    %v675 = vmul.f32 %v670, %v673
    %677 = vrot.lane.b32.xlu0 %v671, 64
    %v678 = vpop.permute.xlu0 %677
    %v680 = vmul.f32 %v670, %v678
    %682 = vrot.lane.b32.xlu0 %v680, 32
    %v683 = vpop.permute.xlu0 %682
    %v685 = vadd.f32 %v675, %v683
    %v686 = vtanh.pop %v685
    %688 = vrot.lane.b32.xlu0 %v686, 64
    %v689 = vpop.permute.xlu0 %688
    %v691 = vmul.f32 %v670, %v689
    %693 = vrot.lane.b32.xlu0 %v691, 32
    %v694 = vpop.permute.xlu0 %693
    %v695 = vsel %vm169, %v694, 0
    %697 = vmatprep.subr.mxu0 0.0
    %698 = vmatpush1.msra.mxu0 0.0
    %699 = vmatprep.subr.mxu0 0.0
    %700 = vmatpush1.msra.mxu0 0.0
    %701 = vmatprep.subr.mxu0 0.0
    %702 = vmatpush1.msra.mxu0 0.0
    %703 = vmatprep.subr.mxu0 0.0
    %704 = vmatpush1.msra.mxu0 0.0
    %705 = vmatprep.subr.mxu0 0.0
    %706 = vmatpush1.msra.mxu0 0.0
    %707 = vmatprep.subr.mxu0 0.0
    %708 = vmatpush1.msra.mxu0 0.0
    %709 = vmatprep.subr.mxu0 0.0
    %710 = vmatpush1.msra.mxu0 0.0
    %711 = vmatprep.subr.mxu0 0.0
    %712 = vmatpush1.msra.mxu0 0.0
    %713 = vmatprep.subr.mxu0 0.0
    %714 = vmatpush1.msra.mxu0 0.0
    %715 = vmatprep.subr.mxu0 0.0
    %716 = vmatpush1.msra.mxu0 0.0
    %717 = vmatprep.subr.mxu0 0.0
    %718 = vmatpush1.msra.mxu0 0.0
    %719 = vmatprep.subr.mxu0 0.0
    %720 = vmatpush1.msra.mxu0 0.0
    %721 = vmatprep.subr.mxu0 0.0
    %722 = vmatpush1.msra.mxu0 %v168
    %723 = vmatprep.subr.mxu0 0.0
    %724 = vmatpush1.msra.mxu0 %v167
    %725 = vmatprep.subr.mxu0 0.0
    %726 = vmatpush1.msra.mxu0 %v166
    %727 = vmatprep.subr.mxu0 0.0
    %728 = vmatpush1.msra.mxu0 %v165
    %729 = vmatprep.subr.mxu0 0.0
    %730 = vmatpush2.msra.mxu0 0.0
    %731 = vmatprep.subr.mxu0 0.0
    %732 = vmatpush2.msra.mxu0 0.0
    %733 = vmatprep.subr.mxu0 0.0
    %734 = vmatpush2.msra.mxu0 0.0
    %735 = vmatprep.subr.mxu0 0.0
    %736 = vmatpush2.msra.mxu0 0.0
    %737 = vmatprep.subr.mxu0 0.0
    %738 = vmatpush2.msra.mxu0 0.0
    %739 = vmatprep.subr.mxu0 0.0
    %740 = vmatpush2.msra.mxu0 0.0
    %741 = vmatprep.subr.mxu0 0.0
    %742 = vmatpush2.msra.mxu0 0.0
    %743 = vmatprep.subr.mxu0 0.0
    %744 = vmatpush2.msra.mxu0 0.0
    %745 = vmatprep.subr.mxu0 0.0
    %746 = vmatpush2.msra.mxu0 0.0
    %747 = vmatprep.subr.mxu0 0.0
    %748 = vmatpush2.msra.mxu0 0.0
    %749 = vmatprep.subr.mxu0 0.0
    %750 = vmatpush2.msra.mxu0 0.0
    %751 = vmatprep.subr.mxu0 0.0
    %752 = vmatpush2.msra.mxu0 0.0
    %753 = vmatprep.subr.mxu0 0.0
    %754 = vmatpush2.msra.mxu0 0.0
    %755 = vmatprep.subr.mxu0 0.0
    %756 = vmatpush2.msra.mxu0 0.0
    %757 = vmatprep.subr.mxu0 0.0
    %758 = vmatpush2.msra.mxu0 0.0
    %759 = vmatprep.subr.mxu0 0.0
    %760 = vmatpush2.msra.mxu0 0.0
    %761 = vmatprep.mubr.f32.mxu0 0.0
    %762 = vmatmul.mubr.f32.gmra.mxu0 %v695
    %v763 = vpop.f32.mrf.mxu0
    %v764 = vadd.f32 0.0, %v763
    %v765 = vpop.f32.mrf.mxu0
    %766 = vdwg.mxu0
    %v768 = vrot.slane %v764, 6
    %v770 = vadd.f32 %v162, %v768
    %v771 = vxor.u32 %v770, 2147483648
    %v772 = vmul.f32 %v771, 1.442695
    %v773 = vpow.pop %v772
    %v774 = vadd.f32 %v773, 1.0
    %v775 = vrcp.pop %v774
    %v776 = vmul.f32 1.0, %v775
    %v777 = vtanh.pop %v770
    %v779 = vrot.slane %v685, 6
    %v781 = vmul.f32 %v776, %v779
    %783 = vrot.lane.b32.xlu0 %v777, 64
    %v784 = vpop.permute.xlu0 %783
    %v786 = vmul.f32 %v776, %v784
    %788 = vrot.lane.b32.xlu0 %v786, 32
    %v789 = vpop.permute.xlu0 %788
    %v791 = vadd.f32 %v781, %v789
    %v792 = vtanh.pop %v791
    %794 = vrot.lane.b32.xlu0 %v792, 64
    %v795 = vpop.permute.xlu0 %794
    %v797 = vmul.f32 %v776, %v795
    %v799 = vrot.slane %v797, 2
    %800 = vrot.lane.b32.xlu0 %v799, 32
    %v801 = vpop.permute.xlu0 %800
    %v802 = vsel %vm169, %v801, 0
    %804 = vmatprep.subr.mxu0 0.0
    %805 = vmatpush1.msra.mxu0 0.0
    %806 = vmatprep.subr.mxu0 0.0
    %807 = vmatpush1.msra.mxu0 0.0
    %808 = vmatprep.subr.mxu0 0.0
    %809 = vmatpush1.msra.mxu0 0.0
    %810 = vmatprep.subr.mxu0 0.0
    %811 = vmatpush1.msra.mxu0 0.0
    %812 = vmatprep.subr.mxu0 0.0
    %813 = vmatpush1.msra.mxu0 0.0
    %814 = vmatprep.subr.mxu0 0.0
    %815 = vmatpush1.msra.mxu0 0.0
    %816 = vmatprep.subr.mxu0 0.0
    %817 = vmatpush1.msra.mxu0 0.0
    %818 = vmatprep.subr.mxu0 0.0
    %819 = vmatpush1.msra.mxu0 0.0
    %820 = vmatprep.subr.mxu0 0.0
    %821 = vmatpush1.msra.mxu0 0.0
    %822 = vmatprep.subr.mxu0 0.0
    %823 = vmatpush1.msra.mxu0 0.0
    %824 = vmatprep.subr.mxu0 0.0
    %825 = vmatpush1.msra.mxu0 0.0
    %826 = vmatprep.subr.mxu0 0.0
    %827 = vmatpush1.msra.mxu0 0.0
    %828 = vmatprep.subr.mxu0 0.0
    %829 = vmatpush1.msra.mxu0 %v168
    %830 = vmatprep.subr.mxu0 0.0
    %831 = vmatpush1.msra.mxu0 %v167
    %832 = vmatprep.subr.mxu0 0.0
    %833 = vmatpush1.msra.mxu0 %v166
    %834 = vmatprep.subr.mxu0 0.0
    %835 = vmatpush1.msra.mxu0 %v165
    %836 = vmatprep.subr.mxu0 0.0
    %837 = vmatpush2.msra.mxu0 0.0
    %838 = vmatprep.subr.mxu0 0.0
    %839 = vmatpush2.msra.mxu0 0.0
    %840 = vmatprep.subr.mxu0 0.0
    %841 = vmatpush2.msra.mxu0 0.0
    %842 = vmatprep.subr.mxu0 0.0
    %843 = vmatpush2.msra.mxu0 0.0
    %844 = vmatprep.subr.mxu0 0.0
    %845 = vmatpush2.msra.mxu0 0.0
    %846 = vmatprep.subr.mxu0 0.0
    %847 = vmatpush2.msra.mxu0 0.0
    %848 = vmatprep.subr.mxu0 0.0
    %849 = vmatpush2.msra.mxu0 0.0
    %850 = vmatprep.subr.mxu0 0.0
    %851 = vmatpush2.msra.mxu0 0.0
    %852 = vmatprep.subr.mxu0 0.0
    %853 = vmatpush2.msra.mxu0 0.0
    %854 = vmatprep.subr.mxu0 0.0
    %855 = vmatpush2.msra.mxu0 0.0
    %856 = vmatprep.subr.mxu0 0.0
    %857 = vmatpush2.msra.mxu0 0.0
    %858 = vmatprep.subr.mxu0 0.0
    %859 = vmatpush2.msra.mxu0 0.0
    %860 = vmatprep.subr.mxu0 0.0
    %861 = vmatpush2.msra.mxu0 0.0
    %862 = vmatprep.subr.mxu0 0.0
    %863 = vmatpush2.msra.mxu0 0.0
    %864 = vmatprep.subr.mxu0 0.0
    %865 = vmatpush2.msra.mxu0 0.0
    %866 = vmatprep.subr.mxu0 0.0
    %867 = vmatpush2.msra.mxu0 0.0
    %868 = vmatprep.mubr.f32.mxu0 0.0
    %869 = vmatmul.mubr.f32.gmra.mxu0 %v802
    %v870 = vpop.f32.mrf.mxu0
    %v871 = vadd.f32 0.0, %v870
    %v872 = vpop.f32.mrf.mxu0
    %873 = vdwg.mxu0
    %v875 = vrot.slane %v871, 4
    %v877 = vadd.f32 %v162, %v875
    %v878 = vxor.u32 %v877, 2147483648
    %v879 = vmul.f32 %v878, 1.442695
    %v880 = vpow.pop %v879
    %v881 = vadd.f32 %v880, 1.0
    %v882 = vrcp.pop %v881
    %v883 = vmul.f32 1.0, %v882
    %v884 = vtanh.pop %v877
    %v886 = vrot.slane %v791, 6
    %v888 = vmul.f32 %v883, %v886
    %890 = vrot.lane.b32.xlu0 %v884, 64
    %v891 = vpop.permute.xlu0 %890
    %v893 = vmul.f32 %v883, %v891
    %895 = vrot.lane.b32.xlu0 %v893, 32
    %v896 = vpop.permute.xlu0 %895
    %v898 = vadd.f32 %v888, %v896
    %v899 = vtanh.pop %v898
    %901 = vrot.lane.b32.xlu0 %v899, 64
    %v902 = vpop.permute.xlu0 %901
    %v904 = vmul.f32 %v883, %v902
    %v906 = vrot.slane %v904, 4
    %907 = vrot.lane.b32.xlu0 %v906, 32
    %v908 = vpop.permute.xlu0 %907
    %v909 = vsel %vm169, %v908, 0
    %911 = vmatprep.subr.mxu0 0.0
    %912 = vmatpush1.msra.mxu0 0.0
    %913 = vmatprep.subr.mxu0 0.0
    %914 = vmatpush1.msra.mxu0 0.0
    %915 = vmatprep.subr.mxu0 0.0
    %916 = vmatpush1.msra.mxu0 0.0
    %917 = vmatprep.subr.mxu0 0.0
    %918 = vmatpush1.msra.mxu0 0.0
    %919 = vmatprep.subr.mxu0 0.0
    %920 = vmatpush1.msra.mxu0 0.0
    %921 = vmatprep.subr.mxu0 0.0
    %922 = vmatpush1.msra.mxu0 0.0
    %923 = vmatprep.subr.mxu0 0.0
    %924 = vmatpush1.msra.mxu0 0.0
    %925 = vmatprep.subr.mxu0 0.0
    %926 = vmatpush1.msra.mxu0 0.0
    %927 = vmatprep.subr.mxu0 0.0
    %928 = vmatpush1.msra.mxu0 0.0
    %929 = vmatprep.subr.mxu0 0.0
    %930 = vmatpush1.msra.mxu0 0.0
    %931 = vmatprep.subr.mxu0 0.0
    %932 = vmatpush1.msra.mxu0 0.0
    %933 = vmatprep.subr.mxu0 0.0
    %934 = vmatpush1.msra.mxu0 0.0
    %935 = vmatprep.subr.mxu0 0.0
    %936 = vmatpush1.msra.mxu0 %v168
    %937 = vmatprep.subr.mxu0 0.0
    %938 = vmatpush1.msra.mxu0 %v167
    %939 = vmatprep.subr.mxu0 0.0
    %940 = vmatpush1.msra.mxu0 %v166
    %941 = vmatprep.subr.mxu0 0.0
    %942 = vmatpush1.msra.mxu0 %v165
    %943 = vmatprep.subr.mxu0 0.0
    %944 = vmatpush2.msra.mxu0 0.0
    %945 = vmatprep.subr.mxu0 0.0
    %946 = vmatpush2.msra.mxu0 0.0
    %947 = vmatprep.subr.mxu0 0.0
    %948 = vmatpush2.msra.mxu0 0.0
    %949 = vmatprep.subr.mxu0 0.0
    %950 = vmatpush2.msra.mxu0 0.0
    %951 = vmatprep.subr.mxu0 0.0
    %952 = vmatpush2.msra.mxu0 0.0
    %953 = vmatprep.subr.mxu0 0.0
    %954 = vmatpush2.msra.mxu0 0.0
    %955 = vmatprep.subr.mxu0 0.0
    %956 = vmatpush2.msra.mxu0 0.0
    %957 = vmatprep.subr.mxu0 0.0
    %958 = vmatpush2.msra.mxu0 0.0
    %959 = vmatprep.subr.mxu0 0.0
    %960 = vmatpush2.msra.mxu0 0.0
    %961 = vmatprep.subr.mxu0 0.0
    %962 = vmatpush2.msra.mxu0 0.0
    %963 = vmatprep.subr.mxu0 0.0
    %964 = vmatpush2.msra.mxu0 0.0
    %965 = vmatprep.subr.mxu0 0.0
    %966 = vmatpush2.msra.mxu0 0.0
    %967 = vmatprep.subr.mxu0 0.0
    %968 = vmatpush2.msra.mxu0 0.0
    %969 = vmatprep.subr.mxu0 0.0
    %970 = vmatpush2.msra.mxu0 0.0
    %971 = vmatprep.subr.mxu0 0.0
    %972 = vmatpush2.msra.mxu0 0.0
    %973 = vmatprep.subr.mxu0 0.0
    %974 = vmatpush2.msra.mxu0 0.0
    %975 = vmatprep.mubr.f32.mxu0 0.0
    %976 = vmatmul.mubr.f32.gmra.mxu0 %v909
    %v977 = vpop.f32.mrf.mxu0
    %v978 = vadd.f32 0.0, %v977
    %v979 = vpop.f32.mrf.mxu0
    %980 = vdwg.mxu0
    %v982 = vrot.slane %v978, 2
    %v984 = vadd.f32 %v162, %v982
    %v985 = vxor.u32 %v984, 2147483648
    %v986 = vmul.f32 %v985, 1.442695
    %v987 = vpow.pop %v986
    %v988 = vadd.f32 %v987, 1.0
    %v989 = vrcp.pop %v988
    %v990 = vmul.f32 1.0, %v989
    %v991 = vtanh.pop %v984
    %v993 = vrot.slane %v898, 6
    %v995 = vmul.f32 %v990, %v993
    %997 = vrot.lane.b32.xlu0 %v991, 64
    %v998 = vpop.permute.xlu0 %997
    %v1000 = vmul.f32 %v990, %v998
    %1002 = vrot.lane.b32.xlu0 %v1000, 32
    %v1003 = vpop.permute.xlu0 %1002
    %v1005 = vadd.f32 %v995, %v1003
    %v1006 = vtanh.pop %v1005
    %1008 = vrot.lane.b32.xlu0 %v1006, 64
    %v1009 = vpop.permute.xlu0 %1008
    %v1011 = vmul.f32 %v990, %v1009
    %v1012 = vld [vmem:[%s4] sm:$0xff]
    %v1013 = vld [vmem:[%s4 + $0x8] sm:$0xff]
    %v1014 = vld [vmem:[%s4 + $0x10] sm:$0xff]
    %v1015 = vld [vmem:[%s4 + $0x18] sm:$0xff]
    %v1016 = vld [vmem:[%s5] sm:$0x1]
    %v1018 = vlaneseq
    %v1019 = vshrl.u32 %v1018, 7
    %v1020 = vsub.s32 0, %v1019
    %v1021 = vrot.slane %v1016, %v1020
    %v1024 = vrot.slane %v1011, 6
    %1025 = vrot.lane.b32.xlu0 %v1024, 32
    %v1026 = vpop.permute.xlu0 %1025
    %v1027 = vsel %vm169, %v1026, 0
    %1029 = vmatprep.subr.mxu0 0.0
    %1030 = vmatpush1.msra.mxu0 0.0
    %1031 = vmatprep.subr.mxu0 0.0
    %1032 = vmatpush1.msra.mxu0 0.0
    %1033 = vmatprep.subr.mxu0 0.0
    %1034 = vmatpush1.msra.mxu0 0.0
    %1035 = vmatprep.subr.mxu0 0.0
    %1036 = vmatpush1.msra.mxu0 0.0
    %1037 = vmatprep.subr.mxu0 0.0
    %1038 = vmatpush1.msra.mxu0 0.0
    %1039 = vmatprep.subr.mxu0 0.0
    %1040 = vmatpush1.msra.mxu0 0.0
    %1041 = vmatprep.subr.mxu0 0.0
    %1042 = vmatpush1.msra.mxu0 0.0
    %1043 = vmatprep.subr.mxu0 0.0
    %1044 = vmatpush1.msra.mxu0 0.0
    %1045 = vmatprep.subr.mxu0 0.0
    %1046 = vmatpush1.msra.mxu0 0.0
    %1047 = vmatprep.subr.mxu0 0.0
    %1048 = vmatpush1.msra.mxu0 0.0
    %1049 = vmatprep.subr.mxu0 0.0
    %1050 = vmatpush1.msra.mxu0 0.0
    %1051 = vmatprep.subr.mxu0 0.0
    %1052 = vmatpush1.msra.mxu0 0.0
    %1053 = vmatprep.subr.mxu0 0.0
    %1054 = vmatpush1.msra.mxu0 %v1015
    %1055 = vmatprep.subr.mxu0 0.0
    %1056 = vmatpush1.msra.mxu0 %v1014
    %1057 = vmatprep.subr.mxu0 0.0
    %1058 = vmatpush1.msra.mxu0 %v1013
    %1059 = vmatprep.subr.mxu0 0.0
    %1060 = vmatpush1.msra.mxu0 %v1012
    %1061 = vmatprep.subr.mxu0 0.0
    %1062 = vmatpush2.msra.mxu0 0.0
    %1063 = vmatprep.subr.mxu0 0.0
    %1064 = vmatpush2.msra.mxu0 0.0
    %1065 = vmatprep.subr.mxu0 0.0
    %1066 = vmatpush2.msra.mxu0 0.0
    %1067 = vmatprep.subr.mxu0 0.0
    %1068 = vmatpush2.msra.mxu0 0.0
    %1069 = vmatprep.subr.mxu0 0.0
    %1070 = vmatpush2.msra.mxu0 0.0
    %1071 = vmatprep.subr.mxu0 0.0
    %1072 = vmatpush2.msra.mxu0 0.0
    %1073 = vmatprep.subr.mxu0 0.0
    %1074 = vmatpush2.msra.mxu0 0.0
    %1075 = vmatprep.subr.mxu0 0.0
    %1076 = vmatpush2.msra.mxu0 0.0
    %1077 = vmatprep.subr.mxu0 0.0
    %1078 = vmatpush2.msra.mxu0 0.0
    %1079 = vmatprep.subr.mxu0 0.0
    %1080 = vmatpush2.msra.mxu0 0.0
    %1081 = vmatprep.subr.mxu0 0.0
    %1082 = vmatpush2.msra.mxu0 0.0
    %1083 = vmatprep.subr.mxu0 0.0
    %1084 = vmatpush2.msra.mxu0 0.0
    %1085 = vmatprep.subr.mxu0 0.0
    %1086 = vmatpush2.msra.mxu0 0.0
    %1087 = vmatprep.subr.mxu0 0.0
    %1088 = vmatpush2.msra.mxu0 0.0
    %1089 = vmatprep.subr.mxu0 0.0
    %1090 = vmatpush2.msra.mxu0 0.0
    %1091 = vmatprep.subr.mxu0 0.0
    %1092 = vmatpush2.msra.mxu0 0.0
    %1093 = vmatprep.mubr.f32.mxu0 0.0
    %1094 = vmatmul.mubr.f32.gmra.mxu0 %v1027
    %v1095 = vpop.f32.mrf.mxu0
    %v1096 = vadd.f32 %v1021, %v1095
    %v1097 = vpop.f32.mrf.mxu0
    %1098 = vdwg.mxu0
    %v1099 = vmax.f32 %v1096, 0.0
    %v1100 = vld [vmem:[%s6] sm:$0xff]
    %v1101 = vld [vmem:[%s6 + $0x8] sm:$0xff]
    %v1102 = vld [vmem:[%s6 + $0x10] sm:$0xff]
    %v1103 = vld [vmem:[%s7] sm:$0x1]
    %v1105 = vlaneseq
    %v1106 = vshrl.u32 %v1105, 7
    %v1107 = vsub.s32 0, %v1106
    %v1108 = vrot.slane %v1103, %v1107
    %vm1110 = vcmask 195584
    %v1112 = vsel %vm1110, %v1099, 0
    %1114 = vmatprep.subr.mxu0 0.0
    %1115 = vmatpush1.msra.mxu0 0.0
    %1116 = vmatprep.subr.mxu0 0.0
    %1117 = vmatpush1.msra.mxu0 0.0
    %1118 = vmatprep.subr.mxu0 0.0
    %1119 = vmatpush1.msra.mxu0 0.0
    %1120 = vmatprep.subr.mxu0 0.0
    %1121 = vmatpush1.msra.mxu0 0.0
    %1122 = vmatprep.subr.mxu0 0.0
    %1123 = vmatpush1.msra.mxu0 0.0
    %1124 = vmatprep.subr.mxu0 0.0
    %1125 = vmatpush1.msra.mxu0 0.0
    %1126 = vmatprep.subr.mxu0 0.0
    %1127 = vmatpush1.msra.mxu0 0.0
    %1128 = vmatprep.subr.mxu0 0.0
    %1129 = vmatpush1.msra.mxu0 0.0
    %1130 = vmatprep.subr.mxu0 0.0
    %1131 = vmatpush1.msra.mxu0 0.0
    %1132 = vmatprep.subr.mxu0 0.0
    %1133 = vmatpush1.msra.mxu0 0.0
    %1134 = vmatprep.subr.mxu0 0.0
    %1135 = vmatpush1.msra.mxu0 0.0
    %1136 = vmatprep.subr.mxu0 0.0
    %1137 = vmatpush1.msra.mxu0 0.0
    %1138 = vmatprep.subr.mxu0 0.0
    %1139 = vmatpush1.msra.mxu0 0.0
    %1140 = vmatprep.subr.mxu0 0.0
    %1141 = vmatpush1.msra.mxu0 %v1102
    %1142 = vmatprep.subr.mxu0 0.0
    %1143 = vmatpush1.msra.mxu0 %v1101
    %1144 = vmatprep.subr.mxu0 0.0
    %1145 = vmatpush1.msra.mxu0 %v1100
    %1146 = vmatprep.subr.mxu0 0.0
    %1147 = vmatpush2.msra.mxu0 0.0
    %1148 = vmatprep.subr.mxu0 0.0
    %1149 = vmatpush2.msra.mxu0 0.0
    %1150 = vmatprep.subr.mxu0 0.0
    %1151 = vmatpush2.msra.mxu0 0.0
    %1152 = vmatprep.subr.mxu0 0.0
    %1153 = vmatpush2.msra.mxu0 0.0
    %1154 = vmatprep.subr.mxu0 0.0
    %1155 = vmatpush2.msra.mxu0 0.0
    %1156 = vmatprep.subr.mxu0 0.0
    %1157 = vmatpush2.msra.mxu0 0.0
    %1158 = vmatprep.subr.mxu0 0.0
    %1159 = vmatpush2.msra.mxu0 0.0
    %1160 = vmatprep.subr.mxu0 0.0
    %1161 = vmatpush2.msra.mxu0 0.0
    %1162 = vmatprep.subr.mxu0 0.0
    %1163 = vmatpush2.msra.mxu0 0.0
    %1164 = vmatprep.subr.mxu0 0.0
    %1165 = vmatpush2.msra.mxu0 0.0
    %1166 = vmatprep.subr.mxu0 0.0
    %1167 = vmatpush2.msra.mxu0 0.0
    %1168 = vmatprep.subr.mxu0 0.0
    %1169 = vmatpush2.msra.mxu0 0.0
    %1170 = vmatprep.subr.mxu0 0.0
    %1171 = vmatpush2.msra.mxu0 0.0
    %1172 = vmatprep.subr.mxu0 0.0
    %1173 = vmatpush2.msra.mxu0 0.0
    %1174 = vmatprep.subr.mxu0 0.0
    %1175 = vmatpush2.msra.mxu0 0.0
    %1176 = vmatprep.subr.mxu0 0.0
    %1177 = vmatpush2.msra.mxu0 0.0
    %1178 = vmatprep.mubr.f32.mxu0 0.0
    %1179 = vmatmul.mubr.f32.gmra.mxu0 %v1112
    %v1180 = vpop.f32.mrf.mxu0
    %v1181 = vadd.f32 %v1108, %v1180
    %v1182 = vpop.f32.mrf.mxu0
    %1183 = vdwg.mxu0
    %v1184 = vld [vmem:[%s8] sm:$0xff]
    %v1185 = vld [vmem:[%s8 + $0x8] sm:$0xff]
    %v1186 = vld [vmem:[%s8 + $0x10] sm:$0xff]
    %v1187 = vld [vmem:[%s8 + $0x18] sm:$0xff]
    %v1188 = vld [vmem:[%s8 + $0x20] sm:$0xff]
    %v1189 = vld [vmem:[%s8 + $0x28] sm:$0xff]
    %v1190 = vld [vmem:[%s8 + $0x30] sm:$0xff]
    %v1191 = vld [vmem:[%s8 + $0x38] sm:$0xff]
    %v1192 = vld [vmem:[%s8 + $0x40] sm:$0xff]
    %v1193 = vld [vmem:[%s8 + $0x48] sm:$0xff]
    %v1194 = vld [vmem:[%s8 + $0x50] sm:$0xff]
    %v1195 = vld [vmem:[%s8 + $0x58] sm:$0xff]
    %v1196 = vld [vmem:[%s8 + $0x60] sm:$0x3]
    %v1197 = vld [vmem:[%s9] sm:$0xff]
    %v1198 = vld [vmem:[%s9 + $0x8] sm:$0xff]
    %v1199 = vld [vmem:[%s9 + $0x10] sm:$0xff]
    %v1200 = vld [vmem:[%s9 + $0x18] sm:$0xff]
    %v1201 = vld [vmem:[%s9 + $0x20] sm:$0xf]
    %v1202 = vld [vmem:[%s10] sm:$0x1]
    %v1204 = vlaneseq
    %v1205 = vshrl.u32 %v1204, 7
    %v1206 = vsub.s32 0, %v1205
    %v1207 = vrot.slane %v1202, %v1206
    %vm1209 = vcmask 293888
    %v1211 = vsel %vm1209, %v1184, 0
    %v1214 = vsel %vm1209, %v1185, 0
    %v1217 = vsel %vm1209, %v1186, 0
    %v1220 = vsel %vm1209, %v1187, 0
    %v1223 = vsel %vm1209, %v1188, 0
    %v1226 = vsel %vm1209, %v1189, 0
    %v1229 = vsel %vm1209, %v1190, 0
    %v1232 = vsel %vm1209, %v1191, 0
    %v1235 = vsel %vm1209, %v1192, 0
    %v1238 = vsel %vm1209, %v1193, 0
    %v1241 = vsel %vm1209, %v1194, 0
    %v1244 = vsel %vm1209, %v1195, 0
    %v1247 = vsel %vm1209, %v1196, 0
    %vm1249 = vcmask 1043456
    %v1251 = vsel %vm1249, %v1201, 0
    %1253 = vmatprep.subr.mxu0 0.0
    %1254 = vmatpush1.msra.mxu0 0.0
    %1255 = vmatprep.subr.mxu0 0.0
    %1256 = vmatpush1.msra.mxu0 0.0
    %1257 = vmatprep.subr.mxu0 0.0
    %1258 = vmatpush1.msra.mxu0 0.0
    %1259 = vmatprep.subr.mxu0 0.0
    %1260 = vmatpush1.msra.mxu0 0.0
    %1261 = vmatprep.subr.mxu0 0.0
    %1262 = vmatpush1.msra.mxu0 0.0
    %1263 = vmatprep.subr.mxu0 0.0
    %1264 = vmatpush1.msra.mxu0 0.0
    %1265 = vmatprep.subr.mxu0 0.0
    %1266 = vmatpush1.msra.mxu0 0.0
    %1267 = vmatprep.subr.mxu0 0.0
    %1268 = vmatpush1.msra.mxu0 0.0
    %1269 = vmatprep.subr.mxu0 0.0
    %1270 = vmatpush1.msra.mxu0 0.0
    %1271 = vmatprep.subr.mxu0 0.0
    %1272 = vmatpush1.msra.mxu0 0.0
    %1273 = vmatprep.subr.mxu0 0.0
    %1274 = vmatpush1.msra.mxu0 0.0
    %1275 = vmatprep.subr.mxu0 0.0
    %1276 = vmatpush1.msra.mxu0 %v1251
    %1277 = vmatprep.subr.mxu0 0.0
    %1278 = vmatpush1.msra.mxu0 %v1200
    %1279 = vmatprep.subr.mxu0 0.0
    %1280 = vmatpush1.msra.mxu0 %v1199
    %1281 = vmatprep.subr.mxu0 0.0
    %1282 = vmatpush1.msra.mxu0 %v1198
    %1283 = vmatprep.subr.mxu0 0.0
    %1284 = vmatpush1.msra.mxu0 %v1197
    %1285 = vmatprep.subr.mxu0 0.0
    %1286 = vmatpush2.msra.mxu0 0.0
    %1287 = vmatprep.subr.mxu0 0.0
    %1288 = vmatpush2.msra.mxu0 0.0
    %1289 = vmatprep.subr.mxu0 0.0
    %1290 = vmatpush2.msra.mxu0 0.0
    %1291 = vmatprep.subr.mxu0 0.0
    %1292 = vmatpush2.msra.mxu0 0.0
    %1293 = vmatprep.subr.mxu0 0.0
    %1294 = vmatpush2.msra.mxu0 0.0
    %1295 = vmatprep.subr.mxu0 0.0
    %1296 = vmatpush2.msra.mxu0 0.0
    %1297 = vmatprep.subr.mxu0 0.0
    %1298 = vmatpush2.msra.mxu0 0.0
    %1299 = vmatprep.subr.mxu0 0.0
    %1300 = vmatpush2.msra.mxu0 0.0
    %1301 = vmatprep.subr.mxu0 0.0
    %1302 = vmatpush2.msra.mxu0 0.0
    %1303 = vmatprep.subr.mxu0 0.0
    %1304 = vmatpush2.msra.mxu0 0.0
    %1305 = vmatprep.subr.mxu0 0.0
    %1306 = vmatpush2.msra.mxu0 0.0
    %1307 = vmatprep.subr.mxu0 0.0
    %1308 = vmatpush2.msra.mxu0 0.0
    %1309 = vmatprep.subr.mxu0 0.0
    %1310 = vmatpush2.msra.mxu0 0.0
    %1311 = vmatprep.subr.mxu0 0.0
    %1312 = vmatpush2.msra.mxu0 0.0
    %1313 = vmatprep.subr.mxu0 0.0
    %1314 = vmatpush2.msra.mxu0 0.0
    %1315 = vmatprep.subr.mxu0 0.0
    %1316 = vmatpush2.msra.mxu0 0.0
    %1317 = vmatprep.mubr.f32.mxu0 0.0
    %1318 = vmatmul.mubr.f32.gmra.mxu0 %v1211
    %v1319 = vpop.f32.mrf.mxu0
    %v1320 = vadd.f32 %v1207, %v1319
    %v1321 = vpop.f32.mrf.mxu0
    %1322 = vmatprep.mubr.f32.mxu0 0.0
    %1323 = vmatmul.mubr.f32.gmra.mxu0 %v1214
    %v1324 = vpop.f32.mrf.mxu0
    %v1325 = vadd.f32 %v1207, %v1324
    %v1326 = vpop.f32.mrf.mxu0
    %1327 = vmatprep.mubr.f32.mxu0 0.0
    %1328 = vmatmul.mubr.f32.gmra.mxu0 %v1217
    %v1329 = vpop.f32.mrf.mxu0
    %v1330 = vadd.f32 %v1207, %v1329
    %v1331 = vpop.f32.mrf.mxu0
    %1332 = vmatprep.mubr.f32.mxu0 0.0
    %1333 = vmatmul.mubr.f32.gmra.mxu0 %v1220
    %v1334 = vpop.f32.mrf.mxu0
    %v1335 = vadd.f32 %v1207, %v1334
    %v1336 = vpop.f32.mrf.mxu0
    %1337 = vmatprep.mubr.f32.mxu0 0.0
    %1338 = vmatmul.mubr.f32.gmra.mxu0 %v1223
    %v1339 = vpop.f32.mrf.mxu0
    %v1340 = vadd.f32 %v1207, %v1339
    %v1341 = vpop.f32.mrf.mxu0
    %1342 = vmatprep.mubr.f32.mxu0 0.0
    %1343 = vmatmul.mubr.f32.gmra.mxu0 %v1226
    %v1344 = vpop.f32.mrf.mxu0
    %v1345 = vadd.f32 %v1207, %v1344
    %v1346 = vpop.f32.mrf.mxu0
    %1347 = vmatprep.mubr.f32.mxu0 0.0
    %1348 = vmatmul.mubr.f32.gmra.mxu0 %v1229
    %v1349 = vpop.f32.mrf.mxu0
    %v1350 = vadd.f32 %v1207, %v1349
    %v1351 = vpop.f32.mrf.mxu0
    %1352 = vmatprep.mubr.f32.mxu0 0.0
    %1353 = vmatmul.mubr.f32.gmra.mxu0 %v1232
    %v1354 = vpop.f32.mrf.mxu0
    %v1355 = vadd.f32 %v1207, %v1354
    %v1356 = vpop.f32.mrf.mxu0
    %1357 = vmatprep.mubr.f32.mxu0 0.0
    %1358 = vmatmul.mubr.f32.gmra.mxu0 %v1235
    %v1359 = vpop.f32.mrf.mxu0
    %v1360 = vadd.f32 %v1207, %v1359
    %v1361 = vpop.f32.mrf.mxu0
    %1362 = vmatprep.mubr.f32.mxu0 0.0
    %1363 = vmatmul.mubr.f32.gmra.mxu0 %v1238
    %v1364 = vpop.f32.mrf.mxu0
    %v1365 = vadd.f32 %v1207, %v1364
    %v1366 = vpop.f32.mrf.mxu0
    %1367 = vmatprep.mubr.f32.mxu0 0.0
    %1368 = vmatmul.mubr.f32.gmra.mxu0 %v1241
    %v1369 = vpop.f32.mrf.mxu0
    %v1370 = vadd.f32 %v1207, %v1369
    %v1371 = vpop.f32.mrf.mxu0
    %1372 = vmatprep.mubr.f32.mxu0 0.0
    %1373 = vmatmul.mubr.f32.gmra.mxu0 %v1244
    %v1374 = vpop.f32.mrf.mxu0
    %v1375 = vadd.f32 %v1207, %v1374
    %v1376 = vpop.f32.mrf.mxu0
    %1377 = vmatprep.mubr.f32.mxu0 0.0
    %1378 = vmatmul.mubr.f32.gmra.mxu0 %v1247
    %v1379 = vpop.f32.mrf.mxu0
    %v1380 = vadd.f32 %v1207, %v1379
    %v1381 = vpop.f32.mrf.mxu0
    %1382 = vdwg.mxu0
    %v1383 = vmax.f32 %v1320, 0.0
    %v1384 = vmax.f32 %v1325, 0.0
    %v1385 = vmax.f32 %v1330, 0.0
    %v1386 = vmax.f32 %v1335, 0.0
    %v1387 = vmax.f32 %v1340, 0.0
    %v1388 = vmax.f32 %v1345, 0.0
    %v1389 = vmax.f32 %v1350, 0.0
    %v1390 = vmax.f32 %v1355, 0.0
    %v1391 = vmax.f32 %v1360, 0.0
    %v1392 = vmax.f32 %v1365, 0.0
    %v1393 = vmax.f32 %v1370, 0.0
    %v1394 = vmax.f32 %v1375, 0.0
    %v1395 = vmax.f32 %v1380, 0.0
    %v1396 = vld [vmem:[%s11] sm:$0xff]
    %v1397 = vld [vmem:[%s11 + $0x8] sm:$0xff]
    %v1398 = vld [vmem:[%s11 + $0x10] sm:$0xff]
    %v1399 = vld [vmem:[%s11 + $0x18] sm:$0xff]
    %v1400 = vld [vmem:[%s11 + $0x20] sm:$0xff]
    %v1401 = vld [vmem:[%s11 + $0x28] sm:$0xff]
    %v1402 = vld [vmem:[%s11 + $0x30] sm:$0xff]
    %v1403 = vld [vmem:[%s11 + $0x38] sm:$0xff]
    %v1404 = vld [vmem:[%s11 + $0x40] sm:$0xff]
    %v1405 = vld [vmem:[%s11 + $0x48] sm:$0xff]
    %v1406 = vld [vmem:[%s11 + $0x50] sm:$0xff]
    %v1407 = vld [vmem:[%s11 + $0x58] sm:$0xff]
    %v1408 = vld [vmem:[%s11 + $0x60] sm:$0xff]
    %v1409 = vld [vmem:[%s11 + $0x68] sm:$0xff]
    %v1410 = vld [vmem:[%s11 + $0x70] sm:$0xff]
    %v1411 = vld [vmem:[%s11 + $0x78] sm:$0xff]
    %v1412 = vld [vmem:[%s11 + $0x80] sm:$0xff]
    %v1413 = vld [vmem:[%s11 + $0x88] sm:$0xff]
    %v1414 = vld [vmem:[%s11 + $0x90] sm:$0xff]
    %v1415 = vld [vmem:[%s11 + $0x98] sm:$0xff]
    %v1416 = vld [vmem:[%s11 + $0xa0] sm:$0x3]
    %vm1417 = vcmask 801792
    %v1419 = vsel %vm1417, %v1396, 0
    %v1422 = vsel %vm1417, %v1397, 0
    %v1425 = vsel %vm1417, %v1398, 0
    %v1428 = vsel %vm1417, %v1399, 0
    %v1431 = vsel %vm1417, %v1400, 0
    %v1434 = vsel %vm1417, %v1401, 0
    %v1437 = vsel %vm1417, %v1402, 0
    %v1440 = vsel %vm1417, %v1403, 0
    %v1443 = vsel %vm1417, %v1404, 0
    %v1446 = vsel %vm1417, %v1405, 0
    %v1449 = vsel %vm1417, %v1406, 0
    %v1452 = vsel %vm1417, %v1407, 0
    %v1455 = vsel %vm1417, %v1408, 0
    %v1458 = vsel %vm1417, %v1409, 0
    %v1461 = vsel %vm1417, %v1410, 0
    %v1464 = vsel %vm1417, %v1411, 0
    %v1467 = vsel %vm1417, %v1412, 0
    %v1470 = vsel %vm1417, %v1413, 0
    %v1473 = vsel %vm1417, %v1414, 0
    %v1476 = vsel %vm1417, %v1415, 0
    %v1479 = vsel %vm1417, %v1416, 0
    %vm1481 = vcmask 1041408
    %v1483 = vsel %vm1481, %v1395, 0
    %1485 = vmatprep.subr.mxu0 0.0
    %1486 = vmatpush1.msra.mxu0 0.0
    %1487 = vmatprep.subr.mxu0 0.0
    %1488 = vmatpush1.msra.mxu0 0.0
    %1489 = vmatprep.subr.mxu0 0.0
    %1490 = vmatpush1.msra.mxu0 0.0
    %1491 = vmatprep.subr.mxu0 0.0
    %1492 = vmatpush1.msra.mxu0 %v1483
    %1493 = vmatprep.subr.mxu0 0.0
    %1494 = vmatpush1.msra.mxu0 %v1394
    %1495 = vmatprep.subr.mxu0 0.0
    %1496 = vmatpush1.msra.mxu0 %v1393
    %1497 = vmatprep.subr.mxu0 0.0
    %1498 = vmatpush1.msra.mxu0 %v1392
    %1499 = vmatprep.subr.mxu0 0.0
    %1500 = vmatpush1.msra.mxu0 %v1391
    %1501 = vmatprep.subr.mxu0 0.0
    %1502 = vmatpush1.msra.mxu0 %v1390
    %1503 = vmatprep.subr.mxu0 0.0
    %1504 = vmatpush1.msra.mxu0 %v1389
    %1505 = vmatprep.subr.mxu0 0.0
    %1506 = vmatpush1.msra.mxu0 %v1388
    %1507 = vmatprep.subr.mxu0 0.0
    %1508 = vmatpush1.msra.mxu0 %v1387
    %1509 = vmatprep.subr.mxu0 0.0
    %1510 = vmatpush1.msra.mxu0 %v1386
    %1511 = vmatprep.subr.mxu0 0.0
    %1512 = vmatpush1.msra.mxu0 %v1385
    %1513 = vmatprep.subr.mxu0 0.0
    %1514 = vmatpush1.msra.mxu0 %v1384
    %1515 = vmatprep.subr.mxu0 0.0
    %1516 = vmatpush1.msra.mxu0 %v1383
    %1517 = vmatprep.subr.mxu0 0.0
    %1518 = vmatpush2.msra.mxu0 0.0
    %1519 = vmatprep.subr.mxu0 0.0
    %1520 = vmatpush2.msra.mxu0 0.0
    %1521 = vmatprep.subr.mxu0 0.0
    %1522 = vmatpush2.msra.mxu0 0.0
    %1523 = vmatprep.subr.mxu0 0.0
    %1524 = vmatpush2.msra.mxu0 0.0
    %1525 = vmatprep.subr.mxu0 0.0
    %1526 = vmatpush2.msra.mxu0 0.0
    %1527 = vmatprep.subr.mxu0 0.0
    %1528 = vmatpush2.msra.mxu0 0.0
    %1529 = vmatprep.subr.mxu0 0.0
    %1530 = vmatpush2.msra.mxu0 0.0
    %1531 = vmatprep.subr.mxu0 0.0
    %1532 = vmatpush2.msra.mxu0 0.0
    %1533 = vmatprep.subr.mxu0 0.0
    %1534 = vmatpush2.msra.mxu0 0.0
    %1535 = vmatprep.subr.mxu0 0.0
    %1536 = vmatpush2.msra.mxu0 0.0
    %1537 = vmatprep.subr.mxu0 0.0
    %1538 = vmatpush2.msra.mxu0 0.0
    %1539 = vmatprep.subr.mxu0 0.0
    %1540 = vmatpush2.msra.mxu0 0.0
    %1541 = vmatprep.subr.mxu0 0.0
    %1542 = vmatpush2.msra.mxu0 0.0
    %1543 = vmatprep.subr.mxu0 0.0
    %1544 = vmatpush2.msra.mxu0 0.0
    %1545 = vmatprep.subr.mxu0 0.0
    %1546 = vmatpush2.msra.mxu0 0.0
    %1547 = vmatprep.subr.mxu0 0.0
    %1548 = vmatpush2.msra.mxu0 0.0
    %1549 = vmatprep.mubr.f32.mxu0 0.0
    %1550 = vmatmul.mubr.f32.gmra.mxu0 %v1419
    %v1551 = vpop.f32.mrf.mxu0
    %v1552 = vadd.f32 0.0, %v1551
    %v1553 = vpop.f32.mrf.mxu0
    %1554 = vmatprep.mubr.f32.mxu0 0.0
    %1555 = vmatmul.mubr.f32.gmra.mxu0 %v1422
    %v1556 = vpop.f32.mrf.mxu0
    %v1557 = vadd.f32 0.0, %v1556
    %v1558 = vpop.f32.mrf.mxu0
    %1559 = vmatprep.mubr.f32.mxu0 0.0
    %1560 = vmatmul.mubr.f32.gmra.mxu0 %v1425
    %v1561 = vpop.f32.mrf.mxu0
    %v1562 = vadd.f32 0.0, %v1561
    %v1563 = vpop.f32.mrf.mxu0
    %1564 = vmatprep.mubr.f32.mxu0 0.0
    %1565 = vmatmul.mubr.f32.gmra.mxu0 %v1428
    %v1566 = vpop.f32.mrf.mxu0
    %v1567 = vadd.f32 0.0, %v1566
    %v1568 = vpop.f32.mrf.mxu0
    %1569 = vmatprep.mubr.f32.mxu0 0.0
    %1570 = vmatmul.mubr.f32.gmra.mxu0 %v1431
    %v1571 = vpop.f32.mrf.mxu0
    %v1572 = vadd.f32 0.0, %v1571
    %v1573 = vpop.f32.mrf.mxu0
    %1574 = vmatprep.mubr.f32.mxu0 0.0
    %1575 = vmatmul.mubr.f32.gmra.mxu0 %v1434
    %v1576 = vpop.f32.mrf.mxu0
    %v1577 = vadd.f32 0.0, %v1576
    %v1578 = vpop.f32.mrf.mxu0
    %1579 = vmatprep.mubr.f32.mxu0 0.0
    %1580 = vmatmul.mubr.f32.gmra.mxu0 %v1437
    %v1581 = vpop.f32.mrf.mxu0
    %v1582 = vadd.f32 0.0, %v1581
    %v1583 = vpop.f32.mrf.mxu0
    %1584 = vmatprep.mubr.f32.mxu0 0.0
    %1585 = vmatmul.mubr.f32.gmra.mxu0 %v1440
    %v1586 = vpop.f32.mrf.mxu0
    %v1587 = vadd.f32 0.0, %v1586
    %v1588 = vpop.f32.mrf.mxu0
    %1589 = vmatprep.mubr.f32.mxu0 0.0
    %1590 = vmatmul.mubr.f32.gmra.mxu0 %v1443
    %v1591 = vpop.f32.mrf.mxu0
    %v1592 = vadd.f32 0.0, %v1591
    %v1593 = vpop.f32.mrf.mxu0
    %1594 = vmatprep.mubr.f32.mxu0 0.0
    %1595 = vmatmul.mubr.f32.gmra.mxu0 %v1446
    %v1596 = vpop.f32.mrf.mxu0
    %v1597 = vadd.f32 0.0, %v1596
    %v1598 = vpop.f32.mrf.mxu0
    %1599 = vmatprep.mubr.f32.mxu0 0.0
    %1600 = vmatmul.mubr.f32.gmra.mxu0 %v1449
    %v1601 = vpop.f32.mrf.mxu0
    %v1602 = vadd.f32 0.0, %v1601
    %v1603 = vpop.f32.mrf.mxu0
    %1604 = vmatprep.mubr.f32.mxu0 0.0
    %1605 = vmatmul.mubr.f32.gmra.mxu0 %v1452
    %v1606 = vpop.f32.mrf.mxu0
    %v1607 = vadd.f32 0.0, %v1606
    %v1608 = vpop.f32.mrf.mxu0
    %1609 = vmatprep.mubr.f32.mxu0 0.0
    %1610 = vmatmul.mubr.f32.gmra.mxu0 %v1455
    %v1611 = vpop.f32.mrf.mxu0
    %v1612 = vadd.f32 0.0, %v1611
    %v1613 = vpop.f32.mrf.mxu0
    %1614 = vmatprep.mubr.f32.mxu0 0.0
    %1615 = vmatmul.mubr.f32.gmra.mxu0 %v1458
    %v1616 = vpop.f32.mrf.mxu0
    %v1617 = vadd.f32 0.0, %v1616
    %v1618 = vpop.f32.mrf.mxu0
    %1619 = vmatprep.mubr.f32.mxu0 0.0
    %1620 = vmatmul.mubr.f32.gmra.mxu0 %v1461
    %v1621 = vpop.f32.mrf.mxu0
    %v1622 = vadd.f32 0.0, %v1621
    %v1623 = vpop.f32.mrf.mxu0
    %1624 = vmatprep.mubr.f32.mxu0 0.0
    %1625 = vmatmul.mubr.f32.gmra.mxu0 %v1464
    %v1626 = vpop.f32.mrf.mxu0
    %v1627 = vadd.f32 0.0, %v1626
    %v1628 = vpop.f32.mrf.mxu0
    %1629 = vmatprep.mubr.f32.mxu0 0.0
    %1630 = vmatmul.mubr.f32.gmra.mxu0 %v1467
    %v1631 = vpop.f32.mrf.mxu0
    %v1632 = vadd.f32 0.0, %v1631
    %v1633 = vpop.f32.mrf.mxu0
    %1634 = vmatprep.mubr.f32.mxu0 0.0
    %1635 = vmatmul.mubr.f32.gmra.mxu0 %v1470
    %v1636 = vpop.f32.mrf.mxu0
    %v1637 = vadd.f32 0.0, %v1636
    %v1638 = vpop.f32.mrf.mxu0
    %1639 = vmatprep.mubr.f32.mxu0 0.0
    %1640 = vmatmul.mubr.f32.gmra.mxu0 %v1473
    %v1641 = vpop.f32.mrf.mxu0
    %v1642 = vadd.f32 0.0, %v1641
    %v1643 = vpop.f32.mrf.mxu0
    %1644 = vmatprep.mubr.f32.mxu0 0.0
    %1645 = vmatmul.mubr.f32.gmra.mxu0 %v1476
    %v1646 = vpop.f32.mrf.mxu0
    %v1647 = vadd.f32 0.0, %v1646
    %v1648 = vpop.f32.mrf.mxu0
    %1649 = vmatprep.mubr.f32.mxu0 0.0
    %1650 = vmatmul.mubr.f32.gmra.mxu0 %v1479
    %v1651 = vpop.f32.mrf.mxu0
    %v1652 = vadd.f32 0.0, %v1651
    %v1653 = vpop.f32.mrf.mxu0
    %1654 = vdwg.mxu0
    %v1655 = vld [vmem:[%s13] sm:$0x1]
    %v1657 = vlaneseq
    %v1658 = vshrl.u32 %v1657, 7
    %v1659 = vsub.s32 0, %v1658
    %v1660 = vrot.slane %v1655, %v1659
    %v1662 = vld [vmem:[%s12] sm:$0xff]
    %vm1663 = vcmask 64512
    %v1665 = vsel %vm1663, %v1552, 0
    %v1668 = vsel %vm1663, %v1557, 0
    %v1671 = vsel %vm1663, %v1562, 0
    %1673 = vmatprep.subr.mxu0 0.0
    %1674 = vmatpush1.msra.mxu0 0.0
    %1675 = vmatprep.subr.mxu0 0.0
    %1676 = vmatpush1.msra.mxu0 0.0
    %1677 = vmatprep.subr.mxu0 0.0
    %1678 = vmatpush1.msra.mxu0 0.0
    %1679 = vmatprep.subr.mxu0 0.0
    %1680 = vmatpush1.msra.mxu0 0.0
    %1681 = vmatprep.subr.mxu0 0.0
    %1682 = vmatpush1.msra.mxu0 0.0
    %1683 = vmatprep.subr.mxu0 0.0
    %1684 = vmatpush1.msra.mxu0 0.0
    %1685 = vmatprep.subr.mxu0 0.0
    %1686 = vmatpush1.msra.mxu0 0.0
    %1687 = vmatprep.subr.mxu0 0.0
    %1688 = vmatpush1.msra.mxu0 0.0
    %1689 = vmatprep.subr.mxu0 0.0
    %1690 = vmatpush1.msra.mxu0 0.0
    %1691 = vmatprep.subr.mxu0 0.0
    %1692 = vmatpush1.msra.mxu0 0.0
    %1693 = vmatprep.subr.mxu0 0.0
    %1694 = vmatpush1.msra.mxu0 0.0
    %1695 = vmatprep.subr.mxu0 0.0
    %1696 = vmatpush1.msra.mxu0 0.0
    %1697 = vmatprep.subr.mxu0 0.0
    %1698 = vmatpush1.msra.mxu0 0.0
    %1699 = vmatprep.subr.mxu0 0.0
    %1700 = vmatpush1.msra.mxu0 0.0
    %1701 = vmatprep.subr.mxu0 0.0
    %1702 = vmatpush1.msra.mxu0 0.0
    %1703 = vmatprep.subr.mxu0 0.0
    %1704 = vmatpush1.msra.mxu0 %v1662
    %1705 = vmatprep.subr.mxu0 0.0
    %1706 = vmatpush2.msra.mxu0 0.0
    %1707 = vmatprep.subr.mxu0 0.0
    %1708 = vmatpush2.msra.mxu0 0.0
    %1709 = vmatprep.subr.mxu0 0.0
    %1710 = vmatpush2.msra.mxu0 0.0
    %1711 = vmatprep.subr.mxu0 0.0
    %1712 = vmatpush2.msra.mxu0 0.0
    %1713 = vmatprep.subr.mxu0 0.0
    %1714 = vmatpush2.msra.mxu0 0.0
    %1715 = vmatprep.subr.mxu0 0.0
    %1716 = vmatpush2.msra.mxu0 0.0
    %1717 = vmatprep.subr.mxu0 0.0
    %1718 = vmatpush2.msra.mxu0 0.0
    %1719 = vmatprep.subr.mxu0 0.0
    %1720 = vmatpush2.msra.mxu0 0.0
    %1721 = vmatprep.subr.mxu0 0.0
    %1722 = vmatpush2.msra.mxu0 0.0
    %1723 = vmatprep.subr.mxu0 0.0
    %1724 = vmatpush2.msra.mxu0 0.0
    %1725 = vmatprep.subr.mxu0 0.0
    %1726 = vmatpush2.msra.mxu0 0.0
    %1727 = vmatprep.subr.mxu0 0.0
    %1728 = vmatpush2.msra.mxu0 0.0
    %1729 = vmatprep.subr.mxu0 0.0
    %1730 = vmatpush2.msra.mxu0 0.0
    %1731 = vmatprep.subr.mxu0 0.0
    %1732 = vmatpush2.msra.mxu0 0.0
    %1733 = vmatprep.subr.mxu0 0.0
    %1734 = vmatpush2.msra.mxu0 0.0
    %1735 = vmatprep.subr.mxu0 0.0
    %1736 = vmatpush2.msra.mxu0 0.0
    %1737 = vmatprep.mubr.f32.mxu0 0.0
    %1738 = vmatmul.mubr.f32.gmra.mxu0 %v1665
    %v1739 = vpop.f32.mrf.mxu0
    %v1740 = vadd.f32 0.0, %v1739
    %v1741 = vpop.f32.mrf.mxu0
    %1742 = vmatprep.mubr.f32.mxu0 0.0
    %1743 = vmatmul.mubr.f32.gmra.mxu0 %v1668
    %v1744 = vpop.f32.mrf.mxu0
    %v1745 = vadd.f32 0.0, %v1744
    %v1746 = vpop.f32.mrf.mxu0
    %1747 = vmatprep.mubr.f32.mxu0 0.0
    %1748 = vmatmul.mubr.f32.gmra.mxu0 %v1671
    %v1749 = vpop.f32.mrf.mxu0
    %v1750 = vadd.f32 0.0, %v1749
    %v1751 = vpop.f32.mrf.mxu0
    %1752 = vdwg.mxu0
    %v1753 = vadd.f32 %v1660, %v1740
    %v1754 = vadd.f32 %v1660, %v1745
    %v1755 = vadd.f32 %v1660, %v1750
    %s1756 = scalar_lea.vmem %s12, 8
    %v1757 = vld [vmem:[%s1756] sm:$0xff]
    %vm1760 = vcmask 1045504
    %v1761 = vrot.slane %v1562, 2
    %v1762 = vrot.slane %v1567, 2
    %v1763 = vsel %vm1760, %v1761, %v1762
    %v1764 = vrot.slane %v1572, 2
    %v1765 = vsel %vm1760, %v1762, %v1764
    %v1766 = vsel %vm1663, %v1763, 0
    %v1768 = vsel %vm1663, %v1765, 0
    %v1770 = vsel %vm1663, %v1764, 0
    %1772 = vmatprep.subr.mxu0 0.0
    %1773 = vmatpush1.msra.mxu0 0.0
    %1774 = vmatprep.subr.mxu0 0.0
    %1775 = vmatpush1.msra.mxu0 0.0
    %1776 = vmatprep.subr.mxu0 0.0
    %1777 = vmatpush1.msra.mxu0 0.0
    %1778 = vmatprep.subr.mxu0 0.0
    %1779 = vmatpush1.msra.mxu0 0.0
    %1780 = vmatprep.subr.mxu0 0.0
    %1781 = vmatpush1.msra.mxu0 0.0
    %1782 = vmatprep.subr.mxu0 0.0
    %1783 = vmatpush1.msra.mxu0 0.0
    %1784 = vmatprep.subr.mxu0 0.0
    %1785 = vmatpush1.msra.mxu0 0.0
    %1786 = vmatprep.subr.mxu0 0.0
    %1787 = vmatpush1.msra.mxu0 0.0
    %1788 = vmatprep.subr.mxu0 0.0
    %1789 = vmatpush1.msra.mxu0 0.0
    %1790 = vmatprep.subr.mxu0 0.0
    %1791 = vmatpush1.msra.mxu0 0.0
    %1792 = vmatprep.subr.mxu0 0.0
    %1793 = vmatpush1.msra.mxu0 0.0
    %1794 = vmatprep.subr.mxu0 0.0
    %1795 = vmatpush1.msra.mxu0 0.0
    %1796 = vmatprep.subr.mxu0 0.0
    %1797 = vmatpush1.msra.mxu0 0.0
    %1798 = vmatprep.subr.mxu0 0.0
    %1799 = vmatpush1.msra.mxu0 0.0
    %1800 = vmatprep.subr.mxu0 0.0
    %1801 = vmatpush1.msra.mxu0 0.0
    %1802 = vmatprep.subr.mxu0 0.0
    %1803 = vmatpush1.msra.mxu0 %v1757
    %1804 = vmatprep.subr.mxu0 0.0
    %1805 = vmatpush2.msra.mxu0 0.0
    %1806 = vmatprep.subr.mxu0 0.0
    %1807 = vmatpush2.msra.mxu0 0.0
    %1808 = vmatprep.subr.mxu0 0.0
    %1809 = vmatpush2.msra.mxu0 0.0
    %1810 = vmatprep.subr.mxu0 0.0
    %1811 = vmatpush2.msra.mxu0 0.0
    %1812 = vmatprep.subr.mxu0 0.0
    %1813 = vmatpush2.msra.mxu0 0.0
    %1814 = vmatprep.subr.mxu0 0.0
    %1815 = vmatpush2.msra.mxu0 0.0
    %1816 = vmatprep.subr.mxu0 0.0
    %1817 = vmatpush2.msra.mxu0 0.0
    %1818 = vmatprep.subr.mxu0 0.0
    %1819 = vmatpush2.msra.mxu0 0.0
    %1820 = vmatprep.subr.mxu0 0.0
    %1821 = vmatpush2.msra.mxu0 0.0
    %1822 = vmatprep.subr.mxu0 0.0
    %1823 = vmatpush2.msra.mxu0 0.0
    %1824 = vmatprep.subr.mxu0 0.0
    %1825 = vmatpush2.msra.mxu0 0.0
    %1826 = vmatprep.subr.mxu0 0.0
    %1827 = vmatpush2.msra.mxu0 0.0
    %1828 = vmatprep.subr.mxu0 0.0
    %1829 = vmatpush2.msra.mxu0 0.0
    %1830 = vmatprep.subr.mxu0 0.0
    %1831 = vmatpush2.msra.mxu0 0.0
    %1832 = vmatprep.subr.mxu0 0.0
    %1833 = vmatpush2.msra.mxu0 0.0
    %1834 = vmatprep.subr.mxu0 0.0
    %1835 = vmatpush2.msra.mxu0 0.0
    %1836 = vmatprep.mubr.f32.mxu0 0.0
    %1837 = vmatmul.mubr.f32.gmra.mxu0 %v1766
    %v1838 = vpop.f32.mrf.mxu0
    %v1839 = vadd.f32 0.0, %v1838
    %v1840 = vpop.f32.mrf.mxu0
    %1841 = vmatprep.mubr.f32.mxu0 0.0
    %1842 = vmatmul.mubr.f32.gmra.mxu0 %v1768
    %v1843 = vpop.f32.mrf.mxu0
    %v1844 = vadd.f32 0.0, %v1843
    %v1845 = vpop.f32.mrf.mxu0
    %1846 = vmatprep.mubr.f32.mxu0 0.0
    %1847 = vmatmul.mubr.f32.gmra.mxu0 %v1770
    %v1848 = vpop.f32.mrf.mxu0
    %v1849 = vadd.f32 0.0, %v1848
    %v1850 = vpop.f32.mrf.mxu0
    %1851 = vdwg.mxu0
    %v1852 = vadd.f32 %v1753, %v1839
    %v1853 = vadd.f32 %v1754, %v1844
    %v1854 = vadd.f32 %v1755, %v1849
    %s1855 = scalar_lea.vmem %s12, 16
    %v1856 = vld [vmem:[%s1855] sm:$0xff]
    %v1859 = vrot.slane %v1572, 4
    %v1860 = vrot.slane %v1577, 4
    %v1861 = vsel %vm1249, %v1859, %v1860
    %v1862 = vrot.slane %v1582, 4
    %v1863 = vsel %vm1249, %v1860, %v1862
    %v1864 = vsel %vm1663, %v1861, 0
    %v1866 = vsel %vm1663, %v1863, 0
    %v1868 = vsel %vm1663, %v1862, 0
    %1870 = vmatprep.subr.mxu0 0.0
    %1871 = vmatpush1.msra.mxu0 0.0
    %1872 = vmatprep.subr.mxu0 0.0
    %1873 = vmatpush1.msra.mxu0 0.0
    %1874 = vmatprep.subr.mxu0 0.0
    %1875 = vmatpush1.msra.mxu0 0.0
    %1876 = vmatprep.subr.mxu0 0.0
    %1877 = vmatpush1.msra.mxu0 0.0
    %1878 = vmatprep.subr.mxu0 0.0
    %1879 = vmatpush1.msra.mxu0 0.0
    %1880 = vmatprep.subr.mxu0 0.0
    %1881 = vmatpush1.msra.mxu0 0.0
    %1882 = vmatprep.subr.mxu0 0.0
    %1883 = vmatpush1.msra.mxu0 0.0
    %1884 = vmatprep.subr.mxu0 0.0
    %1885 = vmatpush1.msra.mxu0 0.0
    %1886 = vmatprep.subr.mxu0 0.0
    %1887 = vmatpush1.msra.mxu0 0.0
    %1888 = vmatprep.subr.mxu0 0.0
    %1889 = vmatpush1.msra.mxu0 0.0
    %1890 = vmatprep.subr.mxu0 0.0
    %1891 = vmatpush1.msra.mxu0 0.0
    %1892 = vmatprep.subr.mxu0 0.0
    %1893 = vmatpush1.msra.mxu0 0.0
    %1894 = vmatprep.subr.mxu0 0.0
    %1895 = vmatpush1.msra.mxu0 0.0
    %1896 = vmatprep.subr.mxu0 0.0
    %1897 = vmatpush1.msra.mxu0 0.0
    %1898 = vmatprep.subr.mxu0 0.0
    %1899 = vmatpush1.msra.mxu0 0.0
    %1900 = vmatprep.subr.mxu0 0.0
    %1901 = vmatpush1.msra.mxu0 %v1856
    %1902 = vmatprep.subr.mxu0 0.0
    %1903 = vmatpush2.msra.mxu0 0.0
    %1904 = vmatprep.subr.mxu0 0.0
    %1905 = vmatpush2.msra.mxu0 0.0
    %1906 = vmatprep.subr.mxu0 0.0
    %1907 = vmatpush2.msra.mxu0 0.0
    %1908 = vmatprep.subr.mxu0 0.0
    %1909 = vmatpush2.msra.mxu0 0.0
    %1910 = vmatprep.subr.mxu0 0.0
    %1911 = vmatpush2.msra.mxu0 0.0
    %1912 = vmatprep.subr.mxu0 0.0
    %1913 = vmatpush2.msra.mxu0 0.0
    %1914 = vmatprep.subr.mxu0 0.0
    %1915 = vmatpush2.msra.mxu0 0.0
    %1916 = vmatprep.subr.mxu0 0.0
    %1917 = vmatpush2.msra.mxu0 0.0
    %1918 = vmatprep.subr.mxu0 0.0
    %1919 = vmatpush2.msra.mxu0 0.0
    %1920 = vmatprep.subr.mxu0 0.0
    %1921 = vmatpush2.msra.mxu0 0.0
    %1922 = vmatprep.subr.mxu0 0.0
    %1923 = vmatpush2.msra.mxu0 0.0
    %1924 = vmatprep.subr.mxu0 0.0
    %1925 = vmatpush2.msra.mxu0 0.0
    %1926 = vmatprep.subr.mxu0 0.0
    %1927 = vmatpush2.msra.mxu0 0.0
    %1928 = vmatprep.subr.mxu0 0.0
    %1929 = vmatpush2.msra.mxu0 0.0
    %1930 = vmatprep.subr.mxu0 0.0
    %1931 = vmatpush2.msra.mxu0 0.0
    %1932 = vmatprep.subr.mxu0 0.0
    %1933 = vmatpush2.msra.mxu0 0.0
    %1934 = vmatprep.mubr.f32.mxu0 0.0
    %1935 = vmatmul.mubr.f32.gmra.mxu0 %v1864
    %v1936 = vpop.f32.mrf.mxu0
    %v1937 = vadd.f32 0.0, %v1936
    %v1938 = vpop.f32.mrf.mxu0
    %1939 = vmatprep.mubr.f32.mxu0 0.0
    %1940 = vmatmul.mubr.f32.gmra.mxu0 %v1866
    %v1941 = vpop.f32.mrf.mxu0
    %v1942 = vadd.f32 0.0, %v1941
    %v1943 = vpop.f32.mrf.mxu0
    %1944 = vmatprep.mubr.f32.mxu0 0.0
    %1945 = vmatmul.mubr.f32.gmra.mxu0 %v1868
    %v1946 = vpop.f32.mrf.mxu0
    %v1947 = vadd.f32 0.0, %v1946
    %v1948 = vpop.f32.mrf.mxu0
    %1949 = vdwg.mxu0
    %v1950 = vadd.f32 %v1852, %v1937
    %v1951 = vadd.f32 %v1853, %v1942
    %v1952 = vadd.f32 %v1854, %v1947
    %s1953 = scalar_lea.vmem %s12, 24
    %v1954 = vld [vmem:[%s1953] sm:$0xff]
    %v1957 = vrot.slane %v1582, 6
    %v1958 = vrot.slane %v1587, 6
    %v1959 = vsel %vm1481, %v1957, %v1958
    %v1960 = vrot.slane %v1592, 6
    %v1961 = vsel %vm1481, %v1958, %v1960
    %v1962 = vsel %vm1663, %v1959, 0
    %v1964 = vsel %vm1663, %v1961, 0
    %v1966 = vsel %vm1663, %v1960, 0
    %1968 = vmatprep.subr.mxu0 0.0
    %1969 = vmatpush1.msra.mxu0 0.0
    %1970 = vmatprep.subr.mxu0 0.0
    %1971 = vmatpush1.msra.mxu0 0.0
    %1972 = vmatprep.subr.mxu0 0.0
    %1973 = vmatpush1.msra.mxu0 0.0
    %1974 = vmatprep.subr.mxu0 0.0
    %1975 = vmatpush1.msra.mxu0 0.0
    %1976 = vmatprep.subr.mxu0 0.0
    %1977 = vmatpush1.msra.mxu0 0.0
    %1978 = vmatprep.subr.mxu0 0.0
    %1979 = vmatpush1.msra.mxu0 0.0
    %1980 = vmatprep.subr.mxu0 0.0
    %1981 = vmatpush1.msra.mxu0 0.0
    %1982 = vmatprep.subr.mxu0 0.0
    %1983 = vmatpush1.msra.mxu0 0.0
    %1984 = vmatprep.subr.mxu0 0.0
    %1985 = vmatpush1.msra.mxu0 0.0
    %1986 = vmatprep.subr.mxu0 0.0
    %1987 = vmatpush1.msra.mxu0 0.0
    %1988 = vmatprep.subr.mxu0 0.0
    %1989 = vmatpush1.msra.mxu0 0.0
    %1990 = vmatprep.subr.mxu0 0.0
    %1991 = vmatpush1.msra.mxu0 0.0
    %1992 = vmatprep.subr.mxu0 0.0
    %1993 = vmatpush1.msra.mxu0 0.0
    %1994 = vmatprep.subr.mxu0 0.0
    %1995 = vmatpush1.msra.mxu0 0.0
    %1996 = vmatprep.subr.mxu0 0.0
    %1997 = vmatpush1.msra.mxu0 0.0
    %1998 = vmatprep.subr.mxu0 0.0
    %1999 = vmatpush1.msra.mxu0 %v1954
    %2000 = vmatprep.subr.mxu0 0.0
    %2001 = vmatpush2.msra.mxu0 0.0
    %2002 = vmatprep.subr.mxu0 0.0
    %2003 = vmatpush2.msra.mxu0 0.0
    %2004 = vmatprep.subr.mxu0 0.0
    %2005 = vmatpush2.msra.mxu0 0.0
    %2006 = vmatprep.subr.mxu0 0.0
    %2007 = vmatpush2.msra.mxu0 0.0
    %2008 = vmatprep.subr.mxu0 0.0
    %2009 = vmatpush2.msra.mxu0 0.0
    %2010 = vmatprep.subr.mxu0 0.0
    %2011 = vmatpush2.msra.mxu0 0.0
    %2012 = vmatprep.subr.mxu0 0.0
    %2013 = vmatpush2.msra.mxu0 0.0
    %2014 = vmatprep.subr.mxu0 0.0
    %2015 = vmatpush2.msra.mxu0 0.0
    %2016 = vmatprep.subr.mxu0 0.0
    %2017 = vmatpush2.msra.mxu0 0.0
    %2018 = vmatprep.subr.mxu0 0.0
    %2019 = vmatpush2.msra.mxu0 0.0
    %2020 = vmatprep.subr.mxu0 0.0
    %2021 = vmatpush2.msra.mxu0 0.0
    %2022 = vmatprep.subr.mxu0 0.0
    %2023 = vmatpush2.msra.mxu0 0.0
    %2024 = vmatprep.subr.mxu0 0.0
    %2025 = vmatpush2.msra.mxu0 0.0
    %2026 = vmatprep.subr.mxu0 0.0
    %2027 = vmatpush2.msra.mxu0 0.0
    %2028 = vmatprep.subr.mxu0 0.0
    %2029 = vmatpush2.msra.mxu0 0.0
    %2030 = vmatprep.subr.mxu0 0.0
    %2031 = vmatpush2.msra.mxu0 0.0
    %2032 = vmatprep.mubr.f32.mxu0 0.0
    %2033 = vmatmul.mubr.f32.gmra.mxu0 %v1962
    %v2034 = vpop.f32.mrf.mxu0
    %v2035 = vadd.f32 0.0, %v2034
    %v2036 = vpop.f32.mrf.mxu0
    %2037 = vmatprep.mubr.f32.mxu0 0.0
    %2038 = vmatmul.mubr.f32.gmra.mxu0 %v1964
    %v2039 = vpop.f32.mrf.mxu0
    %v2040 = vadd.f32 0.0, %v2039
    %v2041 = vpop.f32.mrf.mxu0
    %2042 = vmatprep.mubr.f32.mxu0 0.0
    %2043 = vmatmul.mubr.f32.gmra.mxu0 %v1966
    %v2044 = vpop.f32.mrf.mxu0
    %v2045 = vadd.f32 0.0, %v2044
    %v2046 = vpop.f32.mrf.mxu0
    %2047 = vdwg.mxu0
    %v2048 = vadd.f32 %v1950, %v2035
    %v2049 = vadd.f32 %v1951, %v2040
    %v2050 = vadd.f32 %v1952, %v2045
    %s2051 = scalar_lea.vmem %s12, 32
    %v2052 = vld [vmem:[%s2051] sm:$0xff]
    %v2054 = vsel %vm1663, %v1597, 0
    %v2057 = vsel %vm1663, %v1602, 0
    %v2060 = vsel %vm1663, %v1607, 0
    %2062 = vmatprep.subr.mxu0 0.0
    %2063 = vmatpush1.msra.mxu0 0.0
    %2064 = vmatprep.subr.mxu0 0.0
    %2065 = vmatpush1.msra.mxu0 0.0
    %2066 = vmatprep.subr.mxu0 0.0
    %2067 = vmatpush1.msra.mxu0 0.0
    %2068 = vmatprep.subr.mxu0 0.0
    %2069 = vmatpush1.msra.mxu0 0.0
    %2070 = vmatprep.subr.mxu0 0.0
    %2071 = vmatpush1.msra.mxu0 0.0
    %2072 = vmatprep.subr.mxu0 0.0
    %2073 = vmatpush1.msra.mxu0 0.0
    %2074 = vmatprep.subr.mxu0 0.0
    %2075 = vmatpush1.msra.mxu0 0.0
    %2076 = vmatprep.subr.mxu0 0.0
    %2077 = vmatpush1.msra.mxu0 0.0
    %2078 = vmatprep.subr.mxu0 0.0
    %2079 = vmatpush1.msra.mxu0 0.0
    %2080 = vmatprep.subr.mxu0 0.0
    %2081 = vmatpush1.msra.mxu0 0.0
    %2082 = vmatprep.subr.mxu0 0.0
    %2083 = vmatpush1.msra.mxu0 0.0
    %2084 = vmatprep.subr.mxu0 0.0
    %2085 = vmatpush1.msra.mxu0 0.0
    %2086 = vmatprep.subr.mxu0 0.0
    %2087 = vmatpush1.msra.mxu0 0.0
    %2088 = vmatprep.subr.mxu0 0.0
    %2089 = vmatpush1.msra.mxu0 0.0
    %2090 = vmatprep.subr.mxu0 0.0
    %2091 = vmatpush1.msra.mxu0 0.0
    %2092 = vmatprep.subr.mxu0 0.0
    %2093 = vmatpush1.msra.mxu0 %v2052
    %2094 = vmatprep.subr.mxu0 0.0
    %2095 = vmatpush2.msra.mxu0 0.0
    %2096 = vmatprep.subr.mxu0 0.0
    %2097 = vmatpush2.msra.mxu0 0.0
    %2098 = vmatprep.subr.mxu0 0.0
    %2099 = vmatpush2.msra.mxu0 0.0
    %2100 = vmatprep.subr.mxu0 0.0
    %2101 = vmatpush2.msra.mxu0 0.0
    %2102 = vmatprep.subr.mxu0 0.0
    %2103 = vmatpush2.msra.mxu0 0.0
    %2104 = vmatprep.subr.mxu0 0.0
    %2105 = vmatpush2.msra.mxu0 0.0
    %2106 = vmatprep.subr.mxu0 0.0
    %2107 = vmatpush2.msra.mxu0 0.0
    %2108 = vmatprep.subr.mxu0 0.0
    %2109 = vmatpush2.msra.mxu0 0.0
    %2110 = vmatprep.subr.mxu0 0.0
    %2111 = vmatpush2.msra.mxu0 0.0
    %2112 = vmatprep.subr.mxu0 0.0
    %2113 = vmatpush2.msra.mxu0 0.0
    %2114 = vmatprep.subr.mxu0 0.0
    %2115 = vmatpush2.msra.mxu0 0.0
    %2116 = vmatprep.subr.mxu0 0.0
    %2117 = vmatpush2.msra.mxu0 0.0
    %2118 = vmatprep.subr.mxu0 0.0
    %2119 = vmatpush2.msra.mxu0 0.0
    %2120 = vmatprep.subr.mxu0 0.0
    %2121 = vmatpush2.msra.mxu0 0.0
    %2122 = vmatprep.subr.mxu0 0.0
    %2123 = vmatpush2.msra.mxu0 0.0
    %2124 = vmatprep.subr.mxu0 0.0
    %2125 = vmatpush2.msra.mxu0 0.0
    %2126 = vmatprep.mubr.f32.mxu0 0.0
    %2127 = vmatmul.mubr.f32.gmra.mxu0 %v2054
    %v2128 = vpop.f32.mrf.mxu0
    %v2129 = vadd.f32 0.0, %v2128
    %v2130 = vpop.f32.mrf.mxu0
    %2131 = vmatprep.mubr.f32.mxu0 0.0
    %2132 = vmatmul.mubr.f32.gmra.mxu0 %v2057
    %v2133 = vpop.f32.mrf.mxu0
    %v2134 = vadd.f32 0.0, %v2133
    %v2135 = vpop.f32.mrf.mxu0
    %2136 = vmatprep.mubr.f32.mxu0 0.0
    %2137 = vmatmul.mubr.f32.gmra.mxu0 %v2060
    %v2138 = vpop.f32.mrf.mxu0
    %v2139 = vadd.f32 0.0, %v2138
    %v2140 = vpop.f32.mrf.mxu0
    %2141 = vdwg.mxu0
    %v2142 = vadd.f32 %v2048, %v2129
    %v2143 = vadd.f32 %v2049, %v2134
    %v2144 = vadd.f32 %v2050, %v2139
    %s2145 = scalar_lea.vmem %s12, 40
    %v2146 = vld [vmem:[%s2145] sm:$0xff]
    %v2149 = vrot.slane %v1607, 2
    %v2150 = vrot.slane %v1612, 2
    %v2151 = vsel %vm1760, %v2149, %v2150
    %v2152 = vrot.slane %v1617, 2
    %v2153 = vsel %vm1760, %v2150, %v2152
    %v2154 = vsel %vm1663, %v2151, 0
    %v2156 = vsel %vm1663, %v2153, 0
    %v2158 = vsel %vm1663, %v2152, 0
    %2160 = vmatprep.subr.mxu0 0.0
    %2161 = vmatpush1.msra.mxu0 0.0
    %2162 = vmatprep.subr.mxu0 0.0
    %2163 = vmatpush1.msra.mxu0 0.0
    %2164 = vmatprep.subr.mxu0 0.0
    %2165 = vmatpush1.msra.mxu0 0.0
    %2166 = vmatprep.subr.mxu0 0.0
    %2167 = vmatpush1.msra.mxu0 0.0
    %2168 = vmatprep.subr.mxu0 0.0
    %2169 = vmatpush1.msra.mxu0 0.0
    %2170 = vmatprep.subr.mxu0 0.0
    %2171 = vmatpush1.msra.mxu0 0.0
    %2172 = vmatprep.subr.mxu0 0.0
    %2173 = vmatpush1.msra.mxu0 0.0
    %2174 = vmatprep.subr.mxu0 0.0
    %2175 = vmatpush1.msra.mxu0 0.0
    %2176 = vmatprep.subr.mxu0 0.0
    %2177 = vmatpush1.msra.mxu0 0.0
    %2178 = vmatprep.subr.mxu0 0.0
    %2179 = vmatpush1.msra.mxu0 0.0
    %2180 = vmatprep.subr.mxu0 0.0
    %2181 = vmatpush1.msra.mxu0 0.0
    %2182 = vmatprep.subr.mxu0 0.0
    %2183 = vmatpush1.msra.mxu0 0.0
    %2184 = vmatprep.subr.mxu0 0.0
    %2185 = vmatpush1.msra.mxu0 0.0
    %2186 = vmatprep.subr.mxu0 0.0
    %2187 = vmatpush1.msra.mxu0 0.0
    %2188 = vmatprep.subr.mxu0 0.0
    %2189 = vmatpush1.msra.mxu0 0.0
    %2190 = vmatprep.subr.mxu0 0.0
    %2191 = vmatpush1.msra.mxu0 %v2146
    %2192 = vmatprep.subr.mxu0 0.0
    %2193 = vmatpush2.msra.mxu0 0.0
    %2194 = vmatprep.subr.mxu0 0.0
    %2195 = vmatpush2.msra.mxu0 0.0
    %2196 = vmatprep.subr.mxu0 0.0
    %2197 = vmatpush2.msra.mxu0 0.0
    %2198 = vmatprep.subr.mxu0 0.0
    %2199 = vmatpush2.msra.mxu0 0.0
    %2200 = vmatprep.subr.mxu0 0.0
    %2201 = vmatpush2.msra.mxu0 0.0
    %2202 = vmatprep.subr.mxu0 0.0
    %2203 = vmatpush2.msra.mxu0 0.0
    %2204 = vmatprep.subr.mxu0 0.0
    %2205 = vmatpush2.msra.mxu0 0.0
    %2206 = vmatprep.subr.mxu0 0.0
    %2207 = vmatpush2.msra.mxu0 0.0
    %2208 = vmatprep.subr.mxu0 0.0
    %2209 = vmatpush2.msra.mxu0 0.0
    %2210 = vmatprep.subr.mxu0 0.0
    %2211 = vmatpush2.msra.mxu0 0.0
    %2212 = vmatprep.subr.mxu0 0.0
    %2213 = vmatpush2.msra.mxu0 0.0
    %2214 = vmatprep.subr.mxu0 0.0
    %2215 = vmatpush2.msra.mxu0 0.0
    %2216 = vmatprep.subr.mxu0 0.0
    %2217 = vmatpush2.msra.mxu0 0.0
    %2218 = vmatprep.subr.mxu0 0.0
    %2219 = vmatpush2.msra.mxu0 0.0
    %2220 = vmatprep.subr.mxu0 0.0
    %2221 = vmatpush2.msra.mxu0 0.0
    %2222 = vmatprep.subr.mxu0 0.0
    %2223 = vmatpush2.msra.mxu0 0.0
    %2224 = vmatprep.mubr.f32.mxu0 0.0
    %2225 = vmatmul.mubr.f32.gmra.mxu0 %v2154
    %v2226 = vpop.f32.mrf.mxu0
    %v2227 = vadd.f32 0.0, %v2226
    %v2228 = vpop.f32.mrf.mxu0
    %2229 = vmatprep.mubr.f32.mxu0 0.0
    %2230 = vmatmul.mubr.f32.gmra.mxu0 %v2156
    %v2231 = vpop.f32.mrf.mxu0
    %v2232 = vadd.f32 0.0, %v2231
    %v2233 = vpop.f32.mrf.mxu0
    %2234 = vmatprep.mubr.f32.mxu0 0.0
    %2235 = vmatmul.mubr.f32.gmra.mxu0 %v2158
    %v2236 = vpop.f32.mrf.mxu0
    %v2237 = vadd.f32 0.0, %v2236
    %v2238 = vpop.f32.mrf.mxu0
    %2239 = vdwg.mxu0
    %v2240 = vadd.f32 %v2142, %v2227
    %v2241 = vadd.f32 %v2143, %v2232
    %v2242 = vadd.f32 %v2144, %v2237
    %s2243 = scalar_lea.vmem %s12, 48
    %v2244 = vld [vmem:[%s2243] sm:$0xff]
    %v2247 = vrot.slane %v1617, 4
    %v2248 = vrot.slane %v1622, 4
    %v2249 = vsel %vm1249, %v2247, %v2248
    %v2250 = vrot.slane %v1627, 4
    %v2251 = vsel %vm1249, %v2248, %v2250
    %v2252 = vsel %vm1663, %v2249, 0
    %v2254 = vsel %vm1663, %v2251, 0
    %v2256 = vsel %vm1663, %v2250, 0
    %2258 = vmatprep.subr.mxu0 0.0
    %2259 = vmatpush1.msra.mxu0 0.0
    %2260 = vmatprep.subr.mxu0 0.0
    %2261 = vmatpush1.msra.mxu0 0.0
    %2262 = vmatprep.subr.mxu0 0.0
    %2263 = vmatpush1.msra.mxu0 0.0
    %2264 = vmatprep.subr.mxu0 0.0
    %2265 = vmatpush1.msra.mxu0 0.0
    %2266 = vmatprep.subr.mxu0 0.0
    %2267 = vmatpush1.msra.mxu0 0.0
    %2268 = vmatprep.subr.mxu0 0.0
    %2269 = vmatpush1.msra.mxu0 0.0
    %2270 = vmatprep.subr.mxu0 0.0
    %2271 = vmatpush1.msra.mxu0 0.0
    %2272 = vmatprep.subr.mxu0 0.0
    %2273 = vmatpush1.msra.mxu0 0.0
    %2274 = vmatprep.subr.mxu0 0.0
    %2275 = vmatpush1.msra.mxu0 0.0
    %2276 = vmatprep.subr.mxu0 0.0
    %2277 = vmatpush1.msra.mxu0 0.0
    %2278 = vmatprep.subr.mxu0 0.0
    %2279 = vmatpush1.msra.mxu0 0.0
    %2280 = vmatprep.subr.mxu0 0.0
    %2281 = vmatpush1.msra.mxu0 0.0
    %2282 = vmatprep.subr.mxu0 0.0
    %2283 = vmatpush1.msra.mxu0 0.0
    %2284 = vmatprep.subr.mxu0 0.0
    %2285 = vmatpush1.msra.mxu0 0.0
    %2286 = vmatprep.subr.mxu0 0.0
    %2287 = vmatpush1.msra.mxu0 0.0
    %2288 = vmatprep.subr.mxu0 0.0
    %2289 = vmatpush1.msra.mxu0 %v2244
    %2290 = vmatprep.subr.mxu0 0.0
    %2291 = vmatpush2.msra.mxu0 0.0
    %2292 = vmatprep.subr.mxu0 0.0
    %2293 = vmatpush2.msra.mxu0 0.0
    %2294 = vmatprep.subr.mxu0 0.0
    %2295 = vmatpush2.msra.mxu0 0.0
    %2296 = vmatprep.subr.mxu0 0.0
    %2297 = vmatpush2.msra.mxu0 0.0
    %2298 = vmatprep.subr.mxu0 0.0
    %2299 = vmatpush2.msra.mxu0 0.0
    %2300 = vmatprep.subr.mxu0 0.0
    %2301 = vmatpush2.msra.mxu0 0.0
    %2302 = vmatprep.subr.mxu0 0.0
    %2303 = vmatpush2.msra.mxu0 0.0
    %2304 = vmatprep.subr.mxu0 0.0
    %2305 = vmatpush2.msra.mxu0 0.0
    %2306 = vmatprep.subr.mxu0 0.0
    %2307 = vmatpush2.msra.mxu0 0.0
    %2308 = vmatprep.subr.mxu0 0.0
    %2309 = vmatpush2.msra.mxu0 0.0
    %2310 = vmatprep.subr.mxu0 0.0
    %2311 = vmatpush2.msra.mxu0 0.0
    %2312 = vmatprep.subr.mxu0 0.0
    %2313 = vmatpush2.msra.mxu0 0.0
    %2314 = vmatprep.subr.mxu0 0.0
    %2315 = vmatpush2.msra.mxu0 0.0
    %2316 = vmatprep.subr.mxu0 0.0
    %2317 = vmatpush2.msra.mxu0 0.0
    %2318 = vmatprep.subr.mxu0 0.0
    %2319 = vmatpush2.msra.mxu0 0.0
    %2320 = vmatprep.subr.mxu0 0.0
    %2321 = vmatpush2.msra.mxu0 0.0
    %2322 = vmatprep.mubr.f32.mxu0 0.0
    %2323 = vmatmul.mubr.f32.gmra.mxu0 %v2252
    %v2324 = vpop.f32.mrf.mxu0
    %v2325 = vadd.f32 0.0, %v2324
    %v2326 = vpop.f32.mrf.mxu0
    %2327 = vmatprep.mubr.f32.mxu0 0.0
    %2328 = vmatmul.mubr.f32.gmra.mxu0 %v2254
    %v2329 = vpop.f32.mrf.mxu0
    %v2330 = vadd.f32 0.0, %v2329
    %v2331 = vpop.f32.mrf.mxu0
    %2332 = vmatprep.mubr.f32.mxu0 0.0
    %2333 = vmatmul.mubr.f32.gmra.mxu0 %v2256
    %v2334 = vpop.f32.mrf.mxu0
    %v2335 = vadd.f32 0.0, %v2334
    %v2336 = vpop.f32.mrf.mxu0
    %2337 = vdwg.mxu0
    %v2338 = vadd.f32 %v2240, %v2325
    %v2339 = vadd.f32 %v2241, %v2330
    %v2340 = vadd.f32 %v2242, %v2335
    %s2341 = scalar_lea.vmem %s12, 56
    %v2342 = vld [vmem:[%s2341] sm:$0xff]
    %v2345 = vrot.slane %v1627, 6
    %v2346 = vrot.slane %v1632, 6
    %v2347 = vsel %vm1481, %v2345, %v2346
    %v2348 = vrot.slane %v1637, 6
    %v2349 = vsel %vm1481, %v2346, %v2348
    %v2350 = vsel %vm1663, %v2347, 0
    %v2352 = vsel %vm1663, %v2349, 0
    %v2354 = vsel %vm1663, %v2348, 0
    %2356 = vmatprep.subr.mxu0 0.0
    %2357 = vmatpush1.msra.mxu0 0.0
    %2358 = vmatprep.subr.mxu0 0.0
    %2359 = vmatpush1.msra.mxu0 0.0
    %2360 = vmatprep.subr.mxu0 0.0
    %2361 = vmatpush1.msra.mxu0 0.0
    %2362 = vmatprep.subr.mxu0 0.0
    %2363 = vmatpush1.msra.mxu0 0.0
    %2364 = vmatprep.subr.mxu0 0.0
    %2365 = vmatpush1.msra.mxu0 0.0
    %2366 = vmatprep.subr.mxu0 0.0
    %2367 = vmatpush1.msra.mxu0 0.0
    %2368 = vmatprep.subr.mxu0 0.0
    %2369 = vmatpush1.msra.mxu0 0.0
    %2370 = vmatprep.subr.mxu0 0.0
    %2371 = vmatpush1.msra.mxu0 0.0
    %2372 = vmatprep.subr.mxu0 0.0
    %2373 = vmatpush1.msra.mxu0 0.0
    %2374 = vmatprep.subr.mxu0 0.0
    %2375 = vmatpush1.msra.mxu0 0.0
    %2376 = vmatprep.subr.mxu0 0.0
    %2377 = vmatpush1.msra.mxu0 0.0
    %2378 = vmatprep.subr.mxu0 0.0
    %2379 = vmatpush1.msra.mxu0 0.0
    %2380 = vmatprep.subr.mxu0 0.0
    %2381 = vmatpush1.msra.mxu0 0.0
    %2382 = vmatprep.subr.mxu0 0.0
    %2383 = vmatpush1.msra.mxu0 0.0
    %2384 = vmatprep.subr.mxu0 0.0
    %2385 = vmatpush1.msra.mxu0 0.0
    %2386 = vmatprep.subr.mxu0 0.0
    %2387 = vmatpush1.msra.mxu0 %v2342
    %2388 = vmatprep.subr.mxu0 0.0
    %2389 = vmatpush2.msra.mxu0 0.0
    %2390 = vmatprep.subr.mxu0 0.0
    %2391 = vmatpush2.msra.mxu0 0.0
    %2392 = vmatprep.subr.mxu0 0.0
    %2393 = vmatpush2.msra.mxu0 0.0
    %2394 = vmatprep.subr.mxu0 0.0
    %2395 = vmatpush2.msra.mxu0 0.0
    %2396 = vmatprep.subr.mxu0 0.0
    %2397 = vmatpush2.msra.mxu0 0.0
    %2398 = vmatprep.subr.mxu0 0.0
    %2399 = vmatpush2.msra.mxu0 0.0
    %2400 = vmatprep.subr.mxu0 0.0
    %2401 = vmatpush2.msra.mxu0 0.0
    %2402 = vmatprep.subr.mxu0 0.0
    %2403 = vmatpush2.msra.mxu0 0.0
    %2404 = vmatprep.subr.mxu0 0.0
    %2405 = vmatpush2.msra.mxu0 0.0
    %2406 = vmatprep.subr.mxu0 0.0
    %2407 = vmatpush2.msra.mxu0 0.0
    %2408 = vmatprep.subr.mxu0 0.0
    %2409 = vmatpush2.msra.mxu0 0.0
    %2410 = vmatprep.subr.mxu0 0.0
    %2411 = vmatpush2.msra.mxu0 0.0
    %2412 = vmatprep.subr.mxu0 0.0
    %2413 = vmatpush2.msra.mxu0 0.0
    %2414 = vmatprep.subr.mxu0 0.0
    %2415 = vmatpush2.msra.mxu0 0.0
    %2416 = vmatprep.subr.mxu0 0.0
    %2417 = vmatpush2.msra.mxu0 0.0
    %2418 = vmatprep.subr.mxu0 0.0
    %2419 = vmatpush2.msra.mxu0 0.0
    %2420 = vmatprep.mubr.f32.mxu0 0.0
    %2421 = vmatmul.mubr.f32.gmra.mxu0 %v2350
    %v2422 = vpop.f32.mrf.mxu0
    %v2423 = vadd.f32 0.0, %v2422
    %v2424 = vpop.f32.mrf.mxu0
    %2425 = vmatprep.mubr.f32.mxu0 0.0
    %2426 = vmatmul.mubr.f32.gmra.mxu0 %v2352
    %v2427 = vpop.f32.mrf.mxu0
    %v2428 = vadd.f32 0.0, %v2427
    %v2429 = vpop.f32.mrf.mxu0
    %2430 = vmatprep.mubr.f32.mxu0 0.0
    %2431 = vmatmul.mubr.f32.gmra.mxu0 %v2354
    %v2432 = vpop.f32.mrf.mxu0
    %v2433 = vadd.f32 0.0, %v2432
    %v2434 = vpop.f32.mrf.mxu0
    %2435 = vdwg.mxu0
    %v2436 = vadd.f32 %v2338, %v2423
    %v2437 = vadd.f32 %v2339, %v2428
    %v2438 = vadd.f32 %v2340, %v2433
    %s2439 = scalar_lea.vmem %s12, 64
    %v2440 = vld [vmem:[%s2439] sm:$0xff]
    %v2442 = vsel %vm1663, %v1642, 0
    %v2445 = vsel %vm1663, %v1647, 0
    %v2448 = vsel %vm1663, %v1652, 0
    %2450 = vmatprep.subr.mxu0 0.0
    %2451 = vmatpush1.msra.mxu0 0.0
    %2452 = vmatprep.subr.mxu0 0.0
    %2453 = vmatpush1.msra.mxu0 0.0
    %2454 = vmatprep.subr.mxu0 0.0
    %2455 = vmatpush1.msra.mxu0 0.0
    %2456 = vmatprep.subr.mxu0 0.0
    %2457 = vmatpush1.msra.mxu0 0.0
    %2458 = vmatprep.subr.mxu0 0.0
    %2459 = vmatpush1.msra.mxu0 0.0
    %2460 = vmatprep.subr.mxu0 0.0
    %2461 = vmatpush1.msra.mxu0 0.0
    %2462 = vmatprep.subr.mxu0 0.0
    %2463 = vmatpush1.msra.mxu0 0.0
    %2464 = vmatprep.subr.mxu0 0.0
    %2465 = vmatpush1.msra.mxu0 0.0
    %2466 = vmatprep.subr.mxu0 0.0
    %2467 = vmatpush1.msra.mxu0 0.0
    %2468 = vmatprep.subr.mxu0 0.0
    %2469 = vmatpush1.msra.mxu0 0.0
    %2470 = vmatprep.subr.mxu0 0.0
    %2471 = vmatpush1.msra.mxu0 0.0
    %2472 = vmatprep.subr.mxu0 0.0
    %2473 = vmatpush1.msra.mxu0 0.0
    %2474 = vmatprep.subr.mxu0 0.0
    %2475 = vmatpush1.msra.mxu0 0.0
    %2476 = vmatprep.subr.mxu0 0.0
    %2477 = vmatpush1.msra.mxu0 0.0
    %2478 = vmatprep.subr.mxu0 0.0
    %2479 = vmatpush1.msra.mxu0 0.0
    %2480 = vmatprep.subr.mxu0 0.0
    %2481 = vmatpush1.msra.mxu0 %v2440
    %2482 = vmatprep.subr.mxu0 0.0
    %2483 = vmatpush2.msra.mxu0 0.0
    %2484 = vmatprep.subr.mxu0 0.0
    %2485 = vmatpush2.msra.mxu0 0.0
    %2486 = vmatprep.subr.mxu0 0.0
    %2487 = vmatpush2.msra.mxu0 0.0
    %2488 = vmatprep.subr.mxu0 0.0
    %2489 = vmatpush2.msra.mxu0 0.0
    %2490 = vmatprep.subr.mxu0 0.0
    %2491 = vmatpush2.msra.mxu0 0.0
    %2492 = vmatprep.subr.mxu0 0.0
    %2493 = vmatpush2.msra.mxu0 0.0
    %2494 = vmatprep.subr.mxu0 0.0
    %2495 = vmatpush2.msra.mxu0 0.0
    %2496 = vmatprep.subr.mxu0 0.0
    %2497 = vmatpush2.msra.mxu0 0.0
    %2498 = vmatprep.subr.mxu0 0.0
    %2499 = vmatpush2.msra.mxu0 0.0
    %2500 = vmatprep.subr.mxu0 0.0
    %2501 = vmatpush2.msra.mxu0 0.0
    %2502 = vmatprep.subr.mxu0 0.0
    %2503 = vmatpush2.msra.mxu0 0.0
    %2504 = vmatprep.subr.mxu0 0.0
    %2505 = vmatpush2.msra.mxu0 0.0
    %2506 = vmatprep.subr.mxu0 0.0
    %2507 = vmatpush2.msra.mxu0 0.0
    %2508 = vmatprep.subr.mxu0 0.0
    %2509 = vmatpush2.msra.mxu0 0.0
    %2510 = vmatprep.subr.mxu0 0.0
    %2511 = vmatpush2.msra.mxu0 0.0
    %2512 = vmatprep.subr.mxu0 0.0
    %2513 = vmatpush2.msra.mxu0 0.0
    %2514 = vmatprep.mubr.f32.mxu0 0.0
    %2515 = vmatmul.mubr.f32.gmra.mxu0 %v2442
    %v2516 = vpop.f32.mrf.mxu0
    %v2517 = vadd.f32 0.0, %v2516
    %v2518 = vpop.f32.mrf.mxu0
    %2519 = vmatprep.mubr.f32.mxu0 0.0
    %2520 = vmatmul.mubr.f32.gmra.mxu0 %v2445
    %v2521 = vpop.f32.mrf.mxu0
    %v2522 = vadd.f32 0.0, %v2521
    %v2523 = vpop.f32.mrf.mxu0
    %2524 = vmatprep.mubr.f32.mxu0 0.0
    %2525 = vmatmul.mubr.f32.gmra.mxu0 %v2448
    %v2526 = vpop.f32.mrf.mxu0
    %v2527 = vadd.f32 0.0, %v2526
    %v2528 = vpop.f32.mrf.mxu0
    %2529 = vdwg.mxu0
    %v2530 = vadd.f32 %v2436, %v2517
    %v2531 = vadd.f32 %v2437, %v2522
    %v2532 = vadd.f32 %v2438, %v2527
    %v2533 = vmax.f32 %v2530, 0.0
    %v2534 = vmax.f32 %v2531, 0.0
    %v2535 = vmax.f32 %v2532, 0.0
    %v2536 = vld [vmem:[%s15] sm:$0x1]
    %v2538 = vlaneseq
    %v2539 = vshrl.u32 %v2538, 7
    %v2540 = vsub.s32 0, %v2539
    %v2541 = vrot.slane %v2536, %v2540
    %v2543 = vld [vmem:[%s14] sm:$0xff]
    %v2544 = vld [vmem:[%s14 + $0x8] sm:$0xff]
    %v2546 = vsel %vm83, %v2533, 0
    %2548 = vmatprep.subr.mxu0 0.0
    %2549 = vmatpush1.msra.mxu0 0.0
    %2550 = vmatprep.subr.mxu0 0.0
    %2551 = vmatpush1.msra.mxu0 0.0
    %2552 = vmatprep.subr.mxu0 0.0
    %2553 = vmatpush1.msra.mxu0 0.0
    %2554 = vmatprep.subr.mxu0 0.0
    %2555 = vmatpush1.msra.mxu0 0.0
    %2556 = vmatprep.subr.mxu0 0.0
    %2557 = vmatpush1.msra.mxu0 0.0
    %2558 = vmatprep.subr.mxu0 0.0
    %2559 = vmatpush1.msra.mxu0 0.0
    %2560 = vmatprep.subr.mxu0 0.0
    %2561 = vmatpush1.msra.mxu0 0.0
    %2562 = vmatprep.subr.mxu0 0.0
    %2563 = vmatpush1.msra.mxu0 0.0
    %2564 = vmatprep.subr.mxu0 0.0
    %2565 = vmatpush1.msra.mxu0 0.0
    %2566 = vmatprep.subr.mxu0 0.0
    %2567 = vmatpush1.msra.mxu0 0.0
    %2568 = vmatprep.subr.mxu0 0.0
    %2569 = vmatpush1.msra.mxu0 0.0
    %2570 = vmatprep.subr.mxu0 0.0
    %2571 = vmatpush1.msra.mxu0 0.0
    %2572 = vmatprep.subr.mxu0 0.0
    %2573 = vmatpush1.msra.mxu0 0.0
    %2574 = vmatprep.subr.mxu0 0.0
    %2575 = vmatpush1.msra.mxu0 0.0
    %2576 = vmatprep.subr.mxu0 0.0
    %2577 = vmatpush1.msra.mxu0 %v2544
    %2578 = vmatprep.subr.mxu0 0.0
    %2579 = vmatpush1.msra.mxu0 %v2543
    %2580 = vmatprep.subr.mxu0 0.0
    %2581 = vmatpush2.msra.mxu0 0.0
    %2582 = vmatprep.subr.mxu0 0.0
    %2583 = vmatpush2.msra.mxu0 0.0
    %2584 = vmatprep.subr.mxu0 0.0
    %2585 = vmatpush2.msra.mxu0 0.0
    %2586 = vmatprep.subr.mxu0 0.0
    %2587 = vmatpush2.msra.mxu0 0.0
    %2588 = vmatprep.subr.mxu0 0.0
    %2589 = vmatpush2.msra.mxu0 0.0
    %2590 = vmatprep.subr.mxu0 0.0
    %2591 = vmatpush2.msra.mxu0 0.0
    %2592 = vmatprep.subr.mxu0 0.0
    %2593 = vmatpush2.msra.mxu0 0.0
    %2594 = vmatprep.subr.mxu0 0.0
    %2595 = vmatpush2.msra.mxu0 0.0
    %2596 = vmatprep.subr.mxu0 0.0
    %2597 = vmatpush2.msra.mxu0 0.0
    %2598 = vmatprep.subr.mxu0 0.0
    %2599 = vmatpush2.msra.mxu0 0.0
    %2600 = vmatprep.subr.mxu0 0.0
    %2601 = vmatpush2.msra.mxu0 0.0
    %2602 = vmatprep.subr.mxu0 0.0
    %2603 = vmatpush2.msra.mxu0 0.0
    %2604 = vmatprep.subr.mxu0 0.0
    %2605 = vmatpush2.msra.mxu0 0.0
    %2606 = vmatprep.subr.mxu0 0.0
    %2607 = vmatpush2.msra.mxu0 0.0
    %2608 = vmatprep.subr.mxu0 0.0
    %2609 = vmatpush2.msra.mxu0 0.0
    %2610 = vmatprep.subr.mxu0 0.0
    %2611 = vmatpush2.msra.mxu0 0.0
    %2612 = vmatprep.mubr.f32.mxu0 0.0
    %2613 = vmatmul.mubr.f32.gmra.mxu0 %v2546
    %v2614 = vpop.f32.mrf.mxu0
    %v2615 = vadd.f32 0.0, %v2614
    %v2616 = vpop.f32.mrf.mxu0
    %2617 = vdwg.mxu0
    %v2618 = vadd.f32 %v2541, %v2615
    %s2619 = scalar_lea.vmem %s14, 16
    %v2620 = vld [vmem:[%s2619] sm:$0xff]
    %v2621 = vld [vmem:[%s2619 + $0x8] sm:$0xff]
    %v2622 = vrot.slane %v2533, 2
    %v2623 = vsel %vm83, %v2622, 0
    %2625 = vmatprep.subr.mxu0 0.0
    %2626 = vmatpush1.msra.mxu0 0.0
    %2627 = vmatprep.subr.mxu0 0.0
    %2628 = vmatpush1.msra.mxu0 0.0
    %2629 = vmatprep.subr.mxu0 0.0
    %2630 = vmatpush1.msra.mxu0 0.0
    %2631 = vmatprep.subr.mxu0 0.0
    %2632 = vmatpush1.msra.mxu0 0.0
    %2633 = vmatprep.subr.mxu0 0.0
    %2634 = vmatpush1.msra.mxu0 0.0
    %2635 = vmatprep.subr.mxu0 0.0
    %2636 = vmatpush1.msra.mxu0 0.0
    %2637 = vmatprep.subr.mxu0 0.0
    %2638 = vmatpush1.msra.mxu0 0.0
    %2639 = vmatprep.subr.mxu0 0.0
    %2640 = vmatpush1.msra.mxu0 0.0
    %2641 = vmatprep.subr.mxu0 0.0
    %2642 = vmatpush1.msra.mxu0 0.0
    %2643 = vmatprep.subr.mxu0 0.0
    %2644 = vmatpush1.msra.mxu0 0.0
    %2645 = vmatprep.subr.mxu0 0.0
    %2646 = vmatpush1.msra.mxu0 0.0
    %2647 = vmatprep.subr.mxu0 0.0
    %2648 = vmatpush1.msra.mxu0 0.0
    %2649 = vmatprep.subr.mxu0 0.0
    %2650 = vmatpush1.msra.mxu0 0.0
    %2651 = vmatprep.subr.mxu0 0.0
    %2652 = vmatpush1.msra.mxu0 0.0
    %2653 = vmatprep.subr.mxu0 0.0
    %2654 = vmatpush1.msra.mxu0 %v2621
    %2655 = vmatprep.subr.mxu0 0.0
    %2656 = vmatpush1.msra.mxu0 %v2620
    %2657 = vmatprep.subr.mxu0 0.0
    %2658 = vmatpush2.msra.mxu0 0.0
    %2659 = vmatprep.subr.mxu0 0.0
    %2660 = vmatpush2.msra.mxu0 0.0
    %2661 = vmatprep.subr.mxu0 0.0
    %2662 = vmatpush2.msra.mxu0 0.0
    %2663 = vmatprep.subr.mxu0 0.0
    %2664 = vmatpush2.msra.mxu0 0.0
    %2665 = vmatprep.subr.mxu0 0.0
    %2666 = vmatpush2.msra.mxu0 0.0
    %2667 = vmatprep.subr.mxu0 0.0
    %2668 = vmatpush2.msra.mxu0 0.0
    %2669 = vmatprep.subr.mxu0 0.0
    %2670 = vmatpush2.msra.mxu0 0.0
    %2671 = vmatprep.subr.mxu0 0.0
    %2672 = vmatpush2.msra.mxu0 0.0
    %2673 = vmatprep.subr.mxu0 0.0
    %2674 = vmatpush2.msra.mxu0 0.0
    %2675 = vmatprep.subr.mxu0 0.0
    %2676 = vmatpush2.msra.mxu0 0.0
    %2677 = vmatprep.subr.mxu0 0.0
    %2678 = vmatpush2.msra.mxu0 0.0
    %2679 = vmatprep.subr.mxu0 0.0
    %2680 = vmatpush2.msra.mxu0 0.0
    %2681 = vmatprep.subr.mxu0 0.0
    %2682 = vmatpush2.msra.mxu0 0.0
    %2683 = vmatprep.subr.mxu0 0.0
    %2684 = vmatpush2.msra.mxu0 0.0
    %2685 = vmatprep.subr.mxu0 0.0
    %2686 = vmatpush2.msra.mxu0 0.0
    %2687 = vmatprep.subr.mxu0 0.0
    %2688 = vmatpush2.msra.mxu0 0.0
    %2689 = vmatprep.mubr.f32.mxu0 0.0
    %2690 = vmatmul.mubr.f32.gmra.mxu0 %v2623
    %v2691 = vpop.f32.mrf.mxu0
    %v2692 = vadd.f32 0.0, %v2691
    %v2693 = vpop.f32.mrf.mxu0
    %2694 = vdwg.mxu0
    %v2695 = vadd.f32 %v2618, %v2692
    %s2696 = scalar_lea.vmem %s14, 32
    %v2697 = vld [vmem:[%s2696] sm:$0xff]
    %v2698 = vld [vmem:[%s2696 + $0x8] sm:$0xff]
    %v2699 = vrot.slane %v2533, 4
    %v2700 = vsel %vm83, %v2699, 0
    %2702 = vmatprep.subr.mxu0 0.0
    %2703 = vmatpush1.msra.mxu0 0.0
    %2704 = vmatprep.subr.mxu0 0.0
    %2705 = vmatpush1.msra.mxu0 0.0
    %2706 = vmatprep.subr.mxu0 0.0
    %2707 = vmatpush1.msra.mxu0 0.0
    %2708 = vmatprep.subr.mxu0 0.0
    %2709 = vmatpush1.msra.mxu0 0.0
    %2710 = vmatprep.subr.mxu0 0.0
    %2711 = vmatpush1.msra.mxu0 0.0
    %2712 = vmatprep.subr.mxu0 0.0
    %2713 = vmatpush1.msra.mxu0 0.0
    %2714 = vmatprep.subr.mxu0 0.0
    %2715 = vmatpush1.msra.mxu0 0.0
    %2716 = vmatprep.subr.mxu0 0.0
    %2717 = vmatpush1.msra.mxu0 0.0
    %2718 = vmatprep.subr.mxu0 0.0
    %2719 = vmatpush1.msra.mxu0 0.0
    %2720 = vmatprep.subr.mxu0 0.0
    %2721 = vmatpush1.msra.mxu0 0.0
    %2722 = vmatprep.subr.mxu0 0.0
    %2723 = vmatpush1.msra.mxu0 0.0
    %2724 = vmatprep.subr.mxu0 0.0
    %2725 = vmatpush1.msra.mxu0 0.0
    %2726 = vmatprep.subr.mxu0 0.0
    %2727 = vmatpush1.msra.mxu0 0.0
    %2728 = vmatprep.subr.mxu0 0.0
    %2729 = vmatpush1.msra.mxu0 0.0
    %2730 = vmatprep.subr.mxu0 0.0
    %2731 = vmatpush1.msra.mxu0 %v2698
    %2732 = vmatprep.subr.mxu0 0.0
    %2733 = vmatpush1.msra.mxu0 %v2697
    %2734 = vmatprep.subr.mxu0 0.0
    %2735 = vmatpush2.msra.mxu0 0.0
    %2736 = vmatprep.subr.mxu0 0.0
    %2737 = vmatpush2.msra.mxu0 0.0
    %2738 = vmatprep.subr.mxu0 0.0
    %2739 = vmatpush2.msra.mxu0 0.0
    %2740 = vmatprep.subr.mxu0 0.0
    %2741 = vmatpush2.msra.mxu0 0.0
    %2742 = vmatprep.subr.mxu0 0.0
    %2743 = vmatpush2.msra.mxu0 0.0
    %2744 = vmatprep.subr.mxu0 0.0
    %2745 = vmatpush2.msra.mxu0 0.0
    %2746 = vmatprep.subr.mxu0 0.0
    %2747 = vmatpush2.msra.mxu0 0.0
    %2748 = vmatprep.subr.mxu0 0.0
    %2749 = vmatpush2.msra.mxu0 0.0
    %2750 = vmatprep.subr.mxu0 0.0
    %2751 = vmatpush2.msra.mxu0 0.0
    %2752 = vmatprep.subr.mxu0 0.0
    %2753 = vmatpush2.msra.mxu0 0.0
    %2754 = vmatprep.subr.mxu0 0.0
    %2755 = vmatpush2.msra.mxu0 0.0
    %2756 = vmatprep.subr.mxu0 0.0
    %2757 = vmatpush2.msra.mxu0 0.0
    %2758 = vmatprep.subr.mxu0 0.0
    %2759 = vmatpush2.msra.mxu0 0.0
    %2760 = vmatprep.subr.mxu0 0.0
    %2761 = vmatpush2.msra.mxu0 0.0
    %2762 = vmatprep.subr.mxu0 0.0
    %2763 = vmatpush2.msra.mxu0 0.0
    %2764 = vmatprep.subr.mxu0 0.0
    %2765 = vmatpush2.msra.mxu0 0.0
    %2766 = vmatprep.mubr.f32.mxu0 0.0
    %2767 = vmatmul.mubr.f32.gmra.mxu0 %v2700
    %v2768 = vpop.f32.mrf.mxu0
    %v2769 = vadd.f32 0.0, %v2768
    %v2770 = vpop.f32.mrf.mxu0
    %2771 = vdwg.mxu0
    %v2772 = vadd.f32 %v2695, %v2769
    %s2773 = scalar_lea.vmem %s14, 48
    %v2774 = vld [vmem:[%s2773] sm:$0xff]
    %v2775 = vld [vmem:[%s2773 + $0x8] sm:$0xff]
    %v2776 = vrot.slane %v2533, 6
    %v2777 = vsel %vm83, %v2776, 0
    %2779 = vmatprep.subr.mxu0 0.0
    %2780 = vmatpush1.msra.mxu0 0.0
    %2781 = vmatprep.subr.mxu0 0.0
    %2782 = vmatpush1.msra.mxu0 0.0
    %2783 = vmatprep.subr.mxu0 0.0
    %2784 = vmatpush1.msra.mxu0 0.0
    %2785 = vmatprep.subr.mxu0 0.0
    %2786 = vmatpush1.msra.mxu0 0.0
    %2787 = vmatprep.subr.mxu0 0.0
    %2788 = vmatpush1.msra.mxu0 0.0
    %2789 = vmatprep.subr.mxu0 0.0
    %2790 = vmatpush1.msra.mxu0 0.0
    %2791 = vmatprep.subr.mxu0 0.0
    %2792 = vmatpush1.msra.mxu0 0.0
    %2793 = vmatprep.subr.mxu0 0.0
    %2794 = vmatpush1.msra.mxu0 0.0
    %2795 = vmatprep.subr.mxu0 0.0
    %2796 = vmatpush1.msra.mxu0 0.0
    %2797 = vmatprep.subr.mxu0 0.0
    %2798 = vmatpush1.msra.mxu0 0.0
    %2799 = vmatprep.subr.mxu0 0.0
    %2800 = vmatpush1.msra.mxu0 0.0
    %2801 = vmatprep.subr.mxu0 0.0
    %2802 = vmatpush1.msra.mxu0 0.0
    %2803 = vmatprep.subr.mxu0 0.0
    %2804 = vmatpush1.msra.mxu0 0.0
    %2805 = vmatprep.subr.mxu0 0.0
    %2806 = vmatpush1.msra.mxu0 0.0
    %2807 = vmatprep.subr.mxu0 0.0
    %2808 = vmatpush1.msra.mxu0 %v2775
    %2809 = vmatprep.subr.mxu0 0.0
    %2810 = vmatpush1.msra.mxu0 %v2774
    %2811 = vmatprep.subr.mxu0 0.0
    %2812 = vmatpush2.msra.mxu0 0.0
    %2813 = vmatprep.subr.mxu0 0.0
    %2814 = vmatpush2.msra.mxu0 0.0
    %2815 = vmatprep.subr.mxu0 0.0
    %2816 = vmatpush2.msra.mxu0 0.0
    %2817 = vmatprep.subr.mxu0 0.0
    %2818 = vmatpush2.msra.mxu0 0.0
    %2819 = vmatprep.subr.mxu0 0.0
    %2820 = vmatpush2.msra.mxu0 0.0
    %2821 = vmatprep.subr.mxu0 0.0
    %2822 = vmatpush2.msra.mxu0 0.0
    %2823 = vmatprep.subr.mxu0 0.0
    %2824 = vmatpush2.msra.mxu0 0.0
    %2825 = vmatprep.subr.mxu0 0.0
    %2826 = vmatpush2.msra.mxu0 0.0
    %2827 = vmatprep.subr.mxu0 0.0
    %2828 = vmatpush2.msra.mxu0 0.0
    %2829 = vmatprep.subr.mxu0 0.0
    %2830 = vmatpush2.msra.mxu0 0.0
    %2831 = vmatprep.subr.mxu0 0.0
    %2832 = vmatpush2.msra.mxu0 0.0
    %2833 = vmatprep.subr.mxu0 0.0
    %2834 = vmatpush2.msra.mxu0 0.0
    %2835 = vmatprep.subr.mxu0 0.0
    %2836 = vmatpush2.msra.mxu0 0.0
    %2837 = vmatprep.subr.mxu0 0.0
    %2838 = vmatpush2.msra.mxu0 0.0
    %2839 = vmatprep.subr.mxu0 0.0
    %2840 = vmatpush2.msra.mxu0 0.0
    %2841 = vmatprep.subr.mxu0 0.0
    %2842 = vmatpush2.msra.mxu0 0.0
    %2843 = vmatprep.mubr.f32.mxu0 0.0
    %2844 = vmatmul.mubr.f32.gmra.mxu0 %v2777
    %v2845 = vpop.f32.mrf.mxu0
    %v2846 = vadd.f32 0.0, %v2845
    %v2847 = vpop.f32.mrf.mxu0
    %2848 = vdwg.mxu0
    %v2849 = vadd.f32 %v2772, %v2846
    %s2850 = scalar_lea.vmem %s14, 64
    %v2851 = vld [vmem:[%s2850] sm:$0xff]
    %v2852 = vld [vmem:[%s2850 + $0x8] sm:$0xff]
    %v2854 = vsel %vm83, %v2534, 0
    %2856 = vmatprep.subr.mxu0 0.0
    %2857 = vmatpush1.msra.mxu0 0.0
    %2858 = vmatprep.subr.mxu0 0.0
    %2859 = vmatpush1.msra.mxu0 0.0
    %2860 = vmatprep.subr.mxu0 0.0
    %2861 = vmatpush1.msra.mxu0 0.0
    %2862 = vmatprep.subr.mxu0 0.0
    %2863 = vmatpush1.msra.mxu0 0.0
    %2864 = vmatprep.subr.mxu0 0.0
    %2865 = vmatpush1.msra.mxu0 0.0
    %2866 = vmatprep.subr.mxu0 0.0
    %2867 = vmatpush1.msra.mxu0 0.0
    %2868 = vmatprep.subr.mxu0 0.0
    %2869 = vmatpush1.msra.mxu0 0.0
    %2870 = vmatprep.subr.mxu0 0.0
    %2871 = vmatpush1.msra.mxu0 0.0
    %2872 = vmatprep.subr.mxu0 0.0
    %2873 = vmatpush1.msra.mxu0 0.0
    %2874 = vmatprep.subr.mxu0 0.0
    %2875 = vmatpush1.msra.mxu0 0.0
    %2876 = vmatprep.subr.mxu0 0.0
    %2877 = vmatpush1.msra.mxu0 0.0
    %2878 = vmatprep.subr.mxu0 0.0
    %2879 = vmatpush1.msra.mxu0 0.0
    %2880 = vmatprep.subr.mxu0 0.0
    %2881 = vmatpush1.msra.mxu0 0.0
    %2882 = vmatprep.subr.mxu0 0.0
    %2883 = vmatpush1.msra.mxu0 0.0
    %2884 = vmatprep.subr.mxu0 0.0
    %2885 = vmatpush1.msra.mxu0 %v2852
    %2886 = vmatprep.subr.mxu0 0.0
    %2887 = vmatpush1.msra.mxu0 %v2851
    %2888 = vmatprep.subr.mxu0 0.0
    %2889 = vmatpush2.msra.mxu0 0.0
    %2890 = vmatprep.subr.mxu0 0.0
    %2891 = vmatpush2.msra.mxu0 0.0
    %2892 = vmatprep.subr.mxu0 0.0
    %2893 = vmatpush2.msra.mxu0 0.0
    %2894 = vmatprep.subr.mxu0 0.0
    %2895 = vmatpush2.msra.mxu0 0.0
    %2896 = vmatprep.subr.mxu0 0.0
    %2897 = vmatpush2.msra.mxu0 0.0
    %2898 = vmatprep.subr.mxu0 0.0
    %2899 = vmatpush2.msra.mxu0 0.0
    %2900 = vmatprep.subr.mxu0 0.0
    %2901 = vmatpush2.msra.mxu0 0.0
    %2902 = vmatprep.subr.mxu0 0.0
    %2903 = vmatpush2.msra.mxu0 0.0
    %2904 = vmatprep.subr.mxu0 0.0
    %2905 = vmatpush2.msra.mxu0 0.0
    %2906 = vmatprep.subr.mxu0 0.0
    %2907 = vmatpush2.msra.mxu0 0.0
    %2908 = vmatprep.subr.mxu0 0.0
    %2909 = vmatpush2.msra.mxu0 0.0
    %2910 = vmatprep.subr.mxu0 0.0
    %2911 = vmatpush2.msra.mxu0 0.0
    %2912 = vmatprep.subr.mxu0 0.0
    %2913 = vmatpush2.msra.mxu0 0.0
    %2914 = vmatprep.subr.mxu0 0.0
    %2915 = vmatpush2.msra.mxu0 0.0
    %2916 = vmatprep.subr.mxu0 0.0
    %2917 = vmatpush2.msra.mxu0 0.0
    %2918 = vmatprep.subr.mxu0 0.0
    %2919 = vmatpush2.msra.mxu0 0.0
    %2920 = vmatprep.mubr.f32.mxu0 0.0
    %2921 = vmatmul.mubr.f32.gmra.mxu0 %v2854
    %v2922 = vpop.f32.mrf.mxu0
    %v2923 = vadd.f32 0.0, %v2922
    %v2924 = vpop.f32.mrf.mxu0
    %2925 = vdwg.mxu0
    %v2926 = vadd.f32 %v2849, %v2923
    %s2927 = scalar_lea.vmem %s14, 80
    %v2928 = vld [vmem:[%s2927] sm:$0xff]
    %v2929 = vld [vmem:[%s2927 + $0x8] sm:$0xff]
    %v2930 = vrot.slane %v2534, 2
    %v2931 = vsel %vm83, %v2930, 0
    %2933 = vmatprep.subr.mxu0 0.0
    %2934 = vmatpush1.msra.mxu0 0.0
    %2935 = vmatprep.subr.mxu0 0.0
    %2936 = vmatpush1.msra.mxu0 0.0
    %2937 = vmatprep.subr.mxu0 0.0
    %2938 = vmatpush1.msra.mxu0 0.0
    %2939 = vmatprep.subr.mxu0 0.0
    %2940 = vmatpush1.msra.mxu0 0.0
    %2941 = vmatprep.subr.mxu0 0.0
    %2942 = vmatpush1.msra.mxu0 0.0
    %2943 = vmatprep.subr.mxu0 0.0
    %2944 = vmatpush1.msra.mxu0 0.0
    %2945 = vmatprep.subr.mxu0 0.0
    %2946 = vmatpush1.msra.mxu0 0.0
    %2947 = vmatprep.subr.mxu0 0.0
    %2948 = vmatpush1.msra.mxu0 0.0
    %2949 = vmatprep.subr.mxu0 0.0
    %2950 = vmatpush1.msra.mxu0 0.0
    %2951 = vmatprep.subr.mxu0 0.0
    %2952 = vmatpush1.msra.mxu0 0.0
    %2953 = vmatprep.subr.mxu0 0.0
    %2954 = vmatpush1.msra.mxu0 0.0
    %2955 = vmatprep.subr.mxu0 0.0
    %2956 = vmatpush1.msra.mxu0 0.0
    %2957 = vmatprep.subr.mxu0 0.0
    %2958 = vmatpush1.msra.mxu0 0.0
    %2959 = vmatprep.subr.mxu0 0.0
    %2960 = vmatpush1.msra.mxu0 0.0
    %2961 = vmatprep.subr.mxu0 0.0
    %2962 = vmatpush1.msra.mxu0 %v2929
    %2963 = vmatprep.subr.mxu0 0.0
    %2964 = vmatpush1.msra.mxu0 %v2928
    %2965 = vmatprep.subr.mxu0 0.0
    %2966 = vmatpush2.msra.mxu0 0.0
    %2967 = vmatprep.subr.mxu0 0.0
    %2968 = vmatpush2.msra.mxu0 0.0
    %2969 = vmatprep.subr.mxu0 0.0
    %2970 = vmatpush2.msra.mxu0 0.0
    %2971 = vmatprep.subr.mxu0 0.0
    %2972 = vmatpush2.msra.mxu0 0.0
    %2973 = vmatprep.subr.mxu0 0.0
    %2974 = vmatpush2.msra.mxu0 0.0
    %2975 = vmatprep.subr.mxu0 0.0
    %2976 = vmatpush2.msra.mxu0 0.0
    %2977 = vmatprep.subr.mxu0 0.0
    %2978 = vmatpush2.msra.mxu0 0.0
    %2979 = vmatprep.subr.mxu0 0.0
    %2980 = vmatpush2.msra.mxu0 0.0
    %2981 = vmatprep.subr.mxu0 0.0
    %2982 = vmatpush2.msra.mxu0 0.0
    %2983 = vmatprep.subr.mxu0 0.0
    %2984 = vmatpush2.msra.mxu0 0.0
    %2985 = vmatprep.subr.mxu0 0.0
    %2986 = vmatpush2.msra.mxu0 0.0
    %2987 = vmatprep.subr.mxu0 0.0
    %2988 = vmatpush2.msra.mxu0 0.0
    %2989 = vmatprep.subr.mxu0 0.0
    %2990 = vmatpush2.msra.mxu0 0.0
    %2991 = vmatprep.subr.mxu0 0.0
    %2992 = vmatpush2.msra.mxu0 0.0
    %2993 = vmatprep.subr.mxu0 0.0
    %2994 = vmatpush2.msra.mxu0 0.0
    %2995 = vmatprep.subr.mxu0 0.0
    %2996 = vmatpush2.msra.mxu0 0.0
    %2997 = vmatprep.mubr.f32.mxu0 0.0
    %2998 = vmatmul.mubr.f32.gmra.mxu0 %v2931
    %v2999 = vpop.f32.mrf.mxu0
    %v3000 = vadd.f32 0.0, %v2999
    %v3001 = vpop.f32.mrf.mxu0
    %3002 = vdwg.mxu0
    %v3003 = vadd.f32 %v2926, %v3000
    %s3004 = scalar_lea.vmem %s14, 96
    %v3005 = vld [vmem:[%s3004] sm:$0xff]
    %v3006 = vld [vmem:[%s3004 + $0x8] sm:$0xff]
    %v3007 = vrot.slane %v2534, 4
    %v3008 = vsel %vm83, %v3007, 0
    %3010 = vmatprep.subr.mxu0 0.0
    %3011 = vmatpush1.msra.mxu0 0.0
    %3012 = vmatprep.subr.mxu0 0.0
    %3013 = vmatpush1.msra.mxu0 0.0
    %3014 = vmatprep.subr.mxu0 0.0
    %3015 = vmatpush1.msra.mxu0 0.0
    %3016 = vmatprep.subr.mxu0 0.0
    %3017 = vmatpush1.msra.mxu0 0.0
    %3018 = vmatprep.subr.mxu0 0.0
    %3019 = vmatpush1.msra.mxu0 0.0
    %3020 = vmatprep.subr.mxu0 0.0
    %3021 = vmatpush1.msra.mxu0 0.0
    %3022 = vmatprep.subr.mxu0 0.0
    %3023 = vmatpush1.msra.mxu0 0.0
    %3024 = vmatprep.subr.mxu0 0.0
    %3025 = vmatpush1.msra.mxu0 0.0
    %3026 = vmatprep.subr.mxu0 0.0
    %3027 = vmatpush1.msra.mxu0 0.0
    %3028 = vmatprep.subr.mxu0 0.0
    %3029 = vmatpush1.msra.mxu0 0.0
    %3030 = vmatprep.subr.mxu0 0.0
    %3031 = vmatpush1.msra.mxu0 0.0
    %3032 = vmatprep.subr.mxu0 0.0
    %3033 = vmatpush1.msra.mxu0 0.0
    %3034 = vmatprep.subr.mxu0 0.0
    %3035 = vmatpush1.msra.mxu0 0.0
    %3036 = vmatprep.subr.mxu0 0.0
    %3037 = vmatpush1.msra.mxu0 0.0
    %3038 = vmatprep.subr.mxu0 0.0
    %3039 = vmatpush1.msra.mxu0 %v3006
    %3040 = vmatprep.subr.mxu0 0.0
    %3041 = vmatpush1.msra.mxu0 %v3005
    %3042 = vmatprep.subr.mxu0 0.0
    %3043 = vmatpush2.msra.mxu0 0.0
    %3044 = vmatprep.subr.mxu0 0.0
    %3045 = vmatpush2.msra.mxu0 0.0
    %3046 = vmatprep.subr.mxu0 0.0
    %3047 = vmatpush2.msra.mxu0 0.0
    %3048 = vmatprep.subr.mxu0 0.0
    %3049 = vmatpush2.msra.mxu0 0.0
    %3050 = vmatprep.subr.mxu0 0.0
    %3051 = vmatpush2.msra.mxu0 0.0
    %3052 = vmatprep.subr.mxu0 0.0
    %3053 = vmatpush2.msra.mxu0 0.0
    %3054 = vmatprep.subr.mxu0 0.0
    %3055 = vmatpush2.msra.mxu0 0.0
    %3056 = vmatprep.subr.mxu0 0.0
    %3057 = vmatpush2.msra.mxu0 0.0
    %3058 = vmatprep.subr.mxu0 0.0
    %3059 = vmatpush2.msra.mxu0 0.0
    %3060 = vmatprep.subr.mxu0 0.0
    %3061 = vmatpush2.msra.mxu0 0.0
    %3062 = vmatprep.subr.mxu0 0.0
    %3063 = vmatpush2.msra.mxu0 0.0
    %3064 = vmatprep.subr.mxu0 0.0
    %3065 = vmatpush2.msra.mxu0 0.0
    %3066 = vmatprep.subr.mxu0 0.0
    %3067 = vmatpush2.msra.mxu0 0.0
    %3068 = vmatprep.subr.mxu0 0.0
    %3069 = vmatpush2.msra.mxu0 0.0
    %3070 = vmatprep.subr.mxu0 0.0
    %3071 = vmatpush2.msra.mxu0 0.0
    %3072 = vmatprep.subr.mxu0 0.0
    %3073 = vmatpush2.msra.mxu0 0.0
    %3074 = vmatprep.mubr.f32.mxu0 0.0
    %3075 = vmatmul.mubr.f32.gmra.mxu0 %v3008
    %v3076 = vpop.f32.mrf.mxu0
    %v3077 = vadd.f32 0.0, %v3076
    %v3078 = vpop.f32.mrf.mxu0
    %3079 = vdwg.mxu0
    %v3080 = vadd.f32 %v3003, %v3077
    %s3081 = scalar_lea.vmem %s14, 112
    %v3082 = vld [vmem:[%s3081] sm:$0xff]
    %v3083 = vld [vmem:[%s3081 + $0x8] sm:$0xff]
    %v3084 = vrot.slane %v2534, 6
    %v3085 = vsel %vm83, %v3084, 0
    %3087 = vmatprep.subr.mxu0 0.0
    %3088 = vmatpush1.msra.mxu0 0.0
    %3089 = vmatprep.subr.mxu0 0.0
    %3090 = vmatpush1.msra.mxu0 0.0
    %3091 = vmatprep.subr.mxu0 0.0
    %3092 = vmatpush1.msra.mxu0 0.0
    %3093 = vmatprep.subr.mxu0 0.0
    %3094 = vmatpush1.msra.mxu0 0.0
    %3095 = vmatprep.subr.mxu0 0.0
    %3096 = vmatpush1.msra.mxu0 0.0
    %3097 = vmatprep.subr.mxu0 0.0
    %3098 = vmatpush1.msra.mxu0 0.0
    %3099 = vmatprep.subr.mxu0 0.0
    %3100 = vmatpush1.msra.mxu0 0.0
    %3101 = vmatprep.subr.mxu0 0.0
    %3102 = vmatpush1.msra.mxu0 0.0
    %3103 = vmatprep.subr.mxu0 0.0
    %3104 = vmatpush1.msra.mxu0 0.0
    %3105 = vmatprep.subr.mxu0 0.0
    %3106 = vmatpush1.msra.mxu0 0.0
    %3107 = vmatprep.subr.mxu0 0.0
    %3108 = vmatpush1.msra.mxu0 0.0
    %3109 = vmatprep.subr.mxu0 0.0
    %3110 = vmatpush1.msra.mxu0 0.0
    %3111 = vmatprep.subr.mxu0 0.0
    %3112 = vmatpush1.msra.mxu0 0.0
    %3113 = vmatprep.subr.mxu0 0.0
    %3114 = vmatpush1.msra.mxu0 0.0
    %3115 = vmatprep.subr.mxu0 0.0
    %3116 = vmatpush1.msra.mxu0 %v3083
    %3117 = vmatprep.subr.mxu0 0.0
    %3118 = vmatpush1.msra.mxu0 %v3082
    %3119 = vmatprep.subr.mxu0 0.0
    %3120 = vmatpush2.msra.mxu0 0.0
    %3121 = vmatprep.subr.mxu0 0.0
    %3122 = vmatpush2.msra.mxu0 0.0
    %3123 = vmatprep.subr.mxu0 0.0
    %3124 = vmatpush2.msra.mxu0 0.0
    %3125 = vmatprep.subr.mxu0 0.0
    %3126 = vmatpush2.msra.mxu0 0.0
    %3127 = vmatprep.subr.mxu0 0.0
    %3128 = vmatpush2.msra.mxu0 0.0
    %3129 = vmatprep.subr.mxu0 0.0
    %3130 = vmatpush2.msra.mxu0 0.0
    %3131 = vmatprep.subr.mxu0 0.0
    %3132 = vmatpush2.msra.mxu0 0.0
    %3133 = vmatprep.subr.mxu0 0.0
    %3134 = vmatpush2.msra.mxu0 0.0
    %3135 = vmatprep.subr.mxu0 0.0
    %3136 = vmatpush2.msra.mxu0 0.0
    %3137 = vmatprep.subr.mxu0 0.0
    %3138 = vmatpush2.msra.mxu0 0.0
    %3139 = vmatprep.subr.mxu0 0.0
    %3140 = vmatpush2.msra.mxu0 0.0
    %3141 = vmatprep.subr.mxu0 0.0
    %3142 = vmatpush2.msra.mxu0 0.0
    %3143 = vmatprep.subr.mxu0 0.0
    %3144 = vmatpush2.msra.mxu0 0.0
    %3145 = vmatprep.subr.mxu0 0.0
    %3146 = vmatpush2.msra.mxu0 0.0
    %3147 = vmatprep.subr.mxu0 0.0
    %3148 = vmatpush2.msra.mxu0 0.0
    %3149 = vmatprep.subr.mxu0 0.0
    %3150 = vmatpush2.msra.mxu0 0.0
    %3151 = vmatprep.mubr.f32.mxu0 0.0
    %3152 = vmatmul.mubr.f32.gmra.mxu0 %v3085
    %v3153 = vpop.f32.mrf.mxu0
    %v3154 = vadd.f32 0.0, %v3153
    %v3155 = vpop.f32.mrf.mxu0
    %3156 = vdwg.mxu0
    %v3157 = vadd.f32 %v3080, %v3154
    %s3158 = scalar_lea.vmem %s14, 128
    %v3159 = vld [vmem:[%s3158] sm:$0xff]
    %v3160 = vld [vmem:[%s3158 + $0x8] sm:$0xff]
    %v3162 = vsel %vm83, %v2535, 0
    %3164 = vmatprep.subr.mxu0 0.0
    %3165 = vmatpush1.msra.mxu0 0.0
    %3166 = vmatprep.subr.mxu0 0.0
    %3167 = vmatpush1.msra.mxu0 0.0
    %3168 = vmatprep.subr.mxu0 0.0
    %3169 = vmatpush1.msra.mxu0 0.0
    %3170 = vmatprep.subr.mxu0 0.0
    %3171 = vmatpush1.msra.mxu0 0.0
    %3172 = vmatprep.subr.mxu0 0.0
    %3173 = vmatpush1.msra.mxu0 0.0
    %3174 = vmatprep.subr.mxu0 0.0
    %3175 = vmatpush1.msra.mxu0 0.0
    %3176 = vmatprep.subr.mxu0 0.0
    %3177 = vmatpush1.msra.mxu0 0.0
    %3178 = vmatprep.subr.mxu0 0.0
    %3179 = vmatpush1.msra.mxu0 0.0
    %3180 = vmatprep.subr.mxu0 0.0
    %3181 = vmatpush1.msra.mxu0 0.0
    %3182 = vmatprep.subr.mxu0 0.0
    %3183 = vmatpush1.msra.mxu0 0.0
    %3184 = vmatprep.subr.mxu0 0.0
    %3185 = vmatpush1.msra.mxu0 0.0
    %3186 = vmatprep.subr.mxu0 0.0
    %3187 = vmatpush1.msra.mxu0 0.0
    %3188 = vmatprep.subr.mxu0 0.0
    %3189 = vmatpush1.msra.mxu0 0.0
    %3190 = vmatprep.subr.mxu0 0.0
    %3191 = vmatpush1.msra.mxu0 0.0
    %3192 = vmatprep.subr.mxu0 0.0
    %3193 = vmatpush1.msra.mxu0 %v3160
    %3194 = vmatprep.subr.mxu0 0.0
    %3195 = vmatpush1.msra.mxu0 %v3159
    %3196 = vmatprep.subr.mxu0 0.0
    %3197 = vmatpush2.msra.mxu0 0.0
    %3198 = vmatprep.subr.mxu0 0.0
    %3199 = vmatpush2.msra.mxu0 0.0
    %3200 = vmatprep.subr.mxu0 0.0
    %3201 = vmatpush2.msra.mxu0 0.0
    %3202 = vmatprep.subr.mxu0 0.0
    %3203 = vmatpush2.msra.mxu0 0.0
    %3204 = vmatprep.subr.mxu0 0.0
    %3205 = vmatpush2.msra.mxu0 0.0
    %3206 = vmatprep.subr.mxu0 0.0
    %3207 = vmatpush2.msra.mxu0 0.0
    %3208 = vmatprep.subr.mxu0 0.0
    %3209 = vmatpush2.msra.mxu0 0.0
    %3210 = vmatprep.subr.mxu0 0.0
    %3211 = vmatpush2.msra.mxu0 0.0
    %3212 = vmatprep.subr.mxu0 0.0
    %3213 = vmatpush2.msra.mxu0 0.0
    %3214 = vmatprep.subr.mxu0 0.0
    %3215 = vmatpush2.msra.mxu0 0.0
    %3216 = vmatprep.subr.mxu0 0.0
    %3217 = vmatpush2.msra.mxu0 0.0
    %3218 = vmatprep.subr.mxu0 0.0
    %3219 = vmatpush2.msra.mxu0 0.0
    %3220 = vmatprep.subr.mxu0 0.0
    %3221 = vmatpush2.msra.mxu0 0.0
    %3222 = vmatprep.subr.mxu0 0.0
    %3223 = vmatpush2.msra.mxu0 0.0
    %3224 = vmatprep.subr.mxu0 0.0
    %3225 = vmatpush2.msra.mxu0 0.0
    %3226 = vmatprep.subr.mxu0 0.0
    %3227 = vmatpush2.msra.mxu0 0.0
    %3228 = vmatprep.mubr.f32.mxu0 0.0
    %3229 = vmatmul.mubr.f32.gmra.mxu0 %v3162
    %v3230 = vpop.f32.mrf.mxu0
    %v3231 = vadd.f32 0.0, %v3230
    %v3232 = vpop.f32.mrf.mxu0
    %3233 = vdwg.mxu0
    %v3234 = vadd.f32 %v3157, %v3231
    %v3235 = vmax.f32 %v3234, 0.0
    %v3236 = vld [vmem:[%s16] sm:$0xff]
    %v3237 = vld [vmem:[%s16 + $0x8] sm:$0xff]
    %v3238 = vld [vmem:[%s16 + $0x10] sm:$0xff]
    %v3239 = vld [vmem:[%s16 + $0x18] sm:$0xff]
    %v3240 = vld [vmem:[%s17] sm:$0x1]
    %v3242 = vlaneseq
    %v3243 = vshrl.u32 %v3242, 7
    %v3244 = vsub.s32 0, %v3243
    %v3245 = vrot.slane %v3240, %v3244
    %v3248 = vsel %vm169, %v3235, 0
    %3250 = vmatprep.subr.mxu0 0.0
    %3251 = vmatpush1.msra.mxu0 0.0
    %3252 = vmatprep.subr.mxu0 0.0
    %3253 = vmatpush1.msra.mxu0 0.0
    %3254 = vmatprep.subr.mxu0 0.0
    %3255 = vmatpush1.msra.mxu0 0.0
    %3256 = vmatprep.subr.mxu0 0.0
    %3257 = vmatpush1.msra.mxu0 0.0
    %3258 = vmatprep.subr.mxu0 0.0
    %3259 = vmatpush1.msra.mxu0 0.0
    %3260 = vmatprep.subr.mxu0 0.0
    %3261 = vmatpush1.msra.mxu0 0.0
    %3262 = vmatprep.subr.mxu0 0.0
    %3263 = vmatpush1.msra.mxu0 0.0
    %3264 = vmatprep.subr.mxu0 0.0
    %3265 = vmatpush1.msra.mxu0 0.0
    %3266 = vmatprep.subr.mxu0 0.0
    %3267 = vmatpush1.msra.mxu0 0.0
    %3268 = vmatprep.subr.mxu0 0.0
    %3269 = vmatpush1.msra.mxu0 0.0
    %3270 = vmatprep.subr.mxu0 0.0
    %3271 = vmatpush1.msra.mxu0 0.0
    %3272 = vmatprep.subr.mxu0 0.0
    %3273 = vmatpush1.msra.mxu0 0.0
    %3274 = vmatprep.subr.mxu0 0.0
    %3275 = vmatpush1.msra.mxu0 %v3239
    %3276 = vmatprep.subr.mxu0 0.0
    %3277 = vmatpush1.msra.mxu0 %v3238
    %3278 = vmatprep.subr.mxu0 0.0
    %3279 = vmatpush1.msra.mxu0 %v3237
    %3280 = vmatprep.subr.mxu0 0.0
    %3281 = vmatpush1.msra.mxu0 %v3236
    %3282 = vmatprep.subr.mxu0 0.0
    %3283 = vmatpush2.msra.mxu0 0.0
    %3284 = vmatprep.subr.mxu0 0.0
    %3285 = vmatpush2.msra.mxu0 0.0
    %3286 = vmatprep.subr.mxu0 0.0
    %3287 = vmatpush2.msra.mxu0 0.0
    %3288 = vmatprep.subr.mxu0 0.0
    %3289 = vmatpush2.msra.mxu0 0.0
    %3290 = vmatprep.subr.mxu0 0.0
    %3291 = vmatpush2.msra.mxu0 0.0
    %3292 = vmatprep.subr.mxu0 0.0
    %3293 = vmatpush2.msra.mxu0 0.0
    %3294 = vmatprep.subr.mxu0 0.0
    %3295 = vmatpush2.msra.mxu0 0.0
    %3296 = vmatprep.subr.mxu0 0.0
    %3297 = vmatpush2.msra.mxu0 0.0
    %3298 = vmatprep.subr.mxu0 0.0
    %3299 = vmatpush2.msra.mxu0 0.0
    %3300 = vmatprep.subr.mxu0 0.0
    %3301 = vmatpush2.msra.mxu0 0.0
    %3302 = vmatprep.subr.mxu0 0.0
    %3303 = vmatpush2.msra.mxu0 0.0
    %3304 = vmatprep.subr.mxu0 0.0
    %3305 = vmatpush2.msra.mxu0 0.0
    %3306 = vmatprep.subr.mxu0 0.0
    %3307 = vmatpush2.msra.mxu0 0.0
    %3308 = vmatprep.subr.mxu0 0.0
    %3309 = vmatpush2.msra.mxu0 0.0
    %3310 = vmatprep.subr.mxu0 0.0
    %3311 = vmatpush2.msra.mxu0 0.0
    %3312 = vmatprep.subr.mxu0 0.0
    %3313 = vmatpush2.msra.mxu0 0.0
    %3314 = vmatprep.mubr.f32.mxu0 0.0
    %3315 = vmatmul.mubr.f32.gmra.mxu0 %v3248
    %v3316 = vpop.f32.mrf.mxu0
    %v3317 = vadd.f32 %v3245, %v3316
    %v3318 = vpop.f32.mrf.mxu0
    %3319 = vdwg.mxu0
    %v3320 = vld [vmem:[%s18] sm:$0xff]
    %v3321 = vld [vmem:[%s18 + $0x8] sm:$0xff]
    %v3322 = vld [vmem:[%s18 + $0x10] sm:$0xff]
    %v3323 = vld [vmem:[%s18 + $0x18] sm:$0xff]
    %v3325 = vsel %vm83, %v3317, 0
    %3327 = vmatprep.subr.mxu0 0.0
    %3328 = vmatpush1.msra.mxu0 0.0
    %3329 = vmatprep.subr.mxu0 0.0
    %3330 = vmatpush1.msra.mxu0 0.0
    %3331 = vmatprep.subr.mxu0 0.0
    %3332 = vmatpush1.msra.mxu0 0.0
    %3333 = vmatprep.subr.mxu0 0.0
    %3334 = vmatpush1.msra.mxu0 0.0
    %3335 = vmatprep.subr.mxu0 0.0
    %3336 = vmatpush1.msra.mxu0 0.0
    %3337 = vmatprep.subr.mxu0 0.0
    %3338 = vmatpush1.msra.mxu0 0.0
    %3339 = vmatprep.subr.mxu0 0.0
    %3340 = vmatpush1.msra.mxu0 0.0
    %3341 = vmatprep.subr.mxu0 0.0
    %3342 = vmatpush1.msra.mxu0 0.0
    %3343 = vmatprep.subr.mxu0 0.0
    %3344 = vmatpush1.msra.mxu0 0.0
    %3345 = vmatprep.subr.mxu0 0.0
    %3346 = vmatpush1.msra.mxu0 0.0
    %3347 = vmatprep.subr.mxu0 0.0
    %3348 = vmatpush1.msra.mxu0 0.0
    %3349 = vmatprep.subr.mxu0 0.0
    %3350 = vmatpush1.msra.mxu0 0.0
    %3351 = vmatprep.subr.mxu0 0.0
    %3352 = vmatpush1.msra.mxu0 0.0
    %3353 = vmatprep.subr.mxu0 0.0
    %3354 = vmatpush1.msra.mxu0 0.0
    %3355 = vmatprep.subr.mxu0 0.0
    %3356 = vmatpush1.msra.mxu0 %v3323
    %3357 = vmatprep.subr.mxu0 0.0
    %3358 = vmatpush1.msra.mxu0 %v3322
    %3359 = vmatprep.subr.mxu0 0.0
    %3360 = vmatpush2.msra.mxu0 0.0
    %3361 = vmatprep.subr.mxu0 0.0
    %3362 = vmatpush2.msra.mxu0 0.0
    %3363 = vmatprep.subr.mxu0 0.0
    %3364 = vmatpush2.msra.mxu0 0.0
    %3365 = vmatprep.subr.mxu0 0.0
    %3366 = vmatpush2.msra.mxu0 0.0
    %3367 = vmatprep.subr.mxu0 0.0
    %3368 = vmatpush2.msra.mxu0 0.0
    %3369 = vmatprep.subr.mxu0 0.0
    %3370 = vmatpush2.msra.mxu0 0.0
    %3371 = vmatprep.subr.mxu0 0.0
    %3372 = vmatpush2.msra.mxu0 0.0
    %3373 = vmatprep.subr.mxu0 0.0
    %3374 = vmatpush2.msra.mxu0 0.0
    %3375 = vmatprep.subr.mxu0 0.0
    %3376 = vmatpush2.msra.mxu0 0.0
    %3377 = vmatprep.subr.mxu0 0.0
    %3378 = vmatpush2.msra.mxu0 0.0
    %3379 = vmatprep.subr.mxu0 0.0
    %3380 = vmatpush2.msra.mxu0 0.0
    %3381 = vmatprep.subr.mxu0 0.0
    %3382 = vmatpush2.msra.mxu0 0.0
    %3383 = vmatprep.subr.mxu0 0.0
    %3384 = vmatpush2.msra.mxu0 0.0
    %3385 = vmatprep.subr.mxu0 0.0
    %3386 = vmatpush2.msra.mxu0 0.0
    %3387 = vmatprep.subr.mxu0 0.0
    %3388 = vmatpush2.msra.mxu0 0.0
    %3389 = vmatprep.subr.mxu0 0.0
    %3390 = vmatpush2.msra.mxu0 0.0
    %3391 = vmatprep.mubr.f32.mxu0 0.0
    %3392 = vmatmul.mubr.f32.gmra.mxu0 %v3325
    %v3393 = vpop.f32.mrf.mxu0
    %v3394 = vadd.f32 0.0, %v3393
    %v3395 = vpop.f32.mrf.mxu0
    %3396 = vdwg.mxu0
    %v3398 = vsel %vm83, %v1181, 0
    %3400 = vmatprep.subr.mxu0 0.0
    %3401 = vmatpush1.msra.mxu0 0.0
    %3402 = vmatprep.subr.mxu0 0.0
    %3403 = vmatpush1.msra.mxu0 0.0
    %3404 = vmatprep.subr.mxu0 0.0
    %3405 = vmatpush1.msra.mxu0 0.0
    %3406 = vmatprep.subr.mxu0 0.0
    %3407 = vmatpush1.msra.mxu0 0.0
    %3408 = vmatprep.subr.mxu0 0.0
    %3409 = vmatpush1.msra.mxu0 0.0
    %3410 = vmatprep.subr.mxu0 0.0
    %3411 = vmatpush1.msra.mxu0 0.0
    %3412 = vmatprep.subr.mxu0 0.0
    %3413 = vmatpush1.msra.mxu0 0.0
    %3414 = vmatprep.subr.mxu0 0.0
    %3415 = vmatpush1.msra.mxu0 0.0
    %3416 = vmatprep.subr.mxu0 0.0
    %3417 = vmatpush1.msra.mxu0 0.0
    %3418 = vmatprep.subr.mxu0 0.0
    %3419 = vmatpush1.msra.mxu0 0.0
    %3420 = vmatprep.subr.mxu0 0.0
    %3421 = vmatpush1.msra.mxu0 0.0
    %3422 = vmatprep.subr.mxu0 0.0
    %3423 = vmatpush1.msra.mxu0 0.0
    %3424 = vmatprep.subr.mxu0 0.0
    %3425 = vmatpush1.msra.mxu0 0.0
    %3426 = vmatprep.subr.mxu0 0.0
    %3427 = vmatpush1.msra.mxu0 0.0
    %3428 = vmatprep.subr.mxu0 0.0
    %3429 = vmatpush1.msra.mxu0 %v3321
    %3430 = vmatprep.subr.mxu0 0.0
    %3431 = vmatpush1.msra.mxu0 %v3320
    %3432 = vmatprep.subr.mxu0 0.0
    %3433 = vmatpush2.msra.mxu0 0.0
    %3434 = vmatprep.subr.mxu0 0.0
    %3435 = vmatpush2.msra.mxu0 0.0
    %3436 = vmatprep.subr.mxu0 0.0
    %3437 = vmatpush2.msra.mxu0 0.0
    %3438 = vmatprep.subr.mxu0 0.0
    %3439 = vmatpush2.msra.mxu0 0.0
    %3440 = vmatprep.subr.mxu0 0.0
    %3441 = vmatpush2.msra.mxu0 0.0
    %3442 = vmatprep.subr.mxu0 0.0
    %3443 = vmatpush2.msra.mxu0 0.0
    %3444 = vmatprep.subr.mxu0 0.0
    %3445 = vmatpush2.msra.mxu0 0.0
    %3446 = vmatprep.subr.mxu0 0.0
    %3447 = vmatpush2.msra.mxu0 0.0
    %3448 = vmatprep.subr.mxu0 0.0
    %3449 = vmatpush2.msra.mxu0 0.0
    %3450 = vmatprep.subr.mxu0 0.0
    %3451 = vmatpush2.msra.mxu0 0.0
    %3452 = vmatprep.subr.mxu0 0.0
    %3453 = vmatpush2.msra.mxu0 0.0
    %3454 = vmatprep.subr.mxu0 0.0
    %3455 = vmatpush2.msra.mxu0 0.0
    %3456 = vmatprep.subr.mxu0 0.0
    %3457 = vmatpush2.msra.mxu0 0.0
    %3458 = vmatprep.subr.mxu0 0.0
    %3459 = vmatpush2.msra.mxu0 0.0
    %3460 = vmatprep.subr.mxu0 0.0
    %3461 = vmatpush2.msra.mxu0 0.0
    %3462 = vmatprep.subr.mxu0 0.0
    %3463 = vmatpush2.msra.mxu0 0.0
    %3464 = vmatprep.mubr.f32.mxu0 0.0
    %3465 = vmatmul.mubr.f32.gmra.mxu0 %v3398
    %v3466 = vpop.f32.mrf.mxu0
    %v3467 = vadd.f32 %v3394, %v3466
    %v3468 = vpop.f32.mrf.mxu0
    %3469 = vdwg.mxu0
    %v3470 = vld [vmem:[%s19] sm:$0x1]
    %v3472 = vlaneseq
    %v3473 = vshrl.u32 %v3472, 7
    %v3474 = vsub.s32 0, %v3473
    %v3475 = vrot.slane %v3470, %v3474
    %v3477 = vadd.f32 %v3467, %v3475
    %v3478 = vmax.f32 %v3477, 0.0
    %v3479 = vld [vmem:[%s20] sm:$0xff]
    %v3480 = vld [vmem:[%s20 + $0x8] sm:$0xff]
    %v3481 = vld [vmem:[%s20 + $0x10] sm:$0xff]
    %v3482 = vld [vmem:[%s21] sm:$0x1]
    %v3484 = vlaneseq
    %v3485 = vshrl.u32 %v3484, 7
    %v3486 = vsub.s32 0, %v3485
    %v3487 = vrot.slane %v3482, %v3486
    %v3490 = vsel %vm1110, %v3478, 0
    %3492 = vmatprep.subr.mxu0 0.0
    %3493 = vmatpush1.msra.mxu0 0.0
    %3494 = vmatprep.subr.mxu0 0.0
    %3495 = vmatpush1.msra.mxu0 0.0
    %3496 = vmatprep.subr.mxu0 0.0
    %3497 = vmatpush1.msra.mxu0 0.0
    %3498 = vmatprep.subr.mxu0 0.0
    %3499 = vmatpush1.msra.mxu0 0.0
    %3500 = vmatprep.subr.mxu0 0.0
    %3501 = vmatpush1.msra.mxu0 0.0
    %3502 = vmatprep.subr.mxu0 0.0
    %3503 = vmatpush1.msra.mxu0 0.0
    %3504 = vmatprep.subr.mxu0 0.0
    %3505 = vmatpush1.msra.mxu0 0.0
    %3506 = vmatprep.subr.mxu0 0.0
    %3507 = vmatpush1.msra.mxu0 0.0
    %3508 = vmatprep.subr.mxu0 0.0
    %3509 = vmatpush1.msra.mxu0 0.0
    %3510 = vmatprep.subr.mxu0 0.0
    %3511 = vmatpush1.msra.mxu0 0.0
    %3512 = vmatprep.subr.mxu0 0.0
    %3513 = vmatpush1.msra.mxu0 0.0
    %3514 = vmatprep.subr.mxu0 0.0
    %3515 = vmatpush1.msra.mxu0 0.0
    %3516 = vmatprep.subr.mxu0 0.0
    %3517 = vmatpush1.msra.mxu0 0.0
    %3518 = vmatprep.subr.mxu0 0.0
    %3519 = vmatpush1.msra.mxu0 %v3481
    %3520 = vmatprep.subr.mxu0 0.0
    %3521 = vmatpush1.msra.mxu0 %v3480
    %3522 = vmatprep.subr.mxu0 0.0
    %3523 = vmatpush1.msra.mxu0 %v3479
    %3524 = vmatprep.subr.mxu0 0.0
    %3525 = vmatpush2.msra.mxu0 0.0
    %3526 = vmatprep.subr.mxu0 0.0
    %3527 = vmatpush2.msra.mxu0 0.0
    %3528 = vmatprep.subr.mxu0 0.0
    %3529 = vmatpush2.msra.mxu0 0.0
    %3530 = vmatprep.subr.mxu0 0.0
    %3531 = vmatpush2.msra.mxu0 0.0
    %3532 = vmatprep.subr.mxu0 0.0
    %3533 = vmatpush2.msra.mxu0 0.0
    %3534 = vmatprep.subr.mxu0 0.0
    %3535 = vmatpush2.msra.mxu0 0.0
    %3536 = vmatprep.subr.mxu0 0.0
    %3537 = vmatpush2.msra.mxu0 0.0
    %3538 = vmatprep.subr.mxu0 0.0
    %3539 = vmatpush2.msra.mxu0 0.0
    %3540 = vmatprep.subr.mxu0 0.0
    %3541 = vmatpush2.msra.mxu0 0.0
    %3542 = vmatprep.subr.mxu0 0.0
    %3543 = vmatpush2.msra.mxu0 0.0
    %3544 = vmatprep.subr.mxu0 0.0
    %3545 = vmatpush2.msra.mxu0 0.0
    %3546 = vmatprep.subr.mxu0 0.0
    %3547 = vmatpush2.msra.mxu0 0.0
    %3548 = vmatprep.subr.mxu0 0.0
    %3549 = vmatpush2.msra.mxu0 0.0
    %3550 = vmatprep.subr.mxu0 0.0
    %3551 = vmatpush2.msra.mxu0 0.0
    %3552 = vmatprep.subr.mxu0 0.0
    %3553 = vmatpush2.msra.mxu0 0.0
    %3554 = vmatprep.subr.mxu0 0.0
    %3555 = vmatpush2.msra.mxu0 0.0
    %3556 = vmatprep.mubr.f32.mxu0 0.0
    %3557 = vmatmul.mubr.f32.gmra.mxu0 %v3490
    %v3558 = vpop.f32.mrf.mxu0
    %v3559 = vadd.f32 %v3487, %v3558
    %v3560 = vpop.f32.mrf.mxu0
    %3561 = vdwg.mxu0
    %vm3562 = vcmask 33792
    %v3563 = vsel %vm3562, %v3559, -inf
    %3564 = vmax.xlane.f32.xlu0 %v3563
    %v3565 = vpop.xlane.xlu0 %3564
    %v3566 = vsub.f32 %v3559, %v3565
    %v3567 = vmul.f32 %v3566, 1.442695
    %v3568 = vpow.pop %v3567
    %v3569 = vsel %vm3562, %v3568, 0.0
    %3570 = vadd.xlane.f32.xlu0 %v3569
    %v3571 = vpop.xlane.xlu0 %3570
    %v3572 = vrcp.pop %v3571
    %v3573 = vmul.f32 %v3568, %v3572
    %3574 = vst.msk [vmem:[#allocation2] sm:$0x3] %vm3562, %v3573
    // Predicated region
    $region90: #{multimodal_forward.1} parent=1 // pred_check
      _
    $region91: #{multimodal_forward.1} parent=1 // pred_check_branch
      %3576 = sbr.rel (0) target = $region93
    $region92: #{multimodal_forward.1} parent=1 // pred_region
      %s3578 = ssub.s32 32, 32
      %3579 = vsyncadd [#allocation3], %s3578
      %s3581 = sshll.u32 [#allocation2], 4
      %s3582 = int_to_ptr.vmem [resolvable:$true] %s3581
      %3584 = dma.vmem_to_hbm [thread:$0]  %s3582, 32, %s22, [#allocation3]
    $region93: #{multimodal_forward.1} parent=1 // pred_fallthru
      _
    // Predicated region
    $region94: #{multimodal_forward.1} parent=1 // pred_check
      _
    $region95: #{multimodal_forward.1} parent=1 // pred_check_branch
      %3586 = sbr.rel (0) target = $region97
    $region96: #{multimodal_forward.1} parent=1 // pred_region
      %3587 = dma.done [#allocation3], 32
    $region97: #{multimodal_forward.1} parent=1 // pred_fallthru
      _
    %3588 = vsyncpa [#allocation3], 1

</llo_original>
